<compile_context>
chip_gen: v7x
topology: tpu7x:2x2x1
jax: 0.10.0
libtpu: 0.0.40
codegen_flags: <defaults>
</compile_context>

<pallas_src>
import math

import jax
import jax.numpy as jnp
from jax.experimental import pallas as pl
from jax.experimental.pallas import tpu as pltpu

HEADS = 8  # ScaledDotProductAttentionBlock(heads=8)


def aoa_attention(query, key, value, w, b, *, heads=HEADS, mxu_dtype=None):
    """AoAttentionBlock forward.

    query: (B, Lq, D), key/value: (B, Lk, D),
    w: (2D, 2D) torch nn.Linear weight, b: (2D,) bias.  Returns (B, Lq, D).
    """
    B, Lq, D = query.shape
    Lk = key.shape[1]
    assert D % heads == 0, "inplanes must be divisible by the number of heads"
    H = heads
    hd = D // H
    scale = 1.0 / math.sqrt(hd)
    f32 = jnp.float32

    # ---- wrapper-side layout plumbing (pure XLA ops, keeps the kernel relayout-free) ----
    # Head-split q/k/v with head-batch ordered g = h*B + b, so each head's batch rows
    # are a contiguous leading slice inside the kernel.
    def split_heads(x, L):
        return x.reshape(B, L, H, hd).transpose(2, 0, 1, 3).reshape(H * B, L, hd)

    qh = split_heads(query, Lq)            # (H*B, Lq, hd)
    kh = split_heads(key, Lk)              # (H*B, Lk, hd)
    vh = split_heads(value, Lk)            # (H*B, Lk, hd)
    q2 = query.reshape(B * Lq, D)          # lane-dense query for the Linear query-half
    # torch Linear: y = x @ W^T + b with x = cat(attn, query); split W^T into the
    # attn-half rows (Wa) and query-half rows (Wb), both flat lane-dense (D, 2D) slabs.
    wt = w.T                               # (2D_in, 2D_out)
    wa = wt[:D, :]                         # (D, 2D)
    wb = wt[D:, :]                         # (D, 2D)
    bias = b.reshape(1, 2 * D)

    def kernel(q2_ref, qh_ref, kh_ref, vh_ref, wa_ref, wb_ref, b_ref, o_ref, ocat_ref):
        # ---- multi-head scaled-dot-product attention (head-batched matmuls) ----
        qh_v = qh_ref[...]                                    # (H*B, Lq, hd)
        ks = kh_ref[...] * scale                              # fold 1/sqrt(hd) into K once
        vh_v = vh_ref[...]
        if mxu_dtype is not None:                             # optional: bf16 MXU operands
            qh_v = qh_v.astype(mxu_dtype)
            ks = ks.astype(mxu_dtype)
            vh_v = vh_v.astype(mxu_dtype)

        s = jnp.einsum('gqd,gkd->gqk', qh_v, ks,
                       preferred_element_type=f32)            # (H*B, Lq, Lk)
        m = jnp.max(s, axis=-1, keepdims=True)
        p = jnp.exp(s - m)
        denom = jnp.sum(p, axis=-1, keepdims=True)            # (H*B, Lq, 1)
        p_mm = p.astype(mxu_dtype) if mxu_dtype is not None else p
        o_h = jnp.einsum('gqk,gkd->gqd', p_mm, vh_v,
                         preferred_element_type=f32)          # (H*B, Lq, hd)
        # Deferred softmax normalization on the small output; EXACT reciprocal so
        # numerics match the f32 torch reference (denom is only (H*B, Lq, 1)).
        o_h = o_h * pl.reciprocal(denom, approx=False)

        # ---- pack head outputs into a lane-dense (B*Lq, D) slab (head concat) ----
        # Static leading/lane slices only; no in-kernel transposes or reshapes.
        for h in range(H):
            for bi in range(B):
                ocat_ref[bi * Lq:(bi + 1) * Lq, h * hd:(h + 1) * hd] = o_h[h * B + bi]

        # ---- Linear(2D -> 2D) + GLU as two K=D matmuls (concats folded away) ----
        o_cat = ocat_ref[...]                                 # (B*Lq, D)
        q2_v = q2_ref[...]                                    # (B*Lq, D)
        wa_v = wa_ref[...]
        wb_v = wb_ref[...]
        if mxu_dtype is not None:
            o_cat = o_cat.astype(mxu_dtype)
            q2_v = q2_v.astype(mxu_dtype)
            wa_v = wa_v.astype(mxu_dtype)
            wb_v = wb_v.astype(mxu_dtype)
        ya = jnp.dot(o_cat, wa_v, preferred_element_type=f32)  # (B*Lq, 2D)
        yq = jnp.dot(q2_v, wb_v, preferred_element_type=f32)   # (B*Lq, 2D)
        y = ya + yq + b_ref[...]                               # bias added once

        act = y[:, :D]
        gate = y[:, D:]
        o_ref[...] = (act * jax.nn.sigmoid(gate)).astype(o_ref.dtype)

    out2d = pl.pallas_call(
        kernel,
        out_shape=jax.ShapeDtypeStruct((B * Lq, D), query.dtype),
        # Whole problem in a single grid step: removes per-batch step overhead and
        # lets all matmuls see the full B*H / B*Lq extents.
        grid=(1,),
        in_specs=[
            pl.BlockSpec((B * Lq, D), lambda i: (0, 0)),
            pl.BlockSpec((H * B, Lq, hd), lambda i: (0, 0, 0)),
            pl.BlockSpec((H * B, Lk, hd), lambda i: (0, 0, 0)),
            pl.BlockSpec((H * B, Lk, hd), lambda i: (0, 0, 0)),
            pl.BlockSpec((D, 2 * D), lambda i: (0, 0)),
            pl.BlockSpec((D, 2 * D), lambda i: (0, 0)),
            pl.BlockSpec((1, 2 * D), lambda i: (0, 0)),
        ],
        out_specs=pl.BlockSpec((B * Lq, D), lambda i: (0, 0)),
        scratch_shapes=[pltpu.VMEM((B * Lq, D), jnp.float32)],   # head-concat slab
        compiler_params=pltpu.CompilerParams(dimension_semantics=("arbitrary",)),
    )(q2, qh, kh, vh, wa, wb, bias)

    return out2d.reshape(B, Lq, D)


def aoa_reference(query, key, value, w, b, heads=HEADS):
    # Pure-JAX mirror of the PyTorch forward, for correctness checking.
    B, Lq, D = query.shape
    Lk = key.shape[1]
    hd = D // heads
    hp = jax.lax.Precision.HIGHEST
    q = query.reshape(B, Lq, heads, hd).transpose(0, 2, 1, 3)
    k = key.reshape(B, Lk, heads, hd).transpose(0, 2, 1, 3)
    v = value.reshape(B, Lk, heads, hd).transpose(0, 2, 1, 3)
    s = jnp.einsum('bhqd,bhkd->bhqk', q, k, precision=hp) / math.sqrt(hd)
    p = jax.nn.softmax(s, axis=-1)
    attn = jnp.einsum('bhqk,bhkd->bhqd', p, v, precision=hp)
    attn = attn.transpose(0, 2, 1, 3).reshape(B, Lq, D)
    x = jnp.concatenate([attn, query], axis=-1)
    y = jnp.einsum('bqi,oi->bqo', x, w, precision=hp) + b
    a, g = y[..., :D], y[..., D:]
    return a * jax.nn.sigmoid(g)


if __name__ == "__main__":
    B, Lq, Lk, D = 2, 8, 8, 32   # inplanes = D = 32, heads = 8 -> head_dim = 4
    key0 = jax.random.PRNGKey(0)
    kq, kk, kv, kw, kb = jax.random.split(key0, 5)

    query = jax.random.normal(kq, (B, Lq, D), dtype=jnp.float32)
    keyt = jax.random.normal(kk, (B, Lk, D), dtype=jnp.float32)
    value = jax.random.normal(kv, (B, Lk, D), dtype=jnp.float32)
    # nn.Linear(2*inplanes, 2*inplanes): weight (2D, 2D), bias (2D,)
    w = jax.random.normal(kw, (2 * D, 2 * D), dtype=jnp.float32) * (1.0 / math.sqrt(2 * D))
    b = jax.random.normal(kb, (2 * D,), dtype=jnp.float32) * 0.01

    out = aoa_attention(query, keyt, value, w, b)
    out = jax.block_until_ready(out)

    ref = aoa_reference(query, keyt, value, w, b)
    assert out.shape == (B, Lq, D)
    # f32 everywhere with exact softmax normalization; tolerance only covers
    # MXU accumulation-order differences vs. the XLA reference.
    assert jnp.allclose(out, ref, atol=2e-3, rtol=2e-3), "mismatch vs. reference"
    print("KERNEL_OK")
</pallas_src>

<mosaic_0001>
module attributes {stable_mosaic.version = 11 : i64} {
  func.func @kernel(%arg0: i32, %arg1: memref<16x32xf32, #tpu.memory_space<vmem>>, %arg2: memref<16x8x4xf32, #tpu.memory_space<vmem>>, %arg3: memref<16x8x4xf32, #tpu.memory_space<vmem>>, %arg4: memref<16x8x4xf32, #tpu.memory_space<vmem>>, %arg5: memref<32x64xf32, #tpu.memory_space<vmem>>, %arg6: memref<32x64xf32, #tpu.memory_space<vmem>>, %arg7: memref<1x64xf32, #tpu.memory_space<vmem>>, %arg8: memref<16x32xf32, #tpu.memory_space<vmem>>, %arg9: memref<16x32xf32, #tpu.memory_space<vmem>>) attributes {dimension_semantics = [#tpu.dimension_semantics<arbitrary>], iteration_bounds = array<i64: 1>, scalar_prefetch = 0 : i64, scratch_operands = 1 : i64, tpu.core_type = #tpu.core_type<tc>, window_params = [{pipeline_mode = #tpu.pipeline_mode<synchronous>, transform_indices = @transform_0, window_bounds = array<i64: 16, 32>}, {pipeline_mode = #tpu.pipeline_mode<synchronous>, transform_indices = @transform_1, window_bounds = array<i64: 16, 8, 4>}, {pipeline_mode = #tpu.pipeline_mode<synchronous>, transform_indices = @transform_2, window_bounds = array<i64: 16, 8, 4>}, {pipeline_mode = #tpu.pipeline_mode<synchronous>, transform_indices = @transform_3, window_bounds = array<i64: 16, 8, 4>}, {pipeline_mode = #tpu.pipeline_mode<synchronous>, transform_indices = @transform_4, window_bounds = array<i64: 32, 64>}, {pipeline_mode = #tpu.pipeline_mode<synchronous>, transform_indices = @transform_5, window_bounds = array<i64: 32, 64>}, {pipeline_mode = #tpu.pipeline_mode<synchronous>, transform_indices = @transform_6, window_bounds = array<i64: 1, 64>}, {pipeline_mode = #tpu.pipeline_mode<synchronous>, transform_indices = @transform_7, window_bounds = array<i64: 16, 32>}]} {
    %c0 = arith.constant 0 : index
    %c0_0 = arith.constant 0 : index
    %c0_1 = arith.constant 0 : index
    %0 = vector.load %arg2[%c0, %c0_0, %c0_1] : memref<16x8x4xf32, #tpu.memory_space<vmem>>, vector<16x8x4xf32>
    %c0_2 = arith.constant 0 : index
    %c0_3 = arith.constant 0 : index
    %c0_4 = arith.constant 0 : index
    %1 = vector.load %arg3[%c0_2, %c0_3, %c0_4] : memref<16x8x4xf32, #tpu.memory_space<vmem>>, vector<16x8x4xf32>
    %cst = arith.constant 5.000000e-01 : f32
    %2 = vector.broadcast %cst : f32 to vector<16x8x4xf32>
    %3 = arith.mulf %1, %2 : vector<16x8x4xf32>
    %c0_5 = arith.constant 0 : index
    %c0_6 = arith.constant 0 : index
    %c0_7 = arith.constant 0 : index
    %4 = vector.load %arg4[%c0_5, %c0_6, %c0_7] : memref<16x8x4xf32, #tpu.memory_space<vmem>>, vector<16x8x4xf32>
    "tpu.trace_start"() <{level = 10 : i32, message = "gqd,gkd->gqk"}> : () -> ()
    %cst_8 = arith.constant dense<0.000000e+00> : vector<16x8x8xf32>
    %5 = tpu.matmul %0, %3, %cst_8 {dimension_numbers = #tpu.dot_dimension_numbers<[2], [2], [1], [1], [0, 0, 0, 1, 1, 1], [0], [0]>} : vector<16x8x4xf32>, vector<16x8x4xf32>, vector<16x8x8xf32> -> vector<16x8x8xf32>
    "tpu.trace_stop"() : () -> ()
    %cst_9 = arith.constant dense<0xFF800000> : vector<16x8xf32>
    %6 = vector.multi_reduction <maximumf>, %5, %cst_9 [2] : vector<16x8x8xf32> to vector<16x8xf32>
    %7 = vector.shape_cast %6 : vector<16x8xf32> to vector<16x8x1xf32>
    %8 = vector.broadcast %7 : vector<16x8x1xf32> to vector<16x8x8xf32>
    %9 = arith.subf %5, %8 : vector<16x8x8xf32>
    %10 = math.exp %9 : vector<16x8x8xf32>
    %cst_10 = arith.constant dense<0.000000e+00> : vector<16x8xf32>
    %11 = vector.multi_reduction <add>, %10, %cst_10 [2] : vector<16x8x8xf32> to vector<16x8xf32>
    %12 = vector.shape_cast %11 : vector<16x8xf32> to vector<16x8x1xf32>
    "tpu.trace_start"() <{level = 10 : i32, message = "gqk,gkd->gqd"}> : () -> ()
    %cst_11 = arith.constant dense<0.000000e+00> : vector<16x8x4xf32>
    %13 = tpu.matmul %10, %4, %cst_11 {dimension_numbers = #tpu.dot_dimension_numbers<[2], [1], [1], [2], [0, 0, 0, 1, 1, 2], [0], [0]>} : vector<16x8x8xf32>, vector<16x8x4xf32>, vector<16x8x4xf32> -> vector<16x8x4xf32>
    "tpu.trace_stop"() : () -> ()
    %14 = tpu.reciprocal %12 : vector<16x8x1xf32> -> vector<16x8x1xf32>
    %15 = vector.broadcast %14 : vector<16x8x1xf32> to vector<16x8x4xf32>
    %16 = arith.mulf %13, %15 : vector<16x8x4xf32>
    %17 = vector.extract_strided_slice %16 {offsets = [0, 0, 0], sizes = [1, 8, 4], strides = [1, 1, 1]} : vector<16x8x4xf32> to vector<1x8x4xf32>
    %18 = vector.shape_cast %17 : vector<1x8x4xf32> to vector<8x4xf32>
    %c0_12 = arith.constant 0 : index
    %c0_13 = arith.constant 0 : index
    %19 = vector.load %arg9[%c0_12, %c0_13] : memref<16x32xf32, #tpu.memory_space<vmem>>, vector<8x4xf32>
    tpu.vector_store %arg9[%c0_12, %c0_13], %18 {strides = array<i32>} : memref<16x32xf32, #tpu.memory_space<vmem>>, vector<8x4xf32>,
    %20 = vector.extract_strided_slice %16 {offsets = [1, 0, 0], sizes = [1, 8, 4], strides = [1, 1, 1]} : vector<16x8x4xf32> to vector<1x8x4xf32>
    %21 = vector.shape_cast %20 : vector<1x8x4xf32> to vector<8x4xf32>
    %c8 = arith.constant 8 : index
    %c0_14 = arith.constant 0 : index
    %22 = vector.load %arg9[%c8, %c0_14] : memref<16x32xf32, #tpu.memory_space<vmem>>, vector<8x4xf32>
    tpu.vector_store %arg9[%c8, %c0_14], %21 {strides = array<i32>} : memref<16x32xf32, #tpu.memory_space<vmem>>, vector<8x4xf32>,
    %23 = vector.extract_strided_slice %16 {offsets = [2, 0, 0], sizes = [1, 8, 4], strides = [1, 1, 1]} : vector<16x8x4xf32> to vector<1x8x4xf32>
    %24 = vector.shape_cast %23 : vector<1x8x4xf32> to vector<8x4xf32>
    %c0_15 = arith.constant 0 : index
    %c4 = arith.constant 4 : index
    %25 = vector.load %arg9[%c0_15, %c4] : memref<16x32xf32, #tpu.memory_space<vmem>>, vector<8x4xf32>
    tpu.vector_store %arg9[%c0_15, %c4], %24 {strides = array<i32>} : memref<16x32xf32, #tpu.memory_space<vmem>>, vector<8x4xf32>,
    %26 = vector.extract_strided_slice %16 {offsets = [3, 0, 0], sizes = [1, 8, 4], strides = [1, 1, 1]} : vector<16x8x4xf32> to vector<1x8x4xf32>
    %27 = vector.shape_cast %26 : vector<1x8x4xf32> to vector<8x4xf32>
    %c8_16 = arith.constant 8 : index
    %c4_17 = arith.constant 4 : index
    %28 = vector.load %arg9[%c8_16, %c4_17] : memref<16x32xf32, #tpu.memory_space<vmem>>, vector<8x4xf32>
    tpu.vector_store %arg9[%c8_16, %c4_17], %27 {strides = array<i32>} : memref<16x32xf32, #tpu.memory_space<vmem>>, vector<8x4xf32>,
    %29 = vector.extract_strided_slice %16 {offsets = [4, 0, 0], sizes = [1, 8, 4], strides = [1, 1, 1]} : vector<16x8x4xf32> to vector<1x8x4xf32>
    %30 = vector.shape_cast %29 : vector<1x8x4xf32> to vector<8x4xf32>
    %c0_18 = arith.constant 0 : index
    %c8_19 = arith.constant 8 : index
    %31 = vector.load %arg9[%c0_18, %c8_19] : memref<16x32xf32, #tpu.memory_space<vmem>>, vector<8x4xf32>
    tpu.vector_store %arg9[%c0_18, %c8_19], %30 {strides = array<i32>} : memref<16x32xf32, #tpu.memory_space<vmem>>, vector<8x4xf32>,
    %32 = vector.extract_strided_slice %16 {offsets = [5, 0, 0], sizes = [1, 8, 4], strides = [1, 1, 1]} : vector<16x8x4xf32> to vector<1x8x4xf32>
    %33 = vector.shape_cast %32 : vector<1x8x4xf32> to vector<8x4xf32>
    %c8_20 = arith.constant 8 : index
    %c8_21 = arith.constant 8 : index
    %34 = vector.load %arg9[%c8_20, %c8_21] : memref<16x32xf32, #tpu.memory_space<vmem>>, vector<8x4xf32>
    tpu.vector_store %arg9[%c8_20, %c8_21], %33 {strides = array<i32>} : memref<16x32xf32, #tpu.memory_space<vmem>>, vector<8x4xf32>,
    %35 = vector.extract_strided_slice %16 {offsets = [6, 0, 0], sizes = [1, 8, 4], strides = [1, 1, 1]} : vector<16x8x4xf32> to vector<1x8x4xf32>
    %36 = vector.shape_cast %35 : vector<1x8x4xf32> to vector<8x4xf32>
    %c0_22 = arith.constant 0 : index
    %c12 = arith.constant 12 : index
    %37 = vector.load %arg9[%c0_22, %c12] : memref<16x32xf32, #tpu.memory_space<vmem>>, vector<8x4xf32>
    tpu.vector_store %arg9[%c0_22, %c12], %36 {strides = array<i32>} : memref<16x32xf32, #tpu.memory_space<vmem>>, vector<8x4xf32>,
    %38 = vector.extract_strided_slice %16 {offsets = [7, 0, 0], sizes = [1, 8, 4], strides = [1, 1, 1]} : vector<16x8x4xf32> to vector<1x8x4xf32>
    %39 = vector.shape_cast %38 : vector<1x8x4xf32> to vector<8x4xf32>
    %c8_23 = arith.constant 8 : index
    %c12_24 = arith.constant 12 : index
    %40 = vector.load %arg9[%c8_23, %c12_24] : memref<16x32xf32, #tpu.memory_space<vmem>>, vector<8x4xf32>
    tpu.vector_store %arg9[%c8_23, %c12_24], %39 {strides = array<i32>} : memref<16x32xf32, #tpu.memory_space<vmem>>, vector<8x4xf32>,
    %41 = vector.extract_strided_slice %16 {offsets = [8, 0, 0], sizes = [1, 8, 4], strides = [1, 1, 1]} : vector<16x8x4xf32> to vector<1x8x4xf32>
    %42 = vector.shape_cast %41 : vector<1x8x4xf32> to vector<8x4xf32>
    %c0_25 = arith.constant 0 : index
    %c16 = arith.constant 16 : index
    %43 = vector.load %arg9[%c0_25, %c16] : memref<16x32xf32, #tpu.memory_space<vmem>>, vector<8x4xf32>
    tpu.vector_store %arg9[%c0_25, %c16], %42 {strides = array<i32>} : memref<16x32xf32, #tpu.memory_space<vmem>>, vector<8x4xf32>,
    %44 = vector.extract_strided_slice %16 {offsets = [9, 0, 0], sizes = [1, 8, 4], strides = [1, 1, 1]} : vector<16x8x4xf32> to vector<1x8x4xf32>
    %45 = vector.shape_cast %44 : vector<1x8x4xf32> to vector<8x4xf32>
    %c8_26 = arith.constant 8 : index
    %c16_27 = arith.constant 16 : index
    %46 = vector.load %arg9[%c8_26, %c16_27] : memref<16x32xf32, #tpu.memory_space<vmem>>, vector<8x4xf32>
    tpu.vector_store %arg9[%c8_26, %c16_27], %45 {strides = array<i32>} : memref<16x32xf32, #tpu.memory_space<vmem>>, vector<8x4xf32>,
    %47 = vector.extract_strided_slice %16 {offsets = [10, 0, 0], sizes = [1, 8, 4], strides = [1, 1, 1]} : vector<16x8x4xf32> to vector<1x8x4xf32>
    %48 = vector.shape_cast %47 : vector<1x8x4xf32> to vector<8x4xf32>
    %c0_28 = arith.constant 0 : index
    %c20 = arith.constant 20 : index
    %49 = vector.load %arg9[%c0_28, %c20] : memref<16x32xf32, #tpu.memory_space<vmem>>, vector<8x4xf32>
    tpu.vector_store %arg9[%c0_28, %c20], %48 {strides = array<i32>} : memref<16x32xf32, #tpu.memory_space<vmem>>, vector<8x4xf32>,
    %50 = vector.extract_strided_slice %16 {offsets = [11, 0, 0], sizes = [1, 8, 4], strides = [1, 1, 1]} : vector<16x8x4xf32> to vector<1x8x4xf32>
    %51 = vector.shape_cast %50 : vector<1x8x4xf32> to vector<8x4xf32>
    %c8_29 = arith.constant 8 : index
    %c20_30 = arith.constant 20 : index
    %52 = vector.load %arg9[%c8_29, %c20_30] : memref<16x32xf32, #tpu.memory_space<vmem>>, vector<8x4xf32>
    tpu.vector_store %arg9[%c8_29, %c20_30], %51 {strides = array<i32>} : memref<16x32xf32, #tpu.memory_space<vmem>>, vector<8x4xf32>,
    %53 = vector.extract_strided_slice %16 {offsets = [12, 0, 0], sizes = [1, 8, 4], strides = [1, 1, 1]} : vector<16x8x4xf32> to vector<1x8x4xf32>
    %54 = vector.shape_cast %53 : vector<1x8x4xf32> to vector<8x4xf32>
    %c0_31 = arith.constant 0 : index
    %c24 = arith.constant 24 : index
    %55 = vector.load %arg9[%c0_31, %c24] : memref<16x32xf32, #tpu.memory_space<vmem>>, vector<8x4xf32>
    tpu.vector_store %arg9[%c0_31, %c24], %54 {strides = array<i32>} : memref<16x32xf32, #tpu.memory_space<vmem>>, vector<8x4xf32>,
    %56 = vector.extract_strided_slice %16 {offsets = [13, 0, 0], sizes = [1, 8, 4], strides = [1, 1, 1]} : vector<16x8x4xf32> to vector<1x8x4xf32>
    %57 = vector.shape_cast %56 : vector<1x8x4xf32> to vector<8x4xf32>
    %c8_32 = arith.constant 8 : index
    %c24_33 = arith.constant 24 : index
    %58 = vector.load %arg9[%c8_32, %c24_33] : memref<16x32xf32, #tpu.memory_space<vmem>>, vector<8x4xf32>
    tpu.vector_store %arg9[%c8_32, %c24_33], %57 {strides = array<i32>} : memref<16x32xf32, #tpu.memory_space<vmem>>, vector<8x4xf32>,
    %59 = vector.extract_strided_slice %16 {offsets = [14, 0, 0], sizes = [1, 8, 4], strides = [1, 1, 1]} : vector<16x8x4xf32> to vector<1x8x4xf32>
    %60 = vector.shape_cast %59 : vector<1x8x4xf32> to vector<8x4xf32>
    %c0_34 = arith.constant 0 : index
    %c28 = arith.constant 28 : index
    %61 = vector.load %arg9[%c0_34, %c28] : memref<16x32xf32, #tpu.memory_space<vmem>>, vector<8x4xf32>
    tpu.vector_store %arg9[%c0_34, %c28], %60 {strides = array<i32>} : memref<16x32xf32, #tpu.memory_space<vmem>>, vector<8x4xf32>,
    %62 = vector.extract_strided_slice %16 {offsets = [15, 0, 0], sizes = [1, 8, 4], strides = [1, 1, 1]} : vector<16x8x4xf32> to vector<1x8x4xf32>
    %63 = vector.shape_cast %62 : vector<1x8x4xf32> to vector<8x4xf32>
    %c8_35 = arith.constant 8 : index
    %c28_36 = arith.constant 28 : index
    %64 = vector.load %arg9[%c8_35, %c28_36] : memref<16x32xf32, #tpu.memory_space<vmem>>, vector<8x4xf32>
    tpu.vector_store %arg9[%c8_35, %c28_36], %63 {strides = array<i32>} : memref<16x32xf32, #tpu.memory_space<vmem>>, vector<8x4xf32>,
    %c0_37 = arith.constant 0 : index
    %c0_38 = arith.constant 0 : index
    %65 = vector.load %arg9[%c0_37, %c0_38] : memref<16x32xf32, #tpu.memory_space<vmem>>, vector<16x32xf32>
    %c0_39 = arith.constant 0 : index
    %c0_40 = arith.constant 0 : index
    %66 = vector.load %arg1[%c0_39, %c0_40] : memref<16x32xf32, #tpu.memory_space<vmem>>, vector<16x32xf32>
    %c0_41 = arith.constant 0 : index
    %c0_42 = arith.constant 0 : index
    %67 = vector.load %arg5[%c0_41, %c0_42] : memref<32x64xf32, #tpu.memory_space<vmem>>, vector<32x64xf32>
    %c0_43 = arith.constant 0 : index
    %c0_44 = arith.constant 0 : index
    %68 = vector.load %arg6[%c0_43, %c0_44] : memref<32x64xf32, #tpu.memory_space<vmem>>, vector<32x64xf32>
    %cst_45 = arith.constant dense<0.000000e+00> : vector<16x64xf32>
    %69 = tpu.matmul %65, %67, %cst_45 {dimension_numbers = #tpu.dot_dimension_numbers<[1], [0], [0], [1], [0, 0, 1, 1], [], []>} : vector<16x32xf32>, vector<32x64xf32>, vector<16x64xf32> -> vector<16x64xf32>
    %cst_46 = arith.constant dense<0.000000e+00> : vector<16x64xf32>
    %70 = tpu.matmul %66, %68, %cst_46 {dimension_numbers = #tpu.dot_dimension_numbers<[1], [0], [0], [1], [0, 0, 1, 1], [], []>} : vector<16x32xf32>, vector<32x64xf32>, vector<16x64xf32> -> vector<16x64xf32>
    %71 = arith.addf %69, %70 : vector<16x64xf32>
    %c0_47 = arith.constant 0 : index
    %c0_48 = arith.constant 0 : index
    %72 = vector.load %arg7[%c0_47, %c0_48] : memref<1x64xf32, #tpu.memory_space<vmem>>, vector<1x64xf32>
    %73 = vector.broadcast %72 : vector<1x64xf32> to vector<16x64xf32>
    %74 = arith.addf %71, %73 : vector<16x64xf32>
    %75 = vector.extract_strided_slice %74 {offsets = [0, 0], sizes = [16, 32], strides = [1, 1]} : vector<16x64xf32> to vector<16x32xf32>
    %76 = vector.extract_strided_slice %74 {offsets = [0, 32], sizes = [16, 32], strides = [1, 1]} : vector<16x64xf32> to vector<16x32xf32>
    %77 = arith.negf %76 : vector<16x32xf32>
    %78 = math.exp %77 : vector<16x32xf32>
    %cst_49 = arith.constant 1.000000e+00 : f32
    %79 = vector.broadcast %cst_49 : f32 to vector<16x32xf32>
    %80 = arith.addf %79, %78 : vector<16x32xf32>
    %81 = arith.divf %79, %80 : vector<16x32xf32>
    %82 = arith.mulf %75, %81 : vector<16x32xf32>
    %c0_50 = arith.constant 0 : index
    %c0_51 = arith.constant 0 : index
    %83 = vector.load %arg8[%c0_50, %c0_51] : memref<16x32xf32, #tpu.memory_space<vmem>>, vector<16x32xf32>
    tpu.vector_store %arg8[%c0_50, %c0_51], %82 {strides = array<i32>} : memref<16x32xf32, #tpu.memory_space<vmem>>, vector<16x32xf32>,
    return
  }
  func.func @transform_0(%arg0: i32) -> (i32, i32) {
    %c0_i32 = arith.constant 0 : i32
    %c0_i32_0 = arith.constant 0 : i32
    %c0_i32_1 = arith.constant 0 : i32
    return %c0_i32, %c0_i32_0 : i32, i32
  }
  func.func @transform_1(%arg0: i32) -> (i32, i32, i32) {
    %c0_i32 = arith.constant 0 : i32
    %c0_i32_0 = arith.constant 0 : i32
    %c0_i32_1 = arith.constant 0 : i32
    %c0_i32_2 = arith.constant 0 : i32
    return %c0_i32, %c0_i32_0, %c0_i32_1 : i32, i32, i32
  }
  func.func @transform_2(%arg0: i32) -> (i32, i32, i32) {
    %c0_i32 = arith.constant 0 : i32
    %c0_i32_0 = arith.constant 0 : i32
    %c0_i32_1 = arith.constant 0 : i32
    %c0_i32_2 = arith.constant 0 : i32
    return %c0_i32, %c0_i32_0, %c0_i32_1 : i32, i32, i32
  }
  func.func @transform_3(%arg0: i32) -> (i32, i32, i32) {
    %c0_i32 = arith.constant 0 : i32
    %c0_i32_0 = arith.constant 0 : i32
    %c0_i32_1 = arith.constant 0 : i32
    %c0_i32_2 = arith.constant 0 : i32
    return %c0_i32, %c0_i32_0, %c0_i32_1 : i32, i32, i32
  }
  func.func @transform_4(%arg0: i32) -> (i32, i32) {
    %c0_i32 = arith.constant 0 : i32
    %c0_i32_0 = arith.constant 0 : i32
    %c0_i32_1 = arith.constant 0 : i32
    return %c0_i32, %c0_i32_0 : i32, i32
  }
  func.func @transform_5(%arg0: i32) -> (i32, i32) {
    %c0_i32 = arith.constant 0 : i32
    %c0_i32_0 = arith.constant 0 : i32
    %c0_i32_1 = arith.constant 0 : i32
    return %c0_i32, %c0_i32_0 : i32, i32
  }
  func.func @transform_6(%arg0: i32) -> (i32, i32) {
    %c0_i32 = arith.constant 0 : i32
    %c0_i32_0 = arith.constant 0 : i32
    %c0_i32_1 = arith.constant 0 : i32
    return %c0_i32, %c0_i32_0 : i32, i32
  }
  func.func @transform_7(%arg0: i32) -> (i32, i32) {
    %c0_i32 = arith.constant 0 : i32
    %c0_i32_0 = arith.constant 0 : i32
    %c0_i32_1 = arith.constant 0 : i32
    return %c0_i32, %c0_i32_0 : i32, i32
  }
}

</mosaic_0001>

<llo_original>
// kernel: tpu_custom_call.1
$region0: #{tpu_custom_call.1}
  #allocation0 [shape = 'u32[]', space=smem, size = 0x4, offset = 0x4, fixed_abs, tag = 'smem constant byte address 0x4 - core index']
  #allocation1 [shape = 'u32[144,128]{1,0:T(1,128)}', space=vmem, size = 0x12000, scoped, tag = 'internal scratch']
  #allocation2 [shape = 'f32[16,32]{1,0:T(8,128)}', space=vmem, size = 0x2000, scoped, tag = 'scratch operand']
  %s0 = inlined_call_operand.vmem [shape: f32[16,32], index: 0, kind: input, shape index: {}]
  %s1 = inlined_call_operand.vmem [shape: f32[16,8,4], index: 1, kind: input, shape index: {}]
  %s2 = inlined_call_operand.vmem [shape: f32[16,8,4], index: 2, kind: input, shape index: {}]
  %s3 = inlined_call_operand.vmem [shape: f32[16,8,4], index: 3, kind: input, shape index: {}]
  %s4 = inlined_call_operand.vmem [shape: f32[32,64], index: 4, kind: input, shape index: {}]
  %s5 = inlined_call_operand.vmem [shape: f32[32,64], index: 5, kind: input, shape index: {}]
  %s6 = inlined_call_operand.vmem [shape: f32[1,64], index: 6, kind: input, shape index: {}]
  %s7 = inlined_call_operand.hbm [shape: f32[16,32], index: 7, kind: output, shape index: {}]
  %s8 = sld [smem:[#allocation0]]
  $region38: #{tpu_custom_call.1} parent=0
    _
  %s10 = ssub.s32 1, %s8
  %s11 = scalar_select 0, %s10, %s8
  $region1: #{tpu_custom_call.1} parent=0
    #allocation3 [shape = 'u8[8192]{0}', space=vmem, size = 0x2000, scoped, tag = 'output window, operand 0, single buffered']
    #allocation4 [shape = 's32[1]{0}', space=sflag, size = 0x4, scoped, tag = 'scoped memory for tpu_custom_call.1']
    %12 = vsyncpa [#allocation4], 0
    // Predicated region
    $region2: #{tpu_custom_call.1} parent=1 // pred_check
      _
    $region3: #{tpu_custom_call.1} parent=1 // pred_check_branch
      %14 = sbr.rel (0) target = $region5
    $region4: #{tpu_custom_call.1} parent=1 // pred_region
      _
    $region5: #{tpu_custom_call.1} parent=1 // pred_fallthru
      _
    // Predicated region
    $region6: #{tpu_custom_call.1} parent=1 // pred_check
      _
    $region7: #{tpu_custom_call.1} parent=1 // pred_check_branch
      %16 = sbr.rel (0) target = $region9
    $region8: #{tpu_custom_call.1} parent=1 // pred_region
      _
    $region9: #{tpu_custom_call.1} parent=1 // pred_fallthru
      _
    // Predicated region
    $region10: #{tpu_custom_call.1} parent=1 // pred_check
      _
    $region11: #{tpu_custom_call.1} parent=1 // pred_check_branch
      %18 = sbr.rel (0) target = $region13
    $region12: #{tpu_custom_call.1} parent=1 // pred_region
      _
    $region13: #{tpu_custom_call.1} parent=1 // pred_fallthru
      _
    // Predicated region
    $region14: #{tpu_custom_call.1} parent=1 // pred_check
      _
    $region15: #{tpu_custom_call.1} parent=1 // pred_check_branch
      %20 = sbr.rel (0) target = $region17
    $region16: #{tpu_custom_call.1} parent=1 // pred_region
      _
    $region17: #{tpu_custom_call.1} parent=1 // pred_fallthru
      _
    // Predicated region
    $region18: #{tpu_custom_call.1} parent=1 // pred_check
      _
    $region19: #{tpu_custom_call.1} parent=1 // pred_check_branch
      %22 = sbr.rel (0) target = $region21
    $region20: #{tpu_custom_call.1} parent=1 // pred_region
      _
    $region21: #{tpu_custom_call.1} parent=1 // pred_fallthru
      _
    // Predicated region
    $region22: #{tpu_custom_call.1} parent=1 // pred_check
      _
    $region23: #{tpu_custom_call.1} parent=1 // pred_check_branch
      %24 = sbr.rel (0) target = $region25
    $region24: #{tpu_custom_call.1} parent=1 // pred_region
      _
    $region25: #{tpu_custom_call.1} parent=1 // pred_fallthru
      _
    // Predicated region
    $region26: #{tpu_custom_call.1} parent=1 // pred_check
      _
    $region27: #{tpu_custom_call.1} parent=1 // pred_check_branch
      %26 = sbr.rel (0) target = $region29
    $region28: #{tpu_custom_call.1} parent=1 // pred_region
      _
    $region29: #{tpu_custom_call.1} parent=1 // pred_fallthru
      _
    %v27 = vld [vmem:[%s1] sm:$0xff]
    %v28 = vld [vmem:[%s1 + $0x8] sm:$0xff]
    %v29 = vld [vmem:[%s1 + $0x10] sm:$0xff]
    %v30 = vld [vmem:[%s1 + $0x18] sm:$0xff]
    %v31 = vld [vmem:[%s1 + $0x20] sm:$0xff]
    %v32 = vld [vmem:[%s1 + $0x28] sm:$0xff]
    %v33 = vld [vmem:[%s1 + $0x30] sm:$0xff]
    %v34 = vld [vmem:[%s1 + $0x38] sm:$0xff]
    %v35 = vld [vmem:[%s1 + $0x40] sm:$0xff]
    %v36 = vld [vmem:[%s1 + $0x48] sm:$0xff]
    %v37 = vld [vmem:[%s1 + $0x50] sm:$0xff]
    %v38 = vld [vmem:[%s1 + $0x58] sm:$0xff]
    %v39 = vld [vmem:[%s1 + $0x60] sm:$0xff]
    %v40 = vld [vmem:[%s1 + $0x68] sm:$0xff]
    %v41 = vld [vmem:[%s1 + $0x70] sm:$0xff]
    %v42 = vld [vmem:[%s1 + $0x78] sm:$0xff]
    %v43 = vld [vmem:[%s2] sm:$0xff]
    %v44 = vld [vmem:[%s2 + $0x8] sm:$0xff]
    %v45 = vld [vmem:[%s2 + $0x10] sm:$0xff]
    %v46 = vld [vmem:[%s2 + $0x18] sm:$0xff]
    %v47 = vld [vmem:[%s2 + $0x20] sm:$0xff]
    %v48 = vld [vmem:[%s2 + $0x28] sm:$0xff]
    %v49 = vld [vmem:[%s2 + $0x30] sm:$0xff]
    %v50 = vld [vmem:[%s2 + $0x38] sm:$0xff]
    %v51 = vld [vmem:[%s2 + $0x40] sm:$0xff]
    %v52 = vld [vmem:[%s2 + $0x48] sm:$0xff]
    %v53 = vld [vmem:[%s2 + $0x50] sm:$0xff]
    %v54 = vld [vmem:[%s2 + $0x58] sm:$0xff]
    %v55 = vld [vmem:[%s2 + $0x60] sm:$0xff]
    %v56 = vld [vmem:[%s2 + $0x68] sm:$0xff]
    %v57 = vld [vmem:[%s2 + $0x70] sm:$0xff]
    %v58 = vld [vmem:[%s2 + $0x78] sm:$0xff]
    %v59 = vmul.f32 %v43, 0.5
    %v60 = vmul.f32 %v44, 0.5
    %v61 = vmul.f32 %v45, 0.5
    %v62 = vmul.f32 %v46, 0.5
    %v63 = vmul.f32 %v47, 0.5
    %v64 = vmul.f32 %v48, 0.5
    %v65 = vmul.f32 %v49, 0.5
    %v66 = vmul.f32 %v50, 0.5
    %v67 = vmul.f32 %v51, 0.5
    %v68 = vmul.f32 %v52, 0.5
    %v69 = vmul.f32 %v53, 0.5
    %v70 = vmul.f32 %v54, 0.5
    %v71 = vmul.f32 %v55, 0.5
    %v72 = vmul.f32 %v56, 0.5
    %v73 = vmul.f32 %v57, 0.5
    %v74 = vmul.f32 %v58, 0.5
    %v75 = vld [vmem:[%s3] sm:$0xff]
    %v76 = vld [vmem:[%s3 + $0x8] sm:$0xff]
    %v77 = vld [vmem:[%s3 + $0x10] sm:$0xff]
    %v78 = vld [vmem:[%s3 + $0x18] sm:$0xff]
    %v79 = vld [vmem:[%s3 + $0x20] sm:$0xff]
    %v80 = vld [vmem:[%s3 + $0x28] sm:$0xff]
    %v81 = vld [vmem:[%s3 + $0x30] sm:$0xff]
    %v82 = vld [vmem:[%s3 + $0x38] sm:$0xff]
    %v83 = vld [vmem:[%s3 + $0x40] sm:$0xff]
    %v84 = vld [vmem:[%s3 + $0x48] sm:$0xff]
    %v85 = vld [vmem:[%s3 + $0x50] sm:$0xff]
    %v86 = vld [vmem:[%s3 + $0x58] sm:$0xff]
    %v87 = vld [vmem:[%s3 + $0x60] sm:$0xff]
    %v88 = vld [vmem:[%s3 + $0x68] sm:$0xff]
    %v89 = vld [vmem:[%s3 + $0x70] sm:$0xff]
    %v90 = vld [vmem:[%s3 + $0x78] sm:$0xff]
    %vm91 = vcmask 31744
    %v93 = vsel %vm91, %v27, 0
    %v96 = vsel %vm91, %v59, 0
    %98 = vmatprep.subr.mxu0 0.0
    %99 = vmatpush1.xpose.msra.mxu0 %v96
    %100 = vmatprep.subr.mxu0 0.0
    %101 = vmatpush1.xpose.msra.mxu0 0.0
    %102 = vmatprep.subr.mxu0 0.0
    %103 = vmatpush1.xpose.msra.mxu0 0.0
    %104 = vmatprep.subr.mxu0 0.0
    %105 = vmatpush1.xpose.msra.mxu0 0.0
    %106 = vmatprep.subr.mxu0 0.0
    %107 = vmatpush1.xpose.msra.mxu0 0.0
    %108 = vmatprep.subr.mxu0 0.0
    %109 = vmatpush1.xpose.msra.mxu0 0.0
    %110 = vmatprep.subr.mxu0 0.0
    %111 = vmatpush1.xpose.msra.mxu0 0.0
    %112 = vmatprep.subr.mxu0 0.0
    %113 = vmatpush1.xpose.msra.mxu0 0.0
    %114 = vmatprep.subr.mxu0 0.0
    %115 = vmatpush1.xpose.msra.mxu0 0.0
    %116 = vmatprep.subr.mxu0 0.0
    %117 = vmatpush1.xpose.msra.mxu0 0.0
    %118 = vmatprep.subr.mxu0 0.0
    %119 = vmatpush1.xpose.msra.mxu0 0.0
    %120 = vmatprep.subr.mxu0 0.0
    %121 = vmatpush1.xpose.msra.mxu0 0.0
    %122 = vmatprep.subr.mxu0 0.0
    %123 = vmatpush1.xpose.msra.mxu0 0.0
    %124 = vmatprep.subr.mxu0 0.0
    %125 = vmatpush1.xpose.msra.mxu0 0.0
    %126 = vmatprep.subr.mxu0 0.0
    %127 = vmatpush1.xpose.msra.mxu0 0.0
    %128 = vmatprep.subr.mxu0 0.0
    %129 = vmatpush1.xpose.msra.mxu0 0.0
    %130 = vmatprep.subr.mxu0 0.0
    %131 = vmatpush1.xpose.msra.mxu0 0.0
    %132 = vmatprep.subr.mxu0 0.0
    %133 = vmatpush1.xpose.msra.mxu0 0.0
    %134 = vmatprep.subr.mxu0 0.0
    %135 = vmatpush1.xpose.msra.mxu0 0.0
    %136 = vmatprep.subr.mxu0 0.0
    %137 = vmatpush1.xpose.msra.mxu0 0.0
    %138 = vmatprep.subr.mxu0 0.0
    %139 = vmatpush1.xpose.msra.mxu0 0.0
    %140 = vmatprep.subr.mxu0 0.0
    %141 = vmatpush1.xpose.msra.mxu0 0.0
    %142 = vmatprep.subr.mxu0 0.0
    %143 = vmatpush1.xpose.msra.mxu0 0.0
    %144 = vmatprep.subr.mxu0 0.0
    %145 = vmatpush1.xpose.msra.mxu0 0.0
    %146 = vmatprep.subr.mxu0 0.0
    %147 = vmatpush1.xpose.msra.mxu0 0.0
    %148 = vmatprep.subr.mxu0 0.0
    %149 = vmatpush1.xpose.msra.mxu0 0.0
    %150 = vmatprep.subr.mxu0 0.0
    %151 = vmatpush1.xpose.msra.mxu0 0.0
    %152 = vmatprep.subr.mxu0 0.0
    %153 = vmatpush1.xpose.msra.mxu0 0.0
    %154 = vmatprep.subr.mxu0 0.0
    %155 = vmatpush1.xpose.msra.mxu0 0.0
    %156 = vmatprep.subr.mxu0 0.0
    %157 = vmatpush1.xpose.msra.mxu0 0.0
    %158 = vmatprep.subr.mxu0 0.0
    %159 = vmatpush1.xpose.msra.mxu0 0.0
    %160 = vmatprep.subr.mxu0 0.0
    %161 = vmatpush1.xpose.msra.mxu0 0.0
    %162 = vmatprep.mubr.f32.mxu0 0.0
    %163 = vmatmul.mubr.f32.gmra.mrb[0].mxu0 %v93
    %v164 = vpop.f32.mrb[0].mxu0
    %v165 = vadd.f32 0.0, %v164
    %v166 = vpop.f32.mrb[0].mxu0
    %167 = vdwg.mxu0
    %v169 = vsel %vm91, %v28, 0
    %v172 = vsel %vm91, %v60, 0
    %174 = vmatprep.subr.mxu0 0.0
    %175 = vmatpush1.xpose.msra.mxu0 %v172
    %176 = vmatprep.subr.mxu0 0.0
    %177 = vmatpush1.xpose.msra.mxu0 0.0
    %178 = vmatprep.subr.mxu0 0.0
    %179 = vmatpush1.xpose.msra.mxu0 0.0
    %180 = vmatprep.subr.mxu0 0.0
    %181 = vmatpush1.xpose.msra.mxu0 0.0
    %182 = vmatprep.subr.mxu0 0.0
    %183 = vmatpush1.xpose.msra.mxu0 0.0
    %184 = vmatprep.subr.mxu0 0.0
    %185 = vmatpush1.xpose.msra.mxu0 0.0
    %186 = vmatprep.subr.mxu0 0.0
    %187 = vmatpush1.xpose.msra.mxu0 0.0
    %188 = vmatprep.subr.mxu0 0.0
    %189 = vmatpush1.xpose.msra.mxu0 0.0
    %190 = vmatprep.subr.mxu0 0.0
    %191 = vmatpush1.xpose.msra.mxu0 0.0
    %192 = vmatprep.subr.mxu0 0.0
    %193 = vmatpush1.xpose.msra.mxu0 0.0
    %194 = vmatprep.subr.mxu0 0.0
    %195 = vmatpush1.xpose.msra.mxu0 0.0
    %196 = vmatprep.subr.mxu0 0.0
    %197 = vmatpush1.xpose.msra.mxu0 0.0
    %198 = vmatprep.subr.mxu0 0.0
    %199 = vmatpush1.xpose.msra.mxu0 0.0
    %200 = vmatprep.subr.mxu0 0.0
    %201 = vmatpush1.xpose.msra.mxu0 0.0
    %202 = vmatprep.subr.mxu0 0.0
    %203 = vmatpush1.xpose.msra.mxu0 0.0
    %204 = vmatprep.subr.mxu0 0.0
    %205 = vmatpush1.xpose.msra.mxu0 0.0
    %206 = vmatprep.subr.mxu0 0.0
    %207 = vmatpush1.xpose.msra.mxu0 0.0
    %208 = vmatprep.subr.mxu0 0.0
    %209 = vmatpush1.xpose.msra.mxu0 0.0
    %210 = vmatprep.subr.mxu0 0.0
    %211 = vmatpush1.xpose.msra.mxu0 0.0
    %212 = vmatprep.subr.mxu0 0.0
    %213 = vmatpush1.xpose.msra.mxu0 0.0
    %214 = vmatprep.subr.mxu0 0.0
    %215 = vmatpush1.xpose.msra.mxu0 0.0
    %216 = vmatprep.subr.mxu0 0.0
    %217 = vmatpush1.xpose.msra.mxu0 0.0
    %218 = vmatprep.subr.mxu0 0.0
    %219 = vmatpush1.xpose.msra.mxu0 0.0
    %220 = vmatprep.subr.mxu0 0.0
    %221 = vmatpush1.xpose.msra.mxu0 0.0
    %222 = vmatprep.subr.mxu0 0.0
    %223 = vmatpush1.xpose.msra.mxu0 0.0
    %224 = vmatprep.subr.mxu0 0.0
    %225 = vmatpush1.xpose.msra.mxu0 0.0
    %226 = vmatprep.subr.mxu0 0.0
    %227 = vmatpush1.xpose.msra.mxu0 0.0
    %228 = vmatprep.subr.mxu0 0.0
    %229 = vmatpush1.xpose.msra.mxu0 0.0
    %230 = vmatprep.subr.mxu0 0.0
    %231 = vmatpush1.xpose.msra.mxu0 0.0
    %232 = vmatprep.subr.mxu0 0.0
    %233 = vmatpush1.xpose.msra.mxu0 0.0
    %234 = vmatprep.subr.mxu0 0.0
    %235 = vmatpush1.xpose.msra.mxu0 0.0
    %236 = vmatprep.subr.mxu0 0.0
    %237 = vmatpush1.xpose.msra.mxu0 0.0
    %238 = vmatprep.mubr.f32.mxu0 0.0
    %239 = vmatmul.mubr.f32.gmra.mrb[0].mxu0 %v169
    %v240 = vpop.f32.mrb[0].mxu0
    %v241 = vadd.f32 0.0, %v240
    %v242 = vpop.f32.mrb[0].mxu0
    %243 = vdwg.mxu0
    %v245 = vsel %vm91, %v29, 0
    %v248 = vsel %vm91, %v61, 0
    %250 = vmatprep.subr.mxu0 0.0
    %251 = vmatpush1.xpose.msra.mxu0 %v248
    %252 = vmatprep.subr.mxu0 0.0
    %253 = vmatpush1.xpose.msra.mxu0 0.0
    %254 = vmatprep.subr.mxu0 0.0
    %255 = vmatpush1.xpose.msra.mxu0 0.0
    %256 = vmatprep.subr.mxu0 0.0
    %257 = vmatpush1.xpose.msra.mxu0 0.0
    %258 = vmatprep.subr.mxu0 0.0
    %259 = vmatpush1.xpose.msra.mxu0 0.0
    %260 = vmatprep.subr.mxu0 0.0
    %261 = vmatpush1.xpose.msra.mxu0 0.0
    %262 = vmatprep.subr.mxu0 0.0
    %263 = vmatpush1.xpose.msra.mxu0 0.0
    %264 = vmatprep.subr.mxu0 0.0
    %265 = vmatpush1.xpose.msra.mxu0 0.0
    %266 = vmatprep.subr.mxu0 0.0
    %267 = vmatpush1.xpose.msra.mxu0 0.0
    %268 = vmatprep.subr.mxu0 0.0
    %269 = vmatpush1.xpose.msra.mxu0 0.0
    %270 = vmatprep.subr.mxu0 0.0
    %271 = vmatpush1.xpose.msra.mxu0 0.0
    %272 = vmatprep.subr.mxu0 0.0
    %273 = vmatpush1.xpose.msra.mxu0 0.0
    %274 = vmatprep.subr.mxu0 0.0
    %275 = vmatpush1.xpose.msra.mxu0 0.0
    %276 = vmatprep.subr.mxu0 0.0
    %277 = vmatpush1.xpose.msra.mxu0 0.0
    %278 = vmatprep.subr.mxu0 0.0
    %279 = vmatpush1.xpose.msra.mxu0 0.0
    %280 = vmatprep.subr.mxu0 0.0
    %281 = vmatpush1.xpose.msra.mxu0 0.0
    %282 = vmatprep.subr.mxu0 0.0
    %283 = vmatpush1.xpose.msra.mxu0 0.0
    %284 = vmatprep.subr.mxu0 0.0
    %285 = vmatpush1.xpose.msra.mxu0 0.0
    %286 = vmatprep.subr.mxu0 0.0
    %287 = vmatpush1.xpose.msra.mxu0 0.0
    %288 = vmatprep.subr.mxu0 0.0
    %289 = vmatpush1.xpose.msra.mxu0 0.0
    %290 = vmatprep.subr.mxu0 0.0
    %291 = vmatpush1.xpose.msra.mxu0 0.0
    %292 = vmatprep.subr.mxu0 0.0
    %293 = vmatpush1.xpose.msra.mxu0 0.0
    %294 = vmatprep.subr.mxu0 0.0
    %295 = vmatpush1.xpose.msra.mxu0 0.0
    %296 = vmatprep.subr.mxu0 0.0
    %297 = vmatpush1.xpose.msra.mxu0 0.0
    %298 = vmatprep.subr.mxu0 0.0
    %299 = vmatpush1.xpose.msra.mxu0 0.0
    %300 = vmatprep.subr.mxu0 0.0
    %301 = vmatpush1.xpose.msra.mxu0 0.0
    %302 = vmatprep.subr.mxu0 0.0
    %303 = vmatpush1.xpose.msra.mxu0 0.0
    %304 = vmatprep.subr.mxu0 0.0
    %305 = vmatpush1.xpose.msra.mxu0 0.0
    %306 = vmatprep.subr.mxu0 0.0
    %307 = vmatpush1.xpose.msra.mxu0 0.0
    %308 = vmatprep.subr.mxu0 0.0
    %309 = vmatpush1.xpose.msra.mxu0 0.0
    %310 = vmatprep.subr.mxu0 0.0
    %311 = vmatpush1.xpose.msra.mxu0 0.0
    %312 = vmatprep.subr.mxu0 0.0
    %313 = vmatpush1.xpose.msra.mxu0 0.0
    %314 = vmatprep.mubr.f32.mxu0 0.0
    %315 = vmatmul.mubr.f32.gmra.mrb[0].mxu0 %v245
    %v316 = vpop.f32.mrb[0].mxu0
    %v317 = vadd.f32 0.0, %v316
    %v318 = vpop.f32.mrb[0].mxu0
    %319 = vdwg.mxu0
    %v321 = vsel %vm91, %v30, 0
    %v324 = vsel %vm91, %v62, 0
    %326 = vmatprep.subr.mxu0 0.0
    %327 = vmatpush1.xpose.msra.mxu0 %v324
    %328 = vmatprep.subr.mxu0 0.0
    %329 = vmatpush1.xpose.msra.mxu0 0.0
    %330 = vmatprep.subr.mxu0 0.0
    %331 = vmatpush1.xpose.msra.mxu0 0.0
    %332 = vmatprep.subr.mxu0 0.0
    %333 = vmatpush1.xpose.msra.mxu0 0.0
    %334 = vmatprep.subr.mxu0 0.0
    %335 = vmatpush1.xpose.msra.mxu0 0.0
    %336 = vmatprep.subr.mxu0 0.0
    %337 = vmatpush1.xpose.msra.mxu0 0.0
    %338 = vmatprep.subr.mxu0 0.0
    %339 = vmatpush1.xpose.msra.mxu0 0.0
    %340 = vmatprep.subr.mxu0 0.0
    %341 = vmatpush1.xpose.msra.mxu0 0.0
    %342 = vmatprep.subr.mxu0 0.0
    %343 = vmatpush1.xpose.msra.mxu0 0.0
    %344 = vmatprep.subr.mxu0 0.0
    %345 = vmatpush1.xpose.msra.mxu0 0.0
    %346 = vmatprep.subr.mxu0 0.0
    %347 = vmatpush1.xpose.msra.mxu0 0.0
    %348 = vmatprep.subr.mxu0 0.0
    %349 = vmatpush1.xpose.msra.mxu0 0.0
    %350 = vmatprep.subr.mxu0 0.0
    %351 = vmatpush1.xpose.msra.mxu0 0.0
    %352 = vmatprep.subr.mxu0 0.0
    %353 = vmatpush1.xpose.msra.mxu0 0.0
    %354 = vmatprep.subr.mxu0 0.0
    %355 = vmatpush1.xpose.msra.mxu0 0.0
    %356 = vmatprep.subr.mxu0 0.0
    %357 = vmatpush1.xpose.msra.mxu0 0.0
    %358 = vmatprep.subr.mxu0 0.0
    %359 = vmatpush1.xpose.msra.mxu0 0.0
    %360 = vmatprep.subr.mxu0 0.0
    %361 = vmatpush1.xpose.msra.mxu0 0.0
    %362 = vmatprep.subr.mxu0 0.0
    %363 = vmatpush1.xpose.msra.mxu0 0.0
    %364 = vmatprep.subr.mxu0 0.0
    %365 = vmatpush1.xpose.msra.mxu0 0.0
    %366 = vmatprep.subr.mxu0 0.0
    %367 = vmatpush1.xpose.msra.mxu0 0.0
    %368 = vmatprep.subr.mxu0 0.0
    %369 = vmatpush1.xpose.msra.mxu0 0.0
    %370 = vmatprep.subr.mxu0 0.0
    %371 = vmatpush1.xpose.msra.mxu0 0.0
    %372 = vmatprep.subr.mxu0 0.0
    %373 = vmatpush1.xpose.msra.mxu0 0.0
    %374 = vmatprep.subr.mxu0 0.0
    %375 = vmatpush1.xpose.msra.mxu0 0.0
    %376 = vmatprep.subr.mxu0 0.0
    %377 = vmatpush1.xpose.msra.mxu0 0.0
    %378 = vmatprep.subr.mxu0 0.0
    %379 = vmatpush1.xpose.msra.mxu0 0.0
    %380 = vmatprep.subr.mxu0 0.0
    %381 = vmatpush1.xpose.msra.mxu0 0.0
    %382 = vmatprep.subr.mxu0 0.0
    %383 = vmatpush1.xpose.msra.mxu0 0.0
    %384 = vmatprep.subr.mxu0 0.0
    %385 = vmatpush1.xpose.msra.mxu0 0.0
    %386 = vmatprep.subr.mxu0 0.0
    %387 = vmatpush1.xpose.msra.mxu0 0.0
    %388 = vmatprep.subr.mxu0 0.0
    %389 = vmatpush1.xpose.msra.mxu0 0.0
    %390 = vmatprep.mubr.f32.mxu0 0.0
    %391 = vmatmul.mubr.f32.gmra.mrb[0].mxu0 %v321
    %v392 = vpop.f32.mrb[0].mxu0
    %v393 = vadd.f32 0.0, %v392
    %v394 = vpop.f32.mrb[0].mxu0
    %395 = vdwg.mxu0
    %v397 = vsel %vm91, %v31, 0
    %v400 = vsel %vm91, %v63, 0
    %402 = vmatprep.subr.mxu0 0.0
    %403 = vmatpush1.xpose.msra.mxu0 %v400
    %404 = vmatprep.subr.mxu0 0.0
    %405 = vmatpush1.xpose.msra.mxu0 0.0
    %406 = vmatprep.subr.mxu0 0.0
    %407 = vmatpush1.xpose.msra.mxu0 0.0
    %408 = vmatprep.subr.mxu0 0.0
    %409 = vmatpush1.xpose.msra.mxu0 0.0
    %410 = vmatprep.subr.mxu0 0.0
    %411 = vmatpush1.xpose.msra.mxu0 0.0
    %412 = vmatprep.subr.mxu0 0.0
    %413 = vmatpush1.xpose.msra.mxu0 0.0
    %414 = vmatprep.subr.mxu0 0.0
    %415 = vmatpush1.xpose.msra.mxu0 0.0
    %416 = vmatprep.subr.mxu0 0.0
    %417 = vmatpush1.xpose.msra.mxu0 0.0
    %418 = vmatprep.subr.mxu0 0.0
    %419 = vmatpush1.xpose.msra.mxu0 0.0
    %420 = vmatprep.subr.mxu0 0.0
    %421 = vmatpush1.xpose.msra.mxu0 0.0
    %422 = vmatprep.subr.mxu0 0.0
    %423 = vmatpush1.xpose.msra.mxu0 0.0
    %424 = vmatprep.subr.mxu0 0.0
    %425 = vmatpush1.xpose.msra.mxu0 0.0
    %426 = vmatprep.subr.mxu0 0.0
    %427 = vmatpush1.xpose.msra.mxu0 0.0
    %428 = vmatprep.subr.mxu0 0.0
    %429 = vmatpush1.xpose.msra.mxu0 0.0
    %430 = vmatprep.subr.mxu0 0.0
    %431 = vmatpush1.xpose.msra.mxu0 0.0
    %432 = vmatprep.subr.mxu0 0.0
    %433 = vmatpush1.xpose.msra.mxu0 0.0
    %434 = vmatprep.subr.mxu0 0.0
    %435 = vmatpush1.xpose.msra.mxu0 0.0
    %436 = vmatprep.subr.mxu0 0.0
    %437 = vmatpush1.xpose.msra.mxu0 0.0
    %438 = vmatprep.subr.mxu0 0.0
    %439 = vmatpush1.xpose.msra.mxu0 0.0
    %440 = vmatprep.subr.mxu0 0.0
    %441 = vmatpush1.xpose.msra.mxu0 0.0
    %442 = vmatprep.subr.mxu0 0.0
    %443 = vmatpush1.xpose.msra.mxu0 0.0
    %444 = vmatprep.subr.mxu0 0.0
    %445 = vmatpush1.xpose.msra.mxu0 0.0
    %446 = vmatprep.subr.mxu0 0.0
    %447 = vmatpush1.xpose.msra.mxu0 0.0
    %448 = vmatprep.subr.mxu0 0.0
    %449 = vmatpush1.xpose.msra.mxu0 0.0
    %450 = vmatprep.subr.mxu0 0.0
    %451 = vmatpush1.xpose.msra.mxu0 0.0
    %452 = vmatprep.subr.mxu0 0.0
    %453 = vmatpush1.xpose.msra.mxu0 0.0
    %454 = vmatprep.subr.mxu0 0.0
    %455 = vmatpush1.xpose.msra.mxu0 0.0
    %456 = vmatprep.subr.mxu0 0.0
    %457 = vmatpush1.xpose.msra.mxu0 0.0
    %458 = vmatprep.subr.mxu0 0.0
    %459 = vmatpush1.xpose.msra.mxu0 0.0
    %460 = vmatprep.subr.mxu0 0.0
    %461 = vmatpush1.xpose.msra.mxu0 0.0
    %462 = vmatprep.subr.mxu0 0.0
    %463 = vmatpush1.xpose.msra.mxu0 0.0
    %464 = vmatprep.subr.mxu0 0.0
    %465 = vmatpush1.xpose.msra.mxu0 0.0
    %466 = vmatprep.mubr.f32.mxu0 0.0
    %467 = vmatmul.mubr.f32.gmra.mrb[0].mxu0 %v397
    %v468 = vpop.f32.mrb[0].mxu0
    %v469 = vadd.f32 0.0, %v468
    %v470 = vpop.f32.mrb[0].mxu0
    %471 = vdwg.mxu0
    %v473 = vsel %vm91, %v32, 0
    %v476 = vsel %vm91, %v64, 0
    %478 = vmatprep.subr.mxu0 0.0
    %479 = vmatpush1.xpose.msra.mxu0 %v476
    %480 = vmatprep.subr.mxu0 0.0
    %481 = vmatpush1.xpose.msra.mxu0 0.0
    %482 = vmatprep.subr.mxu0 0.0
    %483 = vmatpush1.xpose.msra.mxu0 0.0
    %484 = vmatprep.subr.mxu0 0.0
    %485 = vmatpush1.xpose.msra.mxu0 0.0
    %486 = vmatprep.subr.mxu0 0.0
    %487 = vmatpush1.xpose.msra.mxu0 0.0
    %488 = vmatprep.subr.mxu0 0.0
    %489 = vmatpush1.xpose.msra.mxu0 0.0
    %490 = vmatprep.subr.mxu0 0.0
    %491 = vmatpush1.xpose.msra.mxu0 0.0
    %492 = vmatprep.subr.mxu0 0.0
    %493 = vmatpush1.xpose.msra.mxu0 0.0
    %494 = vmatprep.subr.mxu0 0.0
    %495 = vmatpush1.xpose.msra.mxu0 0.0
    %496 = vmatprep.subr.mxu0 0.0
    %497 = vmatpush1.xpose.msra.mxu0 0.0
    %498 = vmatprep.subr.mxu0 0.0
    %499 = vmatpush1.xpose.msra.mxu0 0.0
    %500 = vmatprep.subr.mxu0 0.0
    %501 = vmatpush1.xpose.msra.mxu0 0.0
    %502 = vmatprep.subr.mxu0 0.0
    %503 = vmatpush1.xpose.msra.mxu0 0.0
    %504 = vmatprep.subr.mxu0 0.0
    %505 = vmatpush1.xpose.msra.mxu0 0.0
    %506 = vmatprep.subr.mxu0 0.0
    %507 = vmatpush1.xpose.msra.mxu0 0.0
    %508 = vmatprep.subr.mxu0 0.0
    %509 = vmatpush1.xpose.msra.mxu0 0.0
    %510 = vmatprep.subr.mxu0 0.0
    %511 = vmatpush1.xpose.msra.mxu0 0.0
    %512 = vmatprep.subr.mxu0 0.0
    %513 = vmatpush1.xpose.msra.mxu0 0.0
    %514 = vmatprep.subr.mxu0 0.0
    %515 = vmatpush1.xpose.msra.mxu0 0.0
    %516 = vmatprep.subr.mxu0 0.0
    %517 = vmatpush1.xpose.msra.mxu0 0.0
    %518 = vmatprep.subr.mxu0 0.0
    %519 = vmatpush1.xpose.msra.mxu0 0.0
    %520 = vmatprep.subr.mxu0 0.0
    %521 = vmatpush1.xpose.msra.mxu0 0.0
    %522 = vmatprep.subr.mxu0 0.0
    %523 = vmatpush1.xpose.msra.mxu0 0.0
    %524 = vmatprep.subr.mxu0 0.0
    %525 = vmatpush1.xpose.msra.mxu0 0.0
    %526 = vmatprep.subr.mxu0 0.0
    %527 = vmatpush1.xpose.msra.mxu0 0.0
    %528 = vmatprep.subr.mxu0 0.0
    %529 = vmatpush1.xpose.msra.mxu0 0.0
    %530 = vmatprep.subr.mxu0 0.0
    %531 = vmatpush1.xpose.msra.mxu0 0.0
    %532 = vmatprep.subr.mxu0 0.0
    %533 = vmatpush1.xpose.msra.mxu0 0.0
    %534 = vmatprep.subr.mxu0 0.0
    %535 = vmatpush1.xpose.msra.mxu0 0.0
    %536 = vmatprep.subr.mxu0 0.0
    %537 = vmatpush1.xpose.msra.mxu0 0.0
    %538 = vmatprep.subr.mxu0 0.0
    %539 = vmatpush1.xpose.msra.mxu0 0.0
    %540 = vmatprep.subr.mxu0 0.0
    %541 = vmatpush1.xpose.msra.mxu0 0.0
    %542 = vmatprep.mubr.f32.mxu0 0.0
    %543 = vmatmul.mubr.f32.gmra.mrb[0].mxu0 %v473
    %v544 = vpop.f32.mrb[0].mxu0
    %v545 = vadd.f32 0.0, %v544
    %v546 = vpop.f32.mrb[0].mxu0
    %547 = vdwg.mxu0
    %v549 = vsel %vm91, %v33, 0
    %v552 = vsel %vm91, %v65, 0
    %554 = vmatprep.subr.mxu0 0.0
    %555 = vmatpush1.xpose.msra.mxu0 %v552
    %556 = vmatprep.subr.mxu0 0.0
    %557 = vmatpush1.xpose.msra.mxu0 0.0
    %558 = vmatprep.subr.mxu0 0.0
    %559 = vmatpush1.xpose.msra.mxu0 0.0
    %560 = vmatprep.subr.mxu0 0.0
    %561 = vmatpush1.xpose.msra.mxu0 0.0
    %562 = vmatprep.subr.mxu0 0.0
    %563 = vmatpush1.xpose.msra.mxu0 0.0
    %564 = vmatprep.subr.mxu0 0.0
    %565 = vmatpush1.xpose.msra.mxu0 0.0
    %566 = vmatprep.subr.mxu0 0.0
    %567 = vmatpush1.xpose.msra.mxu0 0.0
    %568 = vmatprep.subr.mxu0 0.0
    %569 = vmatpush1.xpose.msra.mxu0 0.0
    %570 = vmatprep.subr.mxu0 0.0
    %571 = vmatpush1.xpose.msra.mxu0 0.0
    %572 = vmatprep.subr.mxu0 0.0
    %573 = vmatpush1.xpose.msra.mxu0 0.0
    %574 = vmatprep.subr.mxu0 0.0
    %575 = vmatpush1.xpose.msra.mxu0 0.0
    %576 = vmatprep.subr.mxu0 0.0
    %577 = vmatpush1.xpose.msra.mxu0 0.0
    %578 = vmatprep.subr.mxu0 0.0
    %579 = vmatpush1.xpose.msra.mxu0 0.0
    %580 = vmatprep.subr.mxu0 0.0
    %581 = vmatpush1.xpose.msra.mxu0 0.0
    %582 = vmatprep.subr.mxu0 0.0
    %583 = vmatpush1.xpose.msra.mxu0 0.0
    %584 = vmatprep.subr.mxu0 0.0
    %585 = vmatpush1.xpose.msra.mxu0 0.0
    %586 = vmatprep.subr.mxu0 0.0
    %587 = vmatpush1.xpose.msra.mxu0 0.0
    %588 = vmatprep.subr.mxu0 0.0
    %589 = vmatpush1.xpose.msra.mxu0 0.0
    %590 = vmatprep.subr.mxu0 0.0
    %591 = vmatpush1.xpose.msra.mxu0 0.0
    %592 = vmatprep.subr.mxu0 0.0
    %593 = vmatpush1.xpose.msra.mxu0 0.0
    %594 = vmatprep.subr.mxu0 0.0
    %595 = vmatpush1.xpose.msra.mxu0 0.0
    %596 = vmatprep.subr.mxu0 0.0
    %597 = vmatpush1.xpose.msra.mxu0 0.0
    %598 = vmatprep.subr.mxu0 0.0
    %599 = vmatpush1.xpose.msra.mxu0 0.0
    %600 = vmatprep.subr.mxu0 0.0
    %601 = vmatpush1.xpose.msra.mxu0 0.0
    %602 = vmatprep.subr.mxu0 0.0
    %603 = vmatpush1.xpose.msra.mxu0 0.0
    %604 = vmatprep.subr.mxu0 0.0
    %605 = vmatpush1.xpose.msra.mxu0 0.0
    %606 = vmatprep.subr.mxu0 0.0
    %607 = vmatpush1.xpose.msra.mxu0 0.0
    %608 = vmatprep.subr.mxu0 0.0
    %609 = vmatpush1.xpose.msra.mxu0 0.0
    %610 = vmatprep.subr.mxu0 0.0
    %611 = vmatpush1.xpose.msra.mxu0 0.0
    %612 = vmatprep.subr.mxu0 0.0
    %613 = vmatpush1.xpose.msra.mxu0 0.0
    %614 = vmatprep.subr.mxu0 0.0
    %615 = vmatpush1.xpose.msra.mxu0 0.0
    %616 = vmatprep.subr.mxu0 0.0
    %617 = vmatpush1.xpose.msra.mxu0 0.0
    %618 = vmatprep.mubr.f32.mxu0 0.0
    %619 = vmatmul.mubr.f32.gmra.mrb[0].mxu0 %v549
    %v620 = vpop.f32.mrb[0].mxu0
    %v621 = vadd.f32 0.0, %v620
    %v622 = vpop.f32.mrb[0].mxu0
    %623 = vdwg.mxu0
    %v625 = vsel %vm91, %v34, 0
    %v628 = vsel %vm91, %v66, 0
    %630 = vmatprep.subr.mxu0 0.0
    %631 = vmatpush1.xpose.msra.mxu0 %v628
    %632 = vmatprep.subr.mxu0 0.0
    %633 = vmatpush1.xpose.msra.mxu0 0.0
    %634 = vmatprep.subr.mxu0 0.0
    %635 = vmatpush1.xpose.msra.mxu0 0.0
    %636 = vmatprep.subr.mxu0 0.0
    %637 = vmatpush1.xpose.msra.mxu0 0.0
    %638 = vmatprep.subr.mxu0 0.0
    %639 = vmatpush1.xpose.msra.mxu0 0.0
    %640 = vmatprep.subr.mxu0 0.0
    %641 = vmatpush1.xpose.msra.mxu0 0.0
    %642 = vmatprep.subr.mxu0 0.0
    %643 = vmatpush1.xpose.msra.mxu0 0.0
    %644 = vmatprep.subr.mxu0 0.0
    %645 = vmatpush1.xpose.msra.mxu0 0.0
    %646 = vmatprep.subr.mxu0 0.0
    %647 = vmatpush1.xpose.msra.mxu0 0.0
    %648 = vmatprep.subr.mxu0 0.0
    %649 = vmatpush1.xpose.msra.mxu0 0.0
    %650 = vmatprep.subr.mxu0 0.0
    %651 = vmatpush1.xpose.msra.mxu0 0.0
    %652 = vmatprep.subr.mxu0 0.0
    %653 = vmatpush1.xpose.msra.mxu0 0.0
    %654 = vmatprep.subr.mxu0 0.0
    %655 = vmatpush1.xpose.msra.mxu0 0.0
    %656 = vmatprep.subr.mxu0 0.0
    %657 = vmatpush1.xpose.msra.mxu0 0.0
    %658 = vmatprep.subr.mxu0 0.0
    %659 = vmatpush1.xpose.msra.mxu0 0.0
    %660 = vmatprep.subr.mxu0 0.0
    %661 = vmatpush1.xpose.msra.mxu0 0.0
    %662 = vmatprep.subr.mxu0 0.0
    %663 = vmatpush1.xpose.msra.mxu0 0.0
    %664 = vmatprep.subr.mxu0 0.0
    %665 = vmatpush1.xpose.msra.mxu0 0.0
    %666 = vmatprep.subr.mxu0 0.0
    %667 = vmatpush1.xpose.msra.mxu0 0.0
    %668 = vmatprep.subr.mxu0 0.0
    %669 = vmatpush1.xpose.msra.mxu0 0.0
    %670 = vmatprep.subr.mxu0 0.0
    %671 = vmatpush1.xpose.msra.mxu0 0.0
    %672 = vmatprep.subr.mxu0 0.0
    %673 = vmatpush1.xpose.msra.mxu0 0.0
    %674 = vmatprep.subr.mxu0 0.0
    %675 = vmatpush1.xpose.msra.mxu0 0.0
    %676 = vmatprep.subr.mxu0 0.0
    %677 = vmatpush1.xpose.msra.mxu0 0.0
    %678 = vmatprep.subr.mxu0 0.0
    %679 = vmatpush1.xpose.msra.mxu0 0.0
    %680 = vmatprep.subr.mxu0 0.0
    %681 = vmatpush1.xpose.msra.mxu0 0.0
    %682 = vmatprep.subr.mxu0 0.0
    %683 = vmatpush1.xpose.msra.mxu0 0.0
    %684 = vmatprep.subr.mxu0 0.0
    %685 = vmatpush1.xpose.msra.mxu0 0.0
    %686 = vmatprep.subr.mxu0 0.0
    %687 = vmatpush1.xpose.msra.mxu0 0.0
    %688 = vmatprep.subr.mxu0 0.0
    %689 = vmatpush1.xpose.msra.mxu0 0.0
    %690 = vmatprep.subr.mxu0 0.0
    %691 = vmatpush1.xpose.msra.mxu0 0.0
    %692 = vmatprep.subr.mxu0 0.0
    %693 = vmatpush1.xpose.msra.mxu0 0.0
    %694 = vmatprep.mubr.f32.mxu0 0.0
    %695 = vmatmul.mubr.f32.gmra.mrb[0].mxu0 %v625
    %v696 = vpop.f32.mrb[0].mxu0
    %v697 = vadd.f32 0.0, %v696
    %v698 = vpop.f32.mrb[0].mxu0
    %699 = vdwg.mxu0
    %v701 = vsel %vm91, %v35, 0
    %v704 = vsel %vm91, %v67, 0
    %706 = vmatprep.subr.mxu0 0.0
    %707 = vmatpush1.xpose.msra.mxu0 %v704
    %708 = vmatprep.subr.mxu0 0.0
    %709 = vmatpush1.xpose.msra.mxu0 0.0
    %710 = vmatprep.subr.mxu0 0.0
    %711 = vmatpush1.xpose.msra.mxu0 0.0
    %712 = vmatprep.subr.mxu0 0.0
    %713 = vmatpush1.xpose.msra.mxu0 0.0
    %714 = vmatprep.subr.mxu0 0.0
    %715 = vmatpush1.xpose.msra.mxu0 0.0
    %716 = vmatprep.subr.mxu0 0.0
    %717 = vmatpush1.xpose.msra.mxu0 0.0
    %718 = vmatprep.subr.mxu0 0.0
    %719 = vmatpush1.xpose.msra.mxu0 0.0
    %720 = vmatprep.subr.mxu0 0.0
    %721 = vmatpush1.xpose.msra.mxu0 0.0
    %722 = vmatprep.subr.mxu0 0.0
    %723 = vmatpush1.xpose.msra.mxu0 0.0
    %724 = vmatprep.subr.mxu0 0.0
    %725 = vmatpush1.xpose.msra.mxu0 0.0
    %726 = vmatprep.subr.mxu0 0.0
    %727 = vmatpush1.xpose.msra.mxu0 0.0
    %728 = vmatprep.subr.mxu0 0.0
    %729 = vmatpush1.xpose.msra.mxu0 0.0
    %730 = vmatprep.subr.mxu0 0.0
    %731 = vmatpush1.xpose.msra.mxu0 0.0
    %732 = vmatprep.subr.mxu0 0.0
    %733 = vmatpush1.xpose.msra.mxu0 0.0
    %734 = vmatprep.subr.mxu0 0.0
    %735 = vmatpush1.xpose.msra.mxu0 0.0
    %736 = vmatprep.subr.mxu0 0.0
    %737 = vmatpush1.xpose.msra.mxu0 0.0
    %738 = vmatprep.subr.mxu0 0.0
    %739 = vmatpush1.xpose.msra.mxu0 0.0
    %740 = vmatprep.subr.mxu0 0.0
    %741 = vmatpush1.xpose.msra.mxu0 0.0
    %742 = vmatprep.subr.mxu0 0.0
    %743 = vmatpush1.xpose.msra.mxu0 0.0
    %744 = vmatprep.subr.mxu0 0.0
    %745 = vmatpush1.xpose.msra.mxu0 0.0
    %746 = vmatprep.subr.mxu0 0.0
    %747 = vmatpush1.xpose.msra.mxu0 0.0
    %748 = vmatprep.subr.mxu0 0.0
    %749 = vmatpush1.xpose.msra.mxu0 0.0
    %750 = vmatprep.subr.mxu0 0.0
    %751 = vmatpush1.xpose.msra.mxu0 0.0
    %752 = vmatprep.subr.mxu0 0.0
    %753 = vmatpush1.xpose.msra.mxu0 0.0
    %754 = vmatprep.subr.mxu0 0.0
    %755 = vmatpush1.xpose.msra.mxu0 0.0
    %756 = vmatprep.subr.mxu0 0.0
    %757 = vmatpush1.xpose.msra.mxu0 0.0
    %758 = vmatprep.subr.mxu0 0.0
    %759 = vmatpush1.xpose.msra.mxu0 0.0
    %760 = vmatprep.subr.mxu0 0.0
    %761 = vmatpush1.xpose.msra.mxu0 0.0
    %762 = vmatprep.subr.mxu0 0.0
    %763 = vmatpush1.xpose.msra.mxu0 0.0
    %764 = vmatprep.subr.mxu0 0.0
    %765 = vmatpush1.xpose.msra.mxu0 0.0
    %766 = vmatprep.subr.mxu0 0.0
    %767 = vmatpush1.xpose.msra.mxu0 0.0
    %768 = vmatprep.subr.mxu0 0.0
    %769 = vmatpush1.xpose.msra.mxu0 0.0
    %770 = vmatprep.mubr.f32.mxu0 0.0
    %771 = vmatmul.mubr.f32.gmra.mrb[0].mxu0 %v701
    %v772 = vpop.f32.mrb[0].mxu0
    %v773 = vadd.f32 0.0, %v772
    %v774 = vpop.f32.mrb[0].mxu0
    %775 = vdwg.mxu0
    %v777 = vsel %vm91, %v36, 0
    %v780 = vsel %vm91, %v68, 0
    %782 = vmatprep.subr.mxu0 0.0
    %783 = vmatpush1.xpose.msra.mxu0 %v780
    %784 = vmatprep.subr.mxu0 0.0
    %785 = vmatpush1.xpose.msra.mxu0 0.0
    %786 = vmatprep.subr.mxu0 0.0
    %787 = vmatpush1.xpose.msra.mxu0 0.0
    %788 = vmatprep.subr.mxu0 0.0
    %789 = vmatpush1.xpose.msra.mxu0 0.0
    %790 = vmatprep.subr.mxu0 0.0
    %791 = vmatpush1.xpose.msra.mxu0 0.0
    %792 = vmatprep.subr.mxu0 0.0
    %793 = vmatpush1.xpose.msra.mxu0 0.0
    %794 = vmatprep.subr.mxu0 0.0
    %795 = vmatpush1.xpose.msra.mxu0 0.0
    %796 = vmatprep.subr.mxu0 0.0
    %797 = vmatpush1.xpose.msra.mxu0 0.0
    %798 = vmatprep.subr.mxu0 0.0
    %799 = vmatpush1.xpose.msra.mxu0 0.0
    %800 = vmatprep.subr.mxu0 0.0
    %801 = vmatpush1.xpose.msra.mxu0 0.0
    %802 = vmatprep.subr.mxu0 0.0
    %803 = vmatpush1.xpose.msra.mxu0 0.0
    %804 = vmatprep.subr.mxu0 0.0
    %805 = vmatpush1.xpose.msra.mxu0 0.0
    %806 = vmatprep.subr.mxu0 0.0
    %807 = vmatpush1.xpose.msra.mxu0 0.0
    %808 = vmatprep.subr.mxu0 0.0
    %809 = vmatpush1.xpose.msra.mxu0 0.0
    %810 = vmatprep.subr.mxu0 0.0
    %811 = vmatpush1.xpose.msra.mxu0 0.0
    %812 = vmatprep.subr.mxu0 0.0
    %813 = vmatpush1.xpose.msra.mxu0 0.0
    %814 = vmatprep.subr.mxu0 0.0
    %815 = vmatpush1.xpose.msra.mxu0 0.0
    %816 = vmatprep.subr.mxu0 0.0
    %817 = vmatpush1.xpose.msra.mxu0 0.0
    %818 = vmatprep.subr.mxu0 0.0
    %819 = vmatpush1.xpose.msra.mxu0 0.0
    %820 = vmatprep.subr.mxu0 0.0
    %821 = vmatpush1.xpose.msra.mxu0 0.0
    %822 = vmatprep.subr.mxu0 0.0
    %823 = vmatpush1.xpose.msra.mxu0 0.0
    %824 = vmatprep.subr.mxu0 0.0
    %825 = vmatpush1.xpose.msra.mxu0 0.0
    %826 = vmatprep.subr.mxu0 0.0
    %827 = vmatpush1.xpose.msra.mxu0 0.0
    %828 = vmatprep.subr.mxu0 0.0
    %829 = vmatpush1.xpose.msra.mxu0 0.0
    %830 = vmatprep.subr.mxu0 0.0
    %831 = vmatpush1.xpose.msra.mxu0 0.0
    %832 = vmatprep.subr.mxu0 0.0
    %833 = vmatpush1.xpose.msra.mxu0 0.0
    %834 = vmatprep.subr.mxu0 0.0
    %835 = vmatpush1.xpose.msra.mxu0 0.0
    %836 = vmatprep.subr.mxu0 0.0
    %837 = vmatpush1.xpose.msra.mxu0 0.0
    %838 = vmatprep.subr.mxu0 0.0
    %839 = vmatpush1.xpose.msra.mxu0 0.0
    %840 = vmatprep.subr.mxu0 0.0
    %841 = vmatpush1.xpose.msra.mxu0 0.0
    %842 = vmatprep.subr.mxu0 0.0
    %843 = vmatpush1.xpose.msra.mxu0 0.0
    %844 = vmatprep.subr.mxu0 0.0
    %845 = vmatpush1.xpose.msra.mxu0 0.0
    %846 = vmatprep.mubr.f32.mxu0 0.0
    %847 = vmatmul.mubr.f32.gmra.mrb[0].mxu0 %v777
    %v848 = vpop.f32.mrb[0].mxu0
    %v849 = vadd.f32 0.0, %v848
    %v850 = vpop.f32.mrb[0].mxu0
    %851 = vdwg.mxu0
    %v853 = vsel %vm91, %v37, 0
    %v856 = vsel %vm91, %v69, 0
    %858 = vmatprep.subr.mxu0 0.0
    %859 = vmatpush1.xpose.msra.mxu0 %v856
    %860 = vmatprep.subr.mxu0 0.0
    %861 = vmatpush1.xpose.msra.mxu0 0.0
    %862 = vmatprep.subr.mxu0 0.0
    %863 = vmatpush1.xpose.msra.mxu0 0.0
    %864 = vmatprep.subr.mxu0 0.0
    %865 = vmatpush1.xpose.msra.mxu0 0.0
    %866 = vmatprep.subr.mxu0 0.0
    %867 = vmatpush1.xpose.msra.mxu0 0.0
    %868 = vmatprep.subr.mxu0 0.0
    %869 = vmatpush1.xpose.msra.mxu0 0.0
    %870 = vmatprep.subr.mxu0 0.0
    %871 = vmatpush1.xpose.msra.mxu0 0.0
    %872 = vmatprep.subr.mxu0 0.0
    %873 = vmatpush1.xpose.msra.mxu0 0.0
    %874 = vmatprep.subr.mxu0 0.0
    %875 = vmatpush1.xpose.msra.mxu0 0.0
    %876 = vmatprep.subr.mxu0 0.0
    %877 = vmatpush1.xpose.msra.mxu0 0.0
    %878 = vmatprep.subr.mxu0 0.0
    %879 = vmatpush1.xpose.msra.mxu0 0.0
    %880 = vmatprep.subr.mxu0 0.0
    %881 = vmatpush1.xpose.msra.mxu0 0.0
    %882 = vmatprep.subr.mxu0 0.0
    %883 = vmatpush1.xpose.msra.mxu0 0.0
    %884 = vmatprep.subr.mxu0 0.0
    %885 = vmatpush1.xpose.msra.mxu0 0.0
    %886 = vmatprep.subr.mxu0 0.0
    %887 = vmatpush1.xpose.msra.mxu0 0.0
    %888 = vmatprep.subr.mxu0 0.0
    %889 = vmatpush1.xpose.msra.mxu0 0.0
    %890 = vmatprep.subr.mxu0 0.0
    %891 = vmatpush1.xpose.msra.mxu0 0.0
    %892 = vmatprep.subr.mxu0 0.0
    %893 = vmatpush1.xpose.msra.mxu0 0.0
    %894 = vmatprep.subr.mxu0 0.0
    %895 = vmatpush1.xpose.msra.mxu0 0.0
    %896 = vmatprep.subr.mxu0 0.0
    %897 = vmatpush1.xpose.msra.mxu0 0.0
    %898 = vmatprep.subr.mxu0 0.0
    %899 = vmatpush1.xpose.msra.mxu0 0.0
    %900 = vmatprep.subr.mxu0 0.0
    %901 = vmatpush1.xpose.msra.mxu0 0.0
    %902 = vmatprep.subr.mxu0 0.0
    %903 = vmatpush1.xpose.msra.mxu0 0.0
    %904 = vmatprep.subr.mxu0 0.0
    %905 = vmatpush1.xpose.msra.mxu0 0.0
    %906 = vmatprep.subr.mxu0 0.0
    %907 = vmatpush1.xpose.msra.mxu0 0.0
    %908 = vmatprep.subr.mxu0 0.0
    %909 = vmatpush1.xpose.msra.mxu0 0.0
    %910 = vmatprep.subr.mxu0 0.0
    %911 = vmatpush1.xpose.msra.mxu0 0.0
    %912 = vmatprep.subr.mxu0 0.0
    %913 = vmatpush1.xpose.msra.mxu0 0.0
    %914 = vmatprep.subr.mxu0 0.0
    %915 = vmatpush1.xpose.msra.mxu0 0.0
    %916 = vmatprep.subr.mxu0 0.0
    %917 = vmatpush1.xpose.msra.mxu0 0.0
    %918 = vmatprep.subr.mxu0 0.0
    %919 = vmatpush1.xpose.msra.mxu0 0.0
    %920 = vmatprep.subr.mxu0 0.0
    %921 = vmatpush1.xpose.msra.mxu0 0.0
    %922 = vmatprep.mubr.f32.mxu0 0.0
    %923 = vmatmul.mubr.f32.gmra.mrb[0].mxu0 %v853
    %v924 = vpop.f32.mrb[0].mxu0
    %v925 = vadd.f32 0.0, %v924
    %v926 = vpop.f32.mrb[0].mxu0
    %927 = vdwg.mxu0
    %v929 = vsel %vm91, %v38, 0
    %v932 = vsel %vm91, %v70, 0
    %934 = vmatprep.subr.mxu0 0.0
    %935 = vmatpush1.xpose.msra.mxu0 %v932
    %936 = vmatprep.subr.mxu0 0.0
    %937 = vmatpush1.xpose.msra.mxu0 0.0
    %938 = vmatprep.subr.mxu0 0.0
    %939 = vmatpush1.xpose.msra.mxu0 0.0
    %940 = vmatprep.subr.mxu0 0.0
    %941 = vmatpush1.xpose.msra.mxu0 0.0
    %942 = vmatprep.subr.mxu0 0.0
    %943 = vmatpush1.xpose.msra.mxu0 0.0
    %944 = vmatprep.subr.mxu0 0.0
    %945 = vmatpush1.xpose.msra.mxu0 0.0
    %946 = vmatprep.subr.mxu0 0.0
    %947 = vmatpush1.xpose.msra.mxu0 0.0
    %948 = vmatprep.subr.mxu0 0.0
    %949 = vmatpush1.xpose.msra.mxu0 0.0
    %950 = vmatprep.subr.mxu0 0.0
    %951 = vmatpush1.xpose.msra.mxu0 0.0
    %952 = vmatprep.subr.mxu0 0.0
    %953 = vmatpush1.xpose.msra.mxu0 0.0
    %954 = vmatprep.subr.mxu0 0.0
    %955 = vmatpush1.xpose.msra.mxu0 0.0
    %956 = vmatprep.subr.mxu0 0.0
    %957 = vmatpush1.xpose.msra.mxu0 0.0
    %958 = vmatprep.subr.mxu0 0.0
    %959 = vmatpush1.xpose.msra.mxu0 0.0
    %960 = vmatprep.subr.mxu0 0.0
    %961 = vmatpush1.xpose.msra.mxu0 0.0
    %962 = vmatprep.subr.mxu0 0.0
    %963 = vmatpush1.xpose.msra.mxu0 0.0
    %964 = vmatprep.subr.mxu0 0.0
    %965 = vmatpush1.xpose.msra.mxu0 0.0
    %966 = vmatprep.subr.mxu0 0.0
    %967 = vmatpush1.xpose.msra.mxu0 0.0
    %968 = vmatprep.subr.mxu0 0.0
    %969 = vmatpush1.xpose.msra.mxu0 0.0
    %970 = vmatprep.subr.mxu0 0.0
    %971 = vmatpush1.xpose.msra.mxu0 0.0
    %972 = vmatprep.subr.mxu0 0.0
    %973 = vmatpush1.xpose.msra.mxu0 0.0
    %974 = vmatprep.subr.mxu0 0.0
    %975 = vmatpush1.xpose.msra.mxu0 0.0
    %976 = vmatprep.subr.mxu0 0.0
    %977 = vmatpush1.xpose.msra.mxu0 0.0
    %978 = vmatprep.subr.mxu0 0.0
    %979 = vmatpush1.xpose.msra.mxu0 0.0
    %980 = vmatprep.subr.mxu0 0.0
    %981 = vmatpush1.xpose.msra.mxu0 0.0
    %982 = vmatprep.subr.mxu0 0.0
    %983 = vmatpush1.xpose.msra.mxu0 0.0
    %984 = vmatprep.subr.mxu0 0.0
    %985 = vmatpush1.xpose.msra.mxu0 0.0
    %986 = vmatprep.subr.mxu0 0.0
    %987 = vmatpush1.xpose.msra.mxu0 0.0
    %988 = vmatprep.subr.mxu0 0.0
    %989 = vmatpush1.xpose.msra.mxu0 0.0
    %990 = vmatprep.subr.mxu0 0.0
    %991 = vmatpush1.xpose.msra.mxu0 0.0
    %992 = vmatprep.subr.mxu0 0.0
    %993 = vmatpush1.xpose.msra.mxu0 0.0
    %994 = vmatprep.subr.mxu0 0.0
    %995 = vmatpush1.xpose.msra.mxu0 0.0
    %996 = vmatprep.subr.mxu0 0.0
    %997 = vmatpush1.xpose.msra.mxu0 0.0
    %998 = vmatprep.mubr.f32.mxu0 0.0
    %999 = vmatmul.mubr.f32.gmra.mrb[0].mxu0 %v929
    %v1000 = vpop.f32.mrb[0].mxu0
    %v1001 = vadd.f32 0.0, %v1000
    %v1002 = vpop.f32.mrb[0].mxu0
    %1003 = vdwg.mxu0
    %v1005 = vsel %vm91, %v39, 0
    %v1008 = vsel %vm91, %v71, 0
    %1010 = vmatprep.subr.mxu0 0.0
    %1011 = vmatpush1.xpose.msra.mxu0 %v1008
    %1012 = vmatprep.subr.mxu0 0.0
    %1013 = vmatpush1.xpose.msra.mxu0 0.0
    %1014 = vmatprep.subr.mxu0 0.0
    %1015 = vmatpush1.xpose.msra.mxu0 0.0
    %1016 = vmatprep.subr.mxu0 0.0
    %1017 = vmatpush1.xpose.msra.mxu0 0.0
    %1018 = vmatprep.subr.mxu0 0.0
    %1019 = vmatpush1.xpose.msra.mxu0 0.0
    %1020 = vmatprep.subr.mxu0 0.0
    %1021 = vmatpush1.xpose.msra.mxu0 0.0
    %1022 = vmatprep.subr.mxu0 0.0
    %1023 = vmatpush1.xpose.msra.mxu0 0.0
    %1024 = vmatprep.subr.mxu0 0.0
    %1025 = vmatpush1.xpose.msra.mxu0 0.0
    %1026 = vmatprep.subr.mxu0 0.0
    %1027 = vmatpush1.xpose.msra.mxu0 0.0
    %1028 = vmatprep.subr.mxu0 0.0
    %1029 = vmatpush1.xpose.msra.mxu0 0.0
    %1030 = vmatprep.subr.mxu0 0.0
    %1031 = vmatpush1.xpose.msra.mxu0 0.0
    %1032 = vmatprep.subr.mxu0 0.0
    %1033 = vmatpush1.xpose.msra.mxu0 0.0
    %1034 = vmatprep.subr.mxu0 0.0
    %1035 = vmatpush1.xpose.msra.mxu0 0.0
    %1036 = vmatprep.subr.mxu0 0.0
    %1037 = vmatpush1.xpose.msra.mxu0 0.0
    %1038 = vmatprep.subr.mxu0 0.0
    %1039 = vmatpush1.xpose.msra.mxu0 0.0
    %1040 = vmatprep.subr.mxu0 0.0
    %1041 = vmatpush1.xpose.msra.mxu0 0.0
    %1042 = vmatprep.subr.mxu0 0.0
    %1043 = vmatpush1.xpose.msra.mxu0 0.0
    %1044 = vmatprep.subr.mxu0 0.0
    %1045 = vmatpush1.xpose.msra.mxu0 0.0
    %1046 = vmatprep.subr.mxu0 0.0
    %1047 = vmatpush1.xpose.msra.mxu0 0.0
    %1048 = vmatprep.subr.mxu0 0.0
    %1049 = vmatpush1.xpose.msra.mxu0 0.0
    %1050 = vmatprep.subr.mxu0 0.0
    %1051 = vmatpush1.xpose.msra.mxu0 0.0
    %1052 = vmatprep.subr.mxu0 0.0
    %1053 = vmatpush1.xpose.msra.mxu0 0.0
    %1054 = vmatprep.subr.mxu0 0.0
    %1055 = vmatpush1.xpose.msra.mxu0 0.0
    %1056 = vmatprep.subr.mxu0 0.0
    %1057 = vmatpush1.xpose.msra.mxu0 0.0
    %1058 = vmatprep.subr.mxu0 0.0
    %1059 = vmatpush1.xpose.msra.mxu0 0.0
    %1060 = vmatprep.subr.mxu0 0.0
    %1061 = vmatpush1.xpose.msra.mxu0 0.0
    %1062 = vmatprep.subr.mxu0 0.0
    %1063 = vmatpush1.xpose.msra.mxu0 0.0
    %1064 = vmatprep.subr.mxu0 0.0
    %1065 = vmatpush1.xpose.msra.mxu0 0.0
    %1066 = vmatprep.subr.mxu0 0.0
    %1067 = vmatpush1.xpose.msra.mxu0 0.0
    %1068 = vmatprep.subr.mxu0 0.0
    %1069 = vmatpush1.xpose.msra.mxu0 0.0
    %1070 = vmatprep.subr.mxu0 0.0
    %1071 = vmatpush1.xpose.msra.mxu0 0.0
    %1072 = vmatprep.subr.mxu0 0.0
    %1073 = vmatpush1.xpose.msra.mxu0 0.0
    %1074 = vmatprep.mubr.f32.mxu0 0.0
    %1075 = vmatmul.mubr.f32.gmra.mrb[0].mxu0 %v1005
    %v1076 = vpop.f32.mrb[0].mxu0
    %v1077 = vadd.f32 0.0, %v1076
    %v1078 = vpop.f32.mrb[0].mxu0
    %1079 = vdwg.mxu0
    %v1081 = vsel %vm91, %v40, 0
    %v1084 = vsel %vm91, %v72, 0
    %1086 = vmatprep.subr.mxu0 0.0
    %1087 = vmatpush1.xpose.msra.mxu0 %v1084
    %1088 = vmatprep.subr.mxu0 0.0
    %1089 = vmatpush1.xpose.msra.mxu0 0.0
    %1090 = vmatprep.subr.mxu0 0.0
    %1091 = vmatpush1.xpose.msra.mxu0 0.0
    %1092 = vmatprep.subr.mxu0 0.0
    %1093 = vmatpush1.xpose.msra.mxu0 0.0
    %1094 = vmatprep.subr.mxu0 0.0
    %1095 = vmatpush1.xpose.msra.mxu0 0.0
    %1096 = vmatprep.subr.mxu0 0.0
    %1097 = vmatpush1.xpose.msra.mxu0 0.0
    %1098 = vmatprep.subr.mxu0 0.0
    %1099 = vmatpush1.xpose.msra.mxu0 0.0
    %1100 = vmatprep.subr.mxu0 0.0
    %1101 = vmatpush1.xpose.msra.mxu0 0.0
    %1102 = vmatprep.subr.mxu0 0.0
    %1103 = vmatpush1.xpose.msra.mxu0 0.0
    %1104 = vmatprep.subr.mxu0 0.0
    %1105 = vmatpush1.xpose.msra.mxu0 0.0
    %1106 = vmatprep.subr.mxu0 0.0
    %1107 = vmatpush1.xpose.msra.mxu0 0.0
    %1108 = vmatprep.subr.mxu0 0.0
    %1109 = vmatpush1.xpose.msra.mxu0 0.0
    %1110 = vmatprep.subr.mxu0 0.0
    %1111 = vmatpush1.xpose.msra.mxu0 0.0
    %1112 = vmatprep.subr.mxu0 0.0
    %1113 = vmatpush1.xpose.msra.mxu0 0.0
    %1114 = vmatprep.subr.mxu0 0.0
    %1115 = vmatpush1.xpose.msra.mxu0 0.0
    %1116 = vmatprep.subr.mxu0 0.0
    %1117 = vmatpush1.xpose.msra.mxu0 0.0
    %1118 = vmatprep.subr.mxu0 0.0
    %1119 = vmatpush1.xpose.msra.mxu0 0.0
    %1120 = vmatprep.subr.mxu0 0.0
    %1121 = vmatpush1.xpose.msra.mxu0 0.0
    %1122 = vmatprep.subr.mxu0 0.0
    %1123 = vmatpush1.xpose.msra.mxu0 0.0
    %1124 = vmatprep.subr.mxu0 0.0
    %1125 = vmatpush1.xpose.msra.mxu0 0.0
    %1126 = vmatprep.subr.mxu0 0.0
    %1127 = vmatpush1.xpose.msra.mxu0 0.0
    %1128 = vmatprep.subr.mxu0 0.0
    %1129 = vmatpush1.xpose.msra.mxu0 0.0
    %1130 = vmatprep.subr.mxu0 0.0
    %1131 = vmatpush1.xpose.msra.mxu0 0.0
    %1132 = vmatprep.subr.mxu0 0.0
    %1133 = vmatpush1.xpose.msra.mxu0 0.0
    %1134 = vmatprep.subr.mxu0 0.0
    %1135 = vmatpush1.xpose.msra.mxu0 0.0
    %1136 = vmatprep.subr.mxu0 0.0
    %1137 = vmatpush1.xpose.msra.mxu0 0.0
    %1138 = vmatprep.subr.mxu0 0.0
    %1139 = vmatpush1.xpose.msra.mxu0 0.0
    %1140 = vmatprep.subr.mxu0 0.0
    %1141 = vmatpush1.xpose.msra.mxu0 0.0
    %1142 = vmatprep.subr.mxu0 0.0
    %1143 = vmatpush1.xpose.msra.mxu0 0.0
    %1144 = vmatprep.subr.mxu0 0.0
    %1145 = vmatpush1.xpose.msra.mxu0 0.0
    %1146 = vmatprep.subr.mxu0 0.0
    %1147 = vmatpush1.xpose.msra.mxu0 0.0
    %1148 = vmatprep.subr.mxu0 0.0
    %1149 = vmatpush1.xpose.msra.mxu0 0.0
    %1150 = vmatprep.mubr.f32.mxu0 0.0
    %1151 = vmatmul.mubr.f32.gmra.mrb[0].mxu0 %v1081
    %v1152 = vpop.f32.mrb[0].mxu0
    %v1153 = vadd.f32 0.0, %v1152
    %v1154 = vpop.f32.mrb[0].mxu0
    %1155 = vdwg.mxu0
    %v1157 = vsel %vm91, %v41, 0
    %v1160 = vsel %vm91, %v73, 0
    %1162 = vmatprep.subr.mxu0 0.0
    %1163 = vmatpush1.xpose.msra.mxu0 %v1160
    %1164 = vmatprep.subr.mxu0 0.0
    %1165 = vmatpush1.xpose.msra.mxu0 0.0
    %1166 = vmatprep.subr.mxu0 0.0
    %1167 = vmatpush1.xpose.msra.mxu0 0.0
    %1168 = vmatprep.subr.mxu0 0.0
    %1169 = vmatpush1.xpose.msra.mxu0 0.0
    %1170 = vmatprep.subr.mxu0 0.0
    %1171 = vmatpush1.xpose.msra.mxu0 0.0
    %1172 = vmatprep.subr.mxu0 0.0
    %1173 = vmatpush1.xpose.msra.mxu0 0.0
    %1174 = vmatprep.subr.mxu0 0.0
    %1175 = vmatpush1.xpose.msra.mxu0 0.0
    %1176 = vmatprep.subr.mxu0 0.0
    %1177 = vmatpush1.xpose.msra.mxu0 0.0
    %1178 = vmatprep.subr.mxu0 0.0
    %1179 = vmatpush1.xpose.msra.mxu0 0.0
    %1180 = vmatprep.subr.mxu0 0.0
    %1181 = vmatpush1.xpose.msra.mxu0 0.0
    %1182 = vmatprep.subr.mxu0 0.0
    %1183 = vmatpush1.xpose.msra.mxu0 0.0
    %1184 = vmatprep.subr.mxu0 0.0
    %1185 = vmatpush1.xpose.msra.mxu0 0.0
    %1186 = vmatprep.subr.mxu0 0.0
    %1187 = vmatpush1.xpose.msra.mxu0 0.0
    %1188 = vmatprep.subr.mxu0 0.0
    %1189 = vmatpush1.xpose.msra.mxu0 0.0
    %1190 = vmatprep.subr.mxu0 0.0
    %1191 = vmatpush1.xpose.msra.mxu0 0.0
    %1192 = vmatprep.subr.mxu0 0.0
    %1193 = vmatpush1.xpose.msra.mxu0 0.0
    %1194 = vmatprep.subr.mxu0 0.0
    %1195 = vmatpush1.xpose.msra.mxu0 0.0
    %1196 = vmatprep.subr.mxu0 0.0
    %1197 = vmatpush1.xpose.msra.mxu0 0.0
    %1198 = vmatprep.subr.mxu0 0.0
    %1199 = vmatpush1.xpose.msra.mxu0 0.0
    %1200 = vmatprep.subr.mxu0 0.0
    %1201 = vmatpush1.xpose.msra.mxu0 0.0
    %1202 = vmatprep.subr.mxu0 0.0
    %1203 = vmatpush1.xpose.msra.mxu0 0.0
    %1204 = vmatprep.subr.mxu0 0.0
    %1205 = vmatpush1.xpose.msra.mxu0 0.0
    %1206 = vmatprep.subr.mxu0 0.0
    %1207 = vmatpush1.xpose.msra.mxu0 0.0
    %1208 = vmatprep.subr.mxu0 0.0
    %1209 = vmatpush1.xpose.msra.mxu0 0.0
    %1210 = vmatprep.subr.mxu0 0.0
    %1211 = vmatpush1.xpose.msra.mxu0 0.0
    %1212 = vmatprep.subr.mxu0 0.0
    %1213 = vmatpush1.xpose.msra.mxu0 0.0
    %1214 = vmatprep.subr.mxu0 0.0
    %1215 = vmatpush1.xpose.msra.mxu0 0.0
    %1216 = vmatprep.subr.mxu0 0.0
    %1217 = vmatpush1.xpose.msra.mxu0 0.0
    %1218 = vmatprep.subr.mxu0 0.0
    %1219 = vmatpush1.xpose.msra.mxu0 0.0
    %1220 = vmatprep.subr.mxu0 0.0
    %1221 = vmatpush1.xpose.msra.mxu0 0.0
    %1222 = vmatprep.subr.mxu0 0.0
    %1223 = vmatpush1.xpose.msra.mxu0 0.0
    %1224 = vmatprep.subr.mxu0 0.0
    %1225 = vmatpush1.xpose.msra.mxu0 0.0
    %1226 = vmatprep.mubr.f32.mxu0 0.0
    %1227 = vmatmul.mubr.f32.gmra.mrb[0].mxu0 %v1157
    %v1228 = vpop.f32.mrb[0].mxu0
    %v1229 = vadd.f32 0.0, %v1228
    %v1230 = vpop.f32.mrb[0].mxu0
    %1231 = vdwg.mxu0
    %v1233 = vsel %vm91, %v42, 0
    %v1236 = vsel %vm91, %v74, 0
    %1238 = vmatprep.subr.mxu0 0.0
    %1239 = vmatpush1.xpose.msra.mxu0 %v1236
    %1240 = vmatprep.subr.mxu0 0.0
    %1241 = vmatpush1.xpose.msra.mxu0 0.0
    %1242 = vmatprep.subr.mxu0 0.0
    %1243 = vmatpush1.xpose.msra.mxu0 0.0
    %1244 = vmatprep.subr.mxu0 0.0
    %1245 = vmatpush1.xpose.msra.mxu0 0.0
    %1246 = vmatprep.subr.mxu0 0.0
    %1247 = vmatpush1.xpose.msra.mxu0 0.0
    %1248 = vmatprep.subr.mxu0 0.0
    %1249 = vmatpush1.xpose.msra.mxu0 0.0
    %1250 = vmatprep.subr.mxu0 0.0
    %1251 = vmatpush1.xpose.msra.mxu0 0.0
    %1252 = vmatprep.subr.mxu0 0.0
    %1253 = vmatpush1.xpose.msra.mxu0 0.0
    %1254 = vmatprep.subr.mxu0 0.0
    %1255 = vmatpush1.xpose.msra.mxu0 0.0
    %1256 = vmatprep.subr.mxu0 0.0
    %1257 = vmatpush1.xpose.msra.mxu0 0.0
    %1258 = vmatprep.subr.mxu0 0.0
    %1259 = vmatpush1.xpose.msra.mxu0 0.0
    %1260 = vmatprep.subr.mxu0 0.0
    %1261 = vmatpush1.xpose.msra.mxu0 0.0
    %1262 = vmatprep.subr.mxu0 0.0
    %1263 = vmatpush1.xpose.msra.mxu0 0.0
    %1264 = vmatprep.subr.mxu0 0.0
    %1265 = vmatpush1.xpose.msra.mxu0 0.0
    %1266 = vmatprep.subr.mxu0 0.0
    %1267 = vmatpush1.xpose.msra.mxu0 0.0
    %1268 = vmatprep.subr.mxu0 0.0
    %1269 = vmatpush1.xpose.msra.mxu0 0.0
    %1270 = vmatprep.subr.mxu0 0.0
    %1271 = vmatpush1.xpose.msra.mxu0 0.0
    %1272 = vmatprep.subr.mxu0 0.0
    %1273 = vmatpush1.xpose.msra.mxu0 0.0
    %1274 = vmatprep.subr.mxu0 0.0
    %1275 = vmatpush1.xpose.msra.mxu0 0.0
    %1276 = vmatprep.subr.mxu0 0.0
    %1277 = vmatpush1.xpose.msra.mxu0 0.0
    %1278 = vmatprep.subr.mxu0 0.0
    %1279 = vmatpush1.xpose.msra.mxu0 0.0
    %1280 = vmatprep.subr.mxu0 0.0
    %1281 = vmatpush1.xpose.msra.mxu0 0.0
    %1282 = vmatprep.subr.mxu0 0.0
    %1283 = vmatpush1.xpose.msra.mxu0 0.0
    %1284 = vmatprep.subr.mxu0 0.0
    %1285 = vmatpush1.xpose.msra.mxu0 0.0
    %1286 = vmatprep.subr.mxu0 0.0
    %1287 = vmatpush1.xpose.msra.mxu0 0.0
    %1288 = vmatprep.subr.mxu0 0.0
    %1289 = vmatpush1.xpose.msra.mxu0 0.0
    %1290 = vmatprep.subr.mxu0 0.0
    %1291 = vmatpush1.xpose.msra.mxu0 0.0
    %1292 = vmatprep.subr.mxu0 0.0
    %1293 = vmatpush1.xpose.msra.mxu0 0.0
    %1294 = vmatprep.subr.mxu0 0.0
    %1295 = vmatpush1.xpose.msra.mxu0 0.0
    %1296 = vmatprep.subr.mxu0 0.0
    %1297 = vmatpush1.xpose.msra.mxu0 0.0
    %1298 = vmatprep.subr.mxu0 0.0
    %1299 = vmatpush1.xpose.msra.mxu0 0.0
    %1300 = vmatprep.subr.mxu0 0.0
    %1301 = vmatpush1.xpose.msra.mxu0 0.0
    %1302 = vmatprep.mubr.f32.mxu0 0.0
    %1303 = vmatmul.mubr.f32.gmra.mrb[0].mxu0 %v1233
    %v1304 = vpop.f32.mrb[0].mxu0
    %v1305 = vadd.f32 0.0, %v1304
    %v1306 = vpop.f32.mrb[0].mxu0
    %1307 = vdwg.mxu0
    %vm1308 = vcmask 64512
    %v1309 = vsel %vm1308, %v165, -inf
    %1310 = vmax.xlane.f32.xlu0 %v1309
    %v1311 = vpop.xlane.xlu0 %1310
    %v1312 = vsel %vm1308, %v241, -inf
    %1313 = vmax.xlane.f32.xlu0 %v1312
    %v1314 = vpop.xlane.xlu0 %1313
    %v1315 = vsel %vm1308, %v317, -inf
    %1316 = vmax.xlane.f32.xlu0 %v1315
    %v1317 = vpop.xlane.xlu0 %1316
    %v1318 = vsel %vm1308, %v393, -inf
    %1319 = vmax.xlane.f32.xlu0 %v1318
    %v1320 = vpop.xlane.xlu0 %1319
    %v1321 = vsel %vm1308, %v469, -inf
    %1322 = vmax.xlane.f32.xlu0 %v1321
    %v1323 = vpop.xlane.xlu0 %1322
    %v1324 = vsel %vm1308, %v545, -inf
    %1325 = vmax.xlane.f32.xlu0 %v1324
    %v1326 = vpop.xlane.xlu0 %1325
    %v1327 = vsel %vm1308, %v621, -inf
    %1328 = vmax.xlane.f32.xlu0 %v1327
    %v1329 = vpop.xlane.xlu0 %1328
    %v1330 = vsel %vm1308, %v697, -inf
    %1331 = vmax.xlane.f32.xlu0 %v1330
    %v1332 = vpop.xlane.xlu0 %1331
    %v1333 = vsel %vm1308, %v773, -inf
    %1334 = vmax.xlane.f32.xlu0 %v1333
    %v1335 = vpop.xlane.xlu0 %1334
    %v1336 = vsel %vm1308, %v849, -inf
    %1337 = vmax.xlane.f32.xlu0 %v1336
    %v1338 = vpop.xlane.xlu0 %1337
    %v1339 = vsel %vm1308, %v925, -inf
    %1340 = vmax.xlane.f32.xlu0 %v1339
    %v1341 = vpop.xlane.xlu0 %1340
    %v1342 = vsel %vm1308, %v1001, -inf
    %1343 = vmax.xlane.f32.xlu0 %v1342
    %v1344 = vpop.xlane.xlu0 %1343
    %v1345 = vsel %vm1308, %v1077, -inf
    %1346 = vmax.xlane.f32.xlu0 %v1345
    %v1347 = vpop.xlane.xlu0 %1346
    %v1348 = vsel %vm1308, %v1153, -inf
    %1349 = vmax.xlane.f32.xlu0 %v1348
    %v1350 = vpop.xlane.xlu0 %1349
    %v1351 = vsel %vm1308, %v1229, -inf
    %1352 = vmax.xlane.f32.xlu0 %v1351
    %v1353 = vpop.xlane.xlu0 %1352
    %v1354 = vsel %vm1308, %v1305, -inf
    %1355 = vmax.xlane.f32.xlu0 %v1354
    %v1356 = vpop.xlane.xlu0 %1355
    %v1357 = vsub.f32 %v165, %v1311
    %v1358 = vsub.f32 %v241, %v1314
    %v1359 = vsub.f32 %v317, %v1317
    %v1360 = vsub.f32 %v393, %v1320
    %v1361 = vsub.f32 %v469, %v1323
    %v1362 = vsub.f32 %v545, %v1326
    %v1363 = vsub.f32 %v621, %v1329
    %v1364 = vsub.f32 %v697, %v1332
    %v1365 = vsub.f32 %v773, %v1335
    %v1366 = vsub.f32 %v849, %v1338
    %v1367 = vsub.f32 %v925, %v1341
    %v1368 = vsub.f32 %v1001, %v1344
    %v1369 = vsub.f32 %v1077, %v1347
    %v1370 = vsub.f32 %v1153, %v1350
    %v1371 = vsub.f32 %v1229, %v1353
    %v1372 = vsub.f32 %v1305, %v1356
    %v1373 = vmul.f32 %v1357, 1.442695
    %v1374 = vpow.pop %v1373
    %v1375 = vmul.f32 %v1358, 1.442695
    %v1376 = vpow.pop %v1375
    %v1377 = vmul.f32 %v1359, 1.442695
    %v1378 = vpow.pop %v1377
    %v1379 = vmul.f32 %v1360, 1.442695
    %v1380 = vpow.pop %v1379
    %v1381 = vmul.f32 %v1361, 1.442695
    %v1382 = vpow.pop %v1381
    %v1383 = vmul.f32 %v1362, 1.442695
    %v1384 = vpow.pop %v1383
    %v1385 = vmul.f32 %v1363, 1.442695
    %v1386 = vpow.pop %v1385
    %v1387 = vmul.f32 %v1364, 1.442695
    %v1388 = vpow.pop %v1387
    %v1389 = vmul.f32 %v1365, 1.442695
    %v1390 = vpow.pop %v1389
    %v1391 = vmul.f32 %v1366, 1.442695
    %v1392 = vpow.pop %v1391
    %v1393 = vmul.f32 %v1367, 1.442695
    %v1394 = vpow.pop %v1393
    %v1395 = vmul.f32 %v1368, 1.442695
    %v1396 = vpow.pop %v1395
    %v1397 = vmul.f32 %v1369, 1.442695
    %v1398 = vpow.pop %v1397
    %v1399 = vmul.f32 %v1370, 1.442695
    %v1400 = vpow.pop %v1399
    %v1401 = vmul.f32 %v1371, 1.442695
    %v1402 = vpow.pop %v1401
    %v1403 = vmul.f32 %v1372, 1.442695
    %v1404 = vpow.pop %v1403
    %v1405 = vsel %vm1308, %v1374, 0.0
    %1406 = vadd.xlane.f32.xlu0 %v1405
    %v1407 = vpop.xlane.xlu0 %1406
    %v1408 = vsel %vm1308, %v1376, 0.0
    %1409 = vadd.xlane.f32.xlu0 %v1408
    %v1410 = vpop.xlane.xlu0 %1409
    %v1411 = vsel %vm1308, %v1378, 0.0
    %1412 = vadd.xlane.f32.xlu0 %v1411
    %v1413 = vpop.xlane.xlu0 %1412
    %v1414 = vsel %vm1308, %v1380, 0.0
    %1415 = vadd.xlane.f32.xlu0 %v1414
    %v1416 = vpop.xlane.xlu0 %1415
    %v1417 = vsel %vm1308, %v1382, 0.0
    %1418 = vadd.xlane.f32.xlu0 %v1417
    %v1419 = vpop.xlane.xlu0 %1418
    %v1420 = vsel %vm1308, %v1384, 0.0
    %1421 = vadd.xlane.f32.xlu0 %v1420
    %v1422 = vpop.xlane.xlu0 %1421
    %v1423 = vsel %vm1308, %v1386, 0.0
    %1424 = vadd.xlane.f32.xlu0 %v1423
    %v1425 = vpop.xlane.xlu0 %1424
    %v1426 = vsel %vm1308, %v1388, 0.0
    %1427 = vadd.xlane.f32.xlu0 %v1426
    %v1428 = vpop.xlane.xlu0 %1427
    %v1429 = vsel %vm1308, %v1390, 0.0
    %1430 = vadd.xlane.f32.xlu0 %v1429
    %v1431 = vpop.xlane.xlu0 %1430
    %v1432 = vsel %vm1308, %v1392, 0.0
    %1433 = vadd.xlane.f32.xlu0 %v1432
    %v1434 = vpop.xlane.xlu0 %1433
    %v1435 = vsel %vm1308, %v1394, 0.0
    %1436 = vadd.xlane.f32.xlu0 %v1435
    %v1437 = vpop.xlane.xlu0 %1436
    %v1438 = vsel %vm1308, %v1396, 0.0
    %1439 = vadd.xlane.f32.xlu0 %v1438
    %v1440 = vpop.xlane.xlu0 %1439
    %v1441 = vsel %vm1308, %v1398, 0.0
    %1442 = vadd.xlane.f32.xlu0 %v1441
    %v1443 = vpop.xlane.xlu0 %1442
    %v1444 = vsel %vm1308, %v1400, 0.0
    %1445 = vadd.xlane.f32.xlu0 %v1444
    %v1446 = vpop.xlane.xlu0 %1445
    %v1447 = vsel %vm1308, %v1402, 0.0
    %1448 = vadd.xlane.f32.xlu0 %v1447
    %v1449 = vpop.xlane.xlu0 %1448
    %v1450 = vsel %vm1308, %v1404, 0.0
    %1451 = vadd.xlane.f32.xlu0 %v1450
    %v1452 = vpop.xlane.xlu0 %1451
    %v1454 = vsel %vm1308, %v1374, 0
    %1456 = vmatprep.subr.mxu0 0.0
    %1457 = vmatpush1.msra.mxu0 %v75
    %1458 = vmatprep.subr.mxu0 0.0
    %1459 = vmatpush1.msra.mxu0 0.0
    %1460 = vmatprep.subr.mxu0 0.0
    %1461 = vmatpush1.msra.mxu0 0.0
    %1462 = vmatprep.subr.mxu0 0.0
    %1463 = vmatpush1.msra.mxu0 0.0
    %1464 = vmatprep.subr.mxu0 0.0
    %1465 = vmatpush1.msra.mxu0 0.0
    %1466 = vmatprep.subr.mxu0 0.0
    %1467 = vmatpush1.msra.mxu0 0.0
    %1468 = vmatprep.subr.mxu0 0.0
    %1469 = vmatpush1.msra.mxu0 0.0
    %1470 = vmatprep.subr.mxu0 0.0
    %1471 = vmatpush1.msra.mxu0 0.0
    %1472 = vmatprep.subr.mxu0 0.0
    %1473 = vmatpush1.msra.mxu0 0.0
    %1474 = vmatprep.subr.mxu0 0.0
    %1475 = vmatpush1.msra.mxu0 0.0
    %1476 = vmatprep.subr.mxu0 0.0
    %1477 = vmatpush1.msra.mxu0 0.0
    %1478 = vmatprep.subr.mxu0 0.0
    %1479 = vmatpush1.msra.mxu0 0.0
    %1480 = vmatprep.subr.mxu0 0.0
    %1481 = vmatpush1.msra.mxu0 0.0
    %1482 = vmatprep.subr.mxu0 0.0
    %1483 = vmatpush1.msra.mxu0 0.0
    %1484 = vmatprep.subr.mxu0 0.0
    %1485 = vmatpush1.msra.mxu0 0.0
    %1486 = vmatprep.subr.mxu0 0.0
    %1487 = vmatpush1.msra.mxu0 0.0
    %1488 = vmatprep.subr.mxu0 0.0
    %1489 = vmatpush1.msra.mxu0 0.0
    %1490 = vmatprep.subr.mxu0 0.0
    %1491 = vmatpush1.msra.mxu0 0.0
    %1492 = vmatprep.subr.mxu0 0.0
    %1493 = vmatpush1.msra.mxu0 0.0
    %1494 = vmatprep.subr.mxu0 0.0
    %1495 = vmatpush1.msra.mxu0 0.0
    %1496 = vmatprep.subr.mxu0 0.0
    %1497 = vmatpush1.msra.mxu0 0.0
    %1498 = vmatprep.subr.mxu0 0.0
    %1499 = vmatpush1.msra.mxu0 0.0
    %1500 = vmatprep.subr.mxu0 0.0
    %1501 = vmatpush1.msra.mxu0 0.0
    %1502 = vmatprep.subr.mxu0 0.0
    %1503 = vmatpush1.msra.mxu0 0.0
    %1504 = vmatprep.subr.mxu0 0.0
    %1505 = vmatpush1.msra.mxu0 0.0
    %1506 = vmatprep.subr.mxu0 0.0
    %1507 = vmatpush1.msra.mxu0 0.0
    %1508 = vmatprep.subr.mxu0 0.0
    %1509 = vmatpush1.msra.mxu0 0.0
    %1510 = vmatprep.subr.mxu0 0.0
    %1511 = vmatpush1.msra.mxu0 0.0
    %1512 = vmatprep.subr.mxu0 0.0
    %1513 = vmatpush1.msra.mxu0 0.0
    %1514 = vmatprep.subr.mxu0 0.0
    %1515 = vmatpush1.msra.mxu0 0.0
    %1516 = vmatprep.subr.mxu0 0.0
    %1517 = vmatpush1.msra.mxu0 0.0
    %1518 = vmatprep.subr.mxu0 0.0
    %1519 = vmatpush1.msra.mxu0 0.0
    %1520 = vmatprep.mubr.f32.mxu0 0.0
    %1521 = vmatmul.mubr.f32.gmra.mrb[0].mxu0 %v1454
    %v1522 = vpop.f32.mrb[0].mxu0
    %v1523 = vadd.f32 0.0, %v1522
    %v1524 = vpop.f32.mrb[0].mxu0
    %1525 = vdwg.mxu0
    %v1527 = vsel %vm1308, %v1376, 0
    %1529 = vmatprep.subr.mxu0 0.0
    %1530 = vmatpush1.msra.mxu0 %v76
    %1531 = vmatprep.subr.mxu0 0.0
    %1532 = vmatpush1.msra.mxu0 0.0
    %1533 = vmatprep.subr.mxu0 0.0
    %1534 = vmatpush1.msra.mxu0 0.0
    %1535 = vmatprep.subr.mxu0 0.0
    %1536 = vmatpush1.msra.mxu0 0.0
    %1537 = vmatprep.subr.mxu0 0.0
    %1538 = vmatpush1.msra.mxu0 0.0
    %1539 = vmatprep.subr.mxu0 0.0
    %1540 = vmatpush1.msra.mxu0 0.0
    %1541 = vmatprep.subr.mxu0 0.0
    %1542 = vmatpush1.msra.mxu0 0.0
    %1543 = vmatprep.subr.mxu0 0.0
    %1544 = vmatpush1.msra.mxu0 0.0
    %1545 = vmatprep.subr.mxu0 0.0
    %1546 = vmatpush1.msra.mxu0 0.0
    %1547 = vmatprep.subr.mxu0 0.0
    %1548 = vmatpush1.msra.mxu0 0.0
    %1549 = vmatprep.subr.mxu0 0.0
    %1550 = vmatpush1.msra.mxu0 0.0
    %1551 = vmatprep.subr.mxu0 0.0
    %1552 = vmatpush1.msra.mxu0 0.0
    %1553 = vmatprep.subr.mxu0 0.0
    %1554 = vmatpush1.msra.mxu0 0.0
    %1555 = vmatprep.subr.mxu0 0.0
    %1556 = vmatpush1.msra.mxu0 0.0
    %1557 = vmatprep.subr.mxu0 0.0
    %1558 = vmatpush1.msra.mxu0 0.0
    %1559 = vmatprep.subr.mxu0 0.0
    %1560 = vmatpush1.msra.mxu0 0.0
    %1561 = vmatprep.subr.mxu0 0.0
    %1562 = vmatpush1.msra.mxu0 0.0
    %1563 = vmatprep.subr.mxu0 0.0
    %1564 = vmatpush1.msra.mxu0 0.0
    %1565 = vmatprep.subr.mxu0 0.0
    %1566 = vmatpush1.msra.mxu0 0.0
    %1567 = vmatprep.subr.mxu0 0.0
    %1568 = vmatpush1.msra.mxu0 0.0
    %1569 = vmatprep.subr.mxu0 0.0
    %1570 = vmatpush1.msra.mxu0 0.0
    %1571 = vmatprep.subr.mxu0 0.0
    %1572 = vmatpush1.msra.mxu0 0.0
    %1573 = vmatprep.subr.mxu0 0.0
    %1574 = vmatpush1.msra.mxu0 0.0
    %1575 = vmatprep.subr.mxu0 0.0
    %1576 = vmatpush1.msra.mxu0 0.0
    %1577 = vmatprep.subr.mxu0 0.0
    %1578 = vmatpush1.msra.mxu0 0.0
    %1579 = vmatprep.subr.mxu0 0.0
    %1580 = vmatpush1.msra.mxu0 0.0
    %1581 = vmatprep.subr.mxu0 0.0
    %1582 = vmatpush1.msra.mxu0 0.0
    %1583 = vmatprep.subr.mxu0 0.0
    %1584 = vmatpush1.msra.mxu0 0.0
    %1585 = vmatprep.subr.mxu0 0.0
    %1586 = vmatpush1.msra.mxu0 0.0
    %1587 = vmatprep.subr.mxu0 0.0
    %1588 = vmatpush1.msra.mxu0 0.0
    %1589 = vmatprep.subr.mxu0 0.0
    %1590 = vmatpush1.msra.mxu0 0.0
    %1591 = vmatprep.subr.mxu0 0.0
    %1592 = vmatpush1.msra.mxu0 0.0
    %1593 = vmatprep.mubr.f32.mxu0 0.0
    %1594 = vmatmul.mubr.f32.gmra.mrb[0].mxu0 %v1527
    %v1595 = vpop.f32.mrb[0].mxu0
    %v1596 = vadd.f32 0.0, %v1595
    %v1597 = vpop.f32.mrb[0].mxu0
    %1598 = vdwg.mxu0
    %v1600 = vsel %vm1308, %v1378, 0
    %1602 = vmatprep.subr.mxu0 0.0
    %1603 = vmatpush1.msra.mxu0 %v77
    %1604 = vmatprep.subr.mxu0 0.0
    %1605 = vmatpush1.msra.mxu0 0.0
    %1606 = vmatprep.subr.mxu0 0.0
    %1607 = vmatpush1.msra.mxu0 0.0
    %1608 = vmatprep.subr.mxu0 0.0
    %1609 = vmatpush1.msra.mxu0 0.0
    %1610 = vmatprep.subr.mxu0 0.0
    %1611 = vmatpush1.msra.mxu0 0.0
    %1612 = vmatprep.subr.mxu0 0.0
    %1613 = vmatpush1.msra.mxu0 0.0
    %1614 = vmatprep.subr.mxu0 0.0
    %1615 = vmatpush1.msra.mxu0 0.0
    %1616 = vmatprep.subr.mxu0 0.0
    %1617 = vmatpush1.msra.mxu0 0.0
    %1618 = vmatprep.subr.mxu0 0.0
    %1619 = vmatpush1.msra.mxu0 0.0
    %1620 = vmatprep.subr.mxu0 0.0
    %1621 = vmatpush1.msra.mxu0 0.0
    %1622 = vmatprep.subr.mxu0 0.0
    %1623 = vmatpush1.msra.mxu0 0.0
    %1624 = vmatprep.subr.mxu0 0.0
    %1625 = vmatpush1.msra.mxu0 0.0
    %1626 = vmatprep.subr.mxu0 0.0
    %1627 = vmatpush1.msra.mxu0 0.0
    %1628 = vmatprep.subr.mxu0 0.0
    %1629 = vmatpush1.msra.mxu0 0.0
    %1630 = vmatprep.subr.mxu0 0.0
    %1631 = vmatpush1.msra.mxu0 0.0
    %1632 = vmatprep.subr.mxu0 0.0
    %1633 = vmatpush1.msra.mxu0 0.0
    %1634 = vmatprep.subr.mxu0 0.0
    %1635 = vmatpush1.msra.mxu0 0.0
    %1636 = vmatprep.subr.mxu0 0.0
    %1637 = vmatpush1.msra.mxu0 0.0
    %1638 = vmatprep.subr.mxu0 0.0
    %1639 = vmatpush1.msra.mxu0 0.0
    %1640 = vmatprep.subr.mxu0 0.0
    %1641 = vmatpush1.msra.mxu0 0.0
    %1642 = vmatprep.subr.mxu0 0.0
    %1643 = vmatpush1.msra.mxu0 0.0
    %1644 = vmatprep.subr.mxu0 0.0
    %1645 = vmatpush1.msra.mxu0 0.0
    %1646 = vmatprep.subr.mxu0 0.0
    %1647 = vmatpush1.msra.mxu0 0.0
    %1648 = vmatprep.subr.mxu0 0.0
    %1649 = vmatpush1.msra.mxu0 0.0
    %1650 = vmatprep.subr.mxu0 0.0
    %1651 = vmatpush1.msra.mxu0 0.0
    %1652 = vmatprep.subr.mxu0 0.0
    %1653 = vmatpush1.msra.mxu0 0.0
    %1654 = vmatprep.subr.mxu0 0.0
    %1655 = vmatpush1.msra.mxu0 0.0
    %1656 = vmatprep.subr.mxu0 0.0
    %1657 = vmatpush1.msra.mxu0 0.0
    %1658 = vmatprep.subr.mxu0 0.0
    %1659 = vmatpush1.msra.mxu0 0.0
    %1660 = vmatprep.subr.mxu0 0.0
    %1661 = vmatpush1.msra.mxu0 0.0
    %1662 = vmatprep.subr.mxu0 0.0
    %1663 = vmatpush1.msra.mxu0 0.0
    %1664 = vmatprep.subr.mxu0 0.0
    %1665 = vmatpush1.msra.mxu0 0.0
    %1666 = vmatprep.mubr.f32.mxu0 0.0
    %1667 = vmatmul.mubr.f32.gmra.mrb[0].mxu0 %v1600
    %v1668 = vpop.f32.mrb[0].mxu0
    %v1669 = vadd.f32 0.0, %v1668
    %v1670 = vpop.f32.mrb[0].mxu0
    %1671 = vdwg.mxu0
    %v1673 = vsel %vm1308, %v1380, 0
    %1675 = vmatprep.subr.mxu0 0.0
    %1676 = vmatpush1.msra.mxu0 %v78
    %1677 = vmatprep.subr.mxu0 0.0
    %1678 = vmatpush1.msra.mxu0 0.0
    %1679 = vmatprep.subr.mxu0 0.0
    %1680 = vmatpush1.msra.mxu0 0.0
    %1681 = vmatprep.subr.mxu0 0.0
    %1682 = vmatpush1.msra.mxu0 0.0
    %1683 = vmatprep.subr.mxu0 0.0
    %1684 = vmatpush1.msra.mxu0 0.0
    %1685 = vmatprep.subr.mxu0 0.0
    %1686 = vmatpush1.msra.mxu0 0.0
    %1687 = vmatprep.subr.mxu0 0.0
    %1688 = vmatpush1.msra.mxu0 0.0
    %1689 = vmatprep.subr.mxu0 0.0
    %1690 = vmatpush1.msra.mxu0 0.0
    %1691 = vmatprep.subr.mxu0 0.0
    %1692 = vmatpush1.msra.mxu0 0.0
    %1693 = vmatprep.subr.mxu0 0.0
    %1694 = vmatpush1.msra.mxu0 0.0
    %1695 = vmatprep.subr.mxu0 0.0
    %1696 = vmatpush1.msra.mxu0 0.0
    %1697 = vmatprep.subr.mxu0 0.0
    %1698 = vmatpush1.msra.mxu0 0.0
    %1699 = vmatprep.subr.mxu0 0.0
    %1700 = vmatpush1.msra.mxu0 0.0
    %1701 = vmatprep.subr.mxu0 0.0
    %1702 = vmatpush1.msra.mxu0 0.0
    %1703 = vmatprep.subr.mxu0 0.0
    %1704 = vmatpush1.msra.mxu0 0.0
    %1705 = vmatprep.subr.mxu0 0.0
    %1706 = vmatpush1.msra.mxu0 0.0
    %1707 = vmatprep.subr.mxu0 0.0
    %1708 = vmatpush1.msra.mxu0 0.0
    %1709 = vmatprep.subr.mxu0 0.0
    %1710 = vmatpush1.msra.mxu0 0.0
    %1711 = vmatprep.subr.mxu0 0.0
    %1712 = vmatpush1.msra.mxu0 0.0
    %1713 = vmatprep.subr.mxu0 0.0
    %1714 = vmatpush1.msra.mxu0 0.0
    %1715 = vmatprep.subr.mxu0 0.0
    %1716 = vmatpush1.msra.mxu0 0.0
    %1717 = vmatprep.subr.mxu0 0.0
    %1718 = vmatpush1.msra.mxu0 0.0
    %1719 = vmatprep.subr.mxu0 0.0
    %1720 = vmatpush1.msra.mxu0 0.0
    %1721 = vmatprep.subr.mxu0 0.0
    %1722 = vmatpush1.msra.mxu0 0.0
    %1723 = vmatprep.subr.mxu0 0.0
    %1724 = vmatpush1.msra.mxu0 0.0
    %1725 = vmatprep.subr.mxu0 0.0
    %1726 = vmatpush1.msra.mxu0 0.0
    %1727 = vmatprep.subr.mxu0 0.0
    %1728 = vmatpush1.msra.mxu0 0.0
    %1729 = vmatprep.subr.mxu0 0.0
    %1730 = vmatpush1.msra.mxu0 0.0
    %1731 = vmatprep.subr.mxu0 0.0
    %1732 = vmatpush1.msra.mxu0 0.0
    %1733 = vmatprep.subr.mxu0 0.0
    %1734 = vmatpush1.msra.mxu0 0.0
    %1735 = vmatprep.subr.mxu0 0.0
    %1736 = vmatpush1.msra.mxu0 0.0
    %1737 = vmatprep.subr.mxu0 0.0
    %1738 = vmatpush1.msra.mxu0 0.0
    %1739 = vmatprep.mubr.f32.mxu0 0.0
    %1740 = vmatmul.mubr.f32.gmra.mrb[0].mxu0 %v1673
    %v1741 = vpop.f32.mrb[0].mxu0
    %v1742 = vadd.f32 0.0, %v1741
    %v1743 = vpop.f32.mrb[0].mxu0
    %1744 = vdwg.mxu0
    %v1746 = vsel %vm1308, %v1382, 0
    %1748 = vmatprep.subr.mxu0 0.0
    %1749 = vmatpush1.msra.mxu0 %v79
    %1750 = vmatprep.subr.mxu0 0.0
    %1751 = vmatpush1.msra.mxu0 0.0
    %1752 = vmatprep.subr.mxu0 0.0
    %1753 = vmatpush1.msra.mxu0 0.0
    %1754 = vmatprep.subr.mxu0 0.0
    %1755 = vmatpush1.msra.mxu0 0.0
    %1756 = vmatprep.subr.mxu0 0.0
    %1757 = vmatpush1.msra.mxu0 0.0
    %1758 = vmatprep.subr.mxu0 0.0
    %1759 = vmatpush1.msra.mxu0 0.0
    %1760 = vmatprep.subr.mxu0 0.0
    %1761 = vmatpush1.msra.mxu0 0.0
    %1762 = vmatprep.subr.mxu0 0.0
    %1763 = vmatpush1.msra.mxu0 0.0
    %1764 = vmatprep.subr.mxu0 0.0
    %1765 = vmatpush1.msra.mxu0 0.0
    %1766 = vmatprep.subr.mxu0 0.0
    %1767 = vmatpush1.msra.mxu0 0.0
    %1768 = vmatprep.subr.mxu0 0.0
    %1769 = vmatpush1.msra.mxu0 0.0
    %1770 = vmatprep.subr.mxu0 0.0
    %1771 = vmatpush1.msra.mxu0 0.0
    %1772 = vmatprep.subr.mxu0 0.0
    %1773 = vmatpush1.msra.mxu0 0.0
    %1774 = vmatprep.subr.mxu0 0.0
    %1775 = vmatpush1.msra.mxu0 0.0
    %1776 = vmatprep.subr.mxu0 0.0
    %1777 = vmatpush1.msra.mxu0 0.0
    %1778 = vmatprep.subr.mxu0 0.0
    %1779 = vmatpush1.msra.mxu0 0.0
    %1780 = vmatprep.subr.mxu0 0.0
    %1781 = vmatpush1.msra.mxu0 0.0
    %1782 = vmatprep.subr.mxu0 0.0
    %1783 = vmatpush1.msra.mxu0 0.0
    %1784 = vmatprep.subr.mxu0 0.0
    %1785 = vmatpush1.msra.mxu0 0.0
    %1786 = vmatprep.subr.mxu0 0.0
    %1787 = vmatpush1.msra.mxu0 0.0
    %1788 = vmatprep.subr.mxu0 0.0
    %1789 = vmatpush1.msra.mxu0 0.0
    %1790 = vmatprep.subr.mxu0 0.0
    %1791 = vmatpush1.msra.mxu0 0.0
    %1792 = vmatprep.subr.mxu0 0.0
    %1793 = vmatpush1.msra.mxu0 0.0
    %1794 = vmatprep.subr.mxu0 0.0
    %1795 = vmatpush1.msra.mxu0 0.0
    %1796 = vmatprep.subr.mxu0 0.0
    %1797 = vmatpush1.msra.mxu0 0.0
    %1798 = vmatprep.subr.mxu0 0.0
    %1799 = vmatpush1.msra.mxu0 0.0
    %1800 = vmatprep.subr.mxu0 0.0
    %1801 = vmatpush1.msra.mxu0 0.0
    %1802 = vmatprep.subr.mxu0 0.0
    %1803 = vmatpush1.msra.mxu0 0.0
    %1804 = vmatprep.subr.mxu0 0.0
    %1805 = vmatpush1.msra.mxu0 0.0
    %1806 = vmatprep.subr.mxu0 0.0
    %1807 = vmatpush1.msra.mxu0 0.0
    %1808 = vmatprep.subr.mxu0 0.0
    %1809 = vmatpush1.msra.mxu0 0.0
    %1810 = vmatprep.subr.mxu0 0.0
    %1811 = vmatpush1.msra.mxu0 0.0
    %1812 = vmatprep.mubr.f32.mxu0 0.0
    %1813 = vmatmul.mubr.f32.gmra.mrb[0].mxu0 %v1746
    %v1814 = vpop.f32.mrb[0].mxu0
    %v1815 = vadd.f32 0.0, %v1814
    %v1816 = vpop.f32.mrb[0].mxu0
    %1817 = vdwg.mxu0
    %v1819 = vsel %vm1308, %v1384, 0
    %1821 = vmatprep.subr.mxu0 0.0
    %1822 = vmatpush1.msra.mxu0 %v80
    %1823 = vmatprep.subr.mxu0 0.0
    %1824 = vmatpush1.msra.mxu0 0.0
    %1825 = vmatprep.subr.mxu0 0.0
    %1826 = vmatpush1.msra.mxu0 0.0
    %1827 = vmatprep.subr.mxu0 0.0
    %1828 = vmatpush1.msra.mxu0 0.0
    %1829 = vmatprep.subr.mxu0 0.0
    %1830 = vmatpush1.msra.mxu0 0.0
    %1831 = vmatprep.subr.mxu0 0.0
    %1832 = vmatpush1.msra.mxu0 0.0
    %1833 = vmatprep.subr.mxu0 0.0
    %1834 = vmatpush1.msra.mxu0 0.0
    %1835 = vmatprep.subr.mxu0 0.0
    %1836 = vmatpush1.msra.mxu0 0.0
    %1837 = vmatprep.subr.mxu0 0.0
    %1838 = vmatpush1.msra.mxu0 0.0
    %1839 = vmatprep.subr.mxu0 0.0
    %1840 = vmatpush1.msra.mxu0 0.0
    %1841 = vmatprep.subr.mxu0 0.0
    %1842 = vmatpush1.msra.mxu0 0.0
    %1843 = vmatprep.subr.mxu0 0.0
    %1844 = vmatpush1.msra.mxu0 0.0
    %1845 = vmatprep.subr.mxu0 0.0
    %1846 = vmatpush1.msra.mxu0 0.0
    %1847 = vmatprep.subr.mxu0 0.0
    %1848 = vmatpush1.msra.mxu0 0.0
    %1849 = vmatprep.subr.mxu0 0.0
    %1850 = vmatpush1.msra.mxu0 0.0
    %1851 = vmatprep.subr.mxu0 0.0
    %1852 = vmatpush1.msra.mxu0 0.0
    %1853 = vmatprep.subr.mxu0 0.0
    %1854 = vmatpush1.msra.mxu0 0.0
    %1855 = vmatprep.subr.mxu0 0.0
    %1856 = vmatpush1.msra.mxu0 0.0
    %1857 = vmatprep.subr.mxu0 0.0
    %1858 = vmatpush1.msra.mxu0 0.0
    %1859 = vmatprep.subr.mxu0 0.0
    %1860 = vmatpush1.msra.mxu0 0.0
    %1861 = vmatprep.subr.mxu0 0.0
    %1862 = vmatpush1.msra.mxu0 0.0
    %1863 = vmatprep.subr.mxu0 0.0
    %1864 = vmatpush1.msra.mxu0 0.0
    %1865 = vmatprep.subr.mxu0 0.0
    %1866 = vmatpush1.msra.mxu0 0.0
    %1867 = vmatprep.subr.mxu0 0.0
    %1868 = vmatpush1.msra.mxu0 0.0
    %1869 = vmatprep.subr.mxu0 0.0
    %1870 = vmatpush1.msra.mxu0 0.0
    %1871 = vmatprep.subr.mxu0 0.0
    %1872 = vmatpush1.msra.mxu0 0.0
    %1873 = vmatprep.subr.mxu0 0.0
    %1874 = vmatpush1.msra.mxu0 0.0
    %1875 = vmatprep.subr.mxu0 0.0
    %1876 = vmatpush1.msra.mxu0 0.0
    %1877 = vmatprep.subr.mxu0 0.0
    %1878 = vmatpush1.msra.mxu0 0.0
    %1879 = vmatprep.subr.mxu0 0.0
    %1880 = vmatpush1.msra.mxu0 0.0
    %1881 = vmatprep.subr.mxu0 0.0
    %1882 = vmatpush1.msra.mxu0 0.0
    %1883 = vmatprep.subr.mxu0 0.0
    %1884 = vmatpush1.msra.mxu0 0.0
    %1885 = vmatprep.mubr.f32.mxu0 0.0
    %1886 = vmatmul.mubr.f32.gmra.mrb[0].mxu0 %v1819
    %v1887 = vpop.f32.mrb[0].mxu0
    %v1888 = vadd.f32 0.0, %v1887
    %v1889 = vpop.f32.mrb[0].mxu0
    %1890 = vdwg.mxu0
    %v1892 = vsel %vm1308, %v1386, 0
    %1894 = vmatprep.subr.mxu0 0.0
    %1895 = vmatpush1.msra.mxu0 %v81
    %1896 = vmatprep.subr.mxu0 0.0
    %1897 = vmatpush1.msra.mxu0 0.0
    %1898 = vmatprep.subr.mxu0 0.0
    %1899 = vmatpush1.msra.mxu0 0.0
    %1900 = vmatprep.subr.mxu0 0.0
    %1901 = vmatpush1.msra.mxu0 0.0
    %1902 = vmatprep.subr.mxu0 0.0
    %1903 = vmatpush1.msra.mxu0 0.0
    %1904 = vmatprep.subr.mxu0 0.0
    %1905 = vmatpush1.msra.mxu0 0.0
    %1906 = vmatprep.subr.mxu0 0.0
    %1907 = vmatpush1.msra.mxu0 0.0
    %1908 = vmatprep.subr.mxu0 0.0
    %1909 = vmatpush1.msra.mxu0 0.0
    %1910 = vmatprep.subr.mxu0 0.0
    %1911 = vmatpush1.msra.mxu0 0.0
    %1912 = vmatprep.subr.mxu0 0.0
    %1913 = vmatpush1.msra.mxu0 0.0
    %1914 = vmatprep.subr.mxu0 0.0
    %1915 = vmatpush1.msra.mxu0 0.0
    %1916 = vmatprep.subr.mxu0 0.0
    %1917 = vmatpush1.msra.mxu0 0.0
    %1918 = vmatprep.subr.mxu0 0.0
    %1919 = vmatpush1.msra.mxu0 0.0
    %1920 = vmatprep.subr.mxu0 0.0
    %1921 = vmatpush1.msra.mxu0 0.0
    %1922 = vmatprep.subr.mxu0 0.0
    %1923 = vmatpush1.msra.mxu0 0.0
    %1924 = vmatprep.subr.mxu0 0.0
    %1925 = vmatpush1.msra.mxu0 0.0
    %1926 = vmatprep.subr.mxu0 0.0
    %1927 = vmatpush1.msra.mxu0 0.0
    %1928 = vmatprep.subr.mxu0 0.0
    %1929 = vmatpush1.msra.mxu0 0.0
    %1930 = vmatprep.subr.mxu0 0.0
    %1931 = vmatpush1.msra.mxu0 0.0
    %1932 = vmatprep.subr.mxu0 0.0
    %1933 = vmatpush1.msra.mxu0 0.0
    %1934 = vmatprep.subr.mxu0 0.0
    %1935 = vmatpush1.msra.mxu0 0.0
    %1936 = vmatprep.subr.mxu0 0.0
    %1937 = vmatpush1.msra.mxu0 0.0
    %1938 = vmatprep.subr.mxu0 0.0
    %1939 = vmatpush1.msra.mxu0 0.0
    %1940 = vmatprep.subr.mxu0 0.0
    %1941 = vmatpush1.msra.mxu0 0.0
    %1942 = vmatprep.subr.mxu0 0.0
    %1943 = vmatpush1.msra.mxu0 0.0
    %1944 = vmatprep.subr.mxu0 0.0
    %1945 = vmatpush1.msra.mxu0 0.0
    %1946 = vmatprep.subr.mxu0 0.0
    %1947 = vmatpush1.msra.mxu0 0.0
    %1948 = vmatprep.subr.mxu0 0.0
    %1949 = vmatpush1.msra.mxu0 0.0
    %1950 = vmatprep.subr.mxu0 0.0
    %1951 = vmatpush1.msra.mxu0 0.0
    %1952 = vmatprep.subr.mxu0 0.0
    %1953 = vmatpush1.msra.mxu0 0.0
    %1954 = vmatprep.subr.mxu0 0.0
    %1955 = vmatpush1.msra.mxu0 0.0
    %1956 = vmatprep.subr.mxu0 0.0
    %1957 = vmatpush1.msra.mxu0 0.0
    %1958 = vmatprep.mubr.f32.mxu0 0.0
    %1959 = vmatmul.mubr.f32.gmra.mrb[0].mxu0 %v1892
    %v1960 = vpop.f32.mrb[0].mxu0
    %v1961 = vadd.f32 0.0, %v1960
    %v1962 = vpop.f32.mrb[0].mxu0
    %1963 = vdwg.mxu0
    %v1965 = vsel %vm1308, %v1388, 0
    %1967 = vmatprep.subr.mxu0 0.0
    %1968 = vmatpush1.msra.mxu0 %v82
    %1969 = vmatprep.subr.mxu0 0.0
    %1970 = vmatpush1.msra.mxu0 0.0
    %1971 = vmatprep.subr.mxu0 0.0
    %1972 = vmatpush1.msra.mxu0 0.0
    %1973 = vmatprep.subr.mxu0 0.0
    %1974 = vmatpush1.msra.mxu0 0.0
    %1975 = vmatprep.subr.mxu0 0.0
    %1976 = vmatpush1.msra.mxu0 0.0
    %1977 = vmatprep.subr.mxu0 0.0
    %1978 = vmatpush1.msra.mxu0 0.0
    %1979 = vmatprep.subr.mxu0 0.0
    %1980 = vmatpush1.msra.mxu0 0.0
    %1981 = vmatprep.subr.mxu0 0.0
    %1982 = vmatpush1.msra.mxu0 0.0
    %1983 = vmatprep.subr.mxu0 0.0
    %1984 = vmatpush1.msra.mxu0 0.0
    %1985 = vmatprep.subr.mxu0 0.0
    %1986 = vmatpush1.msra.mxu0 0.0
    %1987 = vmatprep.subr.mxu0 0.0
    %1988 = vmatpush1.msra.mxu0 0.0
    %1989 = vmatprep.subr.mxu0 0.0
    %1990 = vmatpush1.msra.mxu0 0.0
    %1991 = vmatprep.subr.mxu0 0.0
    %1992 = vmatpush1.msra.mxu0 0.0
    %1993 = vmatprep.subr.mxu0 0.0
    %1994 = vmatpush1.msra.mxu0 0.0
    %1995 = vmatprep.subr.mxu0 0.0
    %1996 = vmatpush1.msra.mxu0 0.0
    %1997 = vmatprep.subr.mxu0 0.0
    %1998 = vmatpush1.msra.mxu0 0.0
    %1999 = vmatprep.subr.mxu0 0.0
    %2000 = vmatpush1.msra.mxu0 0.0
    %2001 = vmatprep.subr.mxu0 0.0
    %2002 = vmatpush1.msra.mxu0 0.0
    %2003 = vmatprep.subr.mxu0 0.0
    %2004 = vmatpush1.msra.mxu0 0.0
    %2005 = vmatprep.subr.mxu0 0.0
    %2006 = vmatpush1.msra.mxu0 0.0
    %2007 = vmatprep.subr.mxu0 0.0
    %2008 = vmatpush1.msra.mxu0 0.0
    %2009 = vmatprep.subr.mxu0 0.0
    %2010 = vmatpush1.msra.mxu0 0.0
    %2011 = vmatprep.subr.mxu0 0.0
    %2012 = vmatpush1.msra.mxu0 0.0
    %2013 = vmatprep.subr.mxu0 0.0
    %2014 = vmatpush1.msra.mxu0 0.0
    %2015 = vmatprep.subr.mxu0 0.0
    %2016 = vmatpush1.msra.mxu0 0.0
    %2017 = vmatprep.subr.mxu0 0.0
    %2018 = vmatpush1.msra.mxu0 0.0
    %2019 = vmatprep.subr.mxu0 0.0
    %2020 = vmatpush1.msra.mxu0 0.0
    %2021 = vmatprep.subr.mxu0 0.0
    %2022 = vmatpush1.msra.mxu0 0.0
    %2023 = vmatprep.subr.mxu0 0.0
    %2024 = vmatpush1.msra.mxu0 0.0
    %2025 = vmatprep.subr.mxu0 0.0
    %2026 = vmatpush1.msra.mxu0 0.0
    %2027 = vmatprep.subr.mxu0 0.0
    %2028 = vmatpush1.msra.mxu0 0.0
    %2029 = vmatprep.subr.mxu0 0.0
    %2030 = vmatpush1.msra.mxu0 0.0
    %2031 = vmatprep.mubr.f32.mxu0 0.0
    %2032 = vmatmul.mubr.f32.gmra.mrb[0].mxu0 %v1965
    %v2033 = vpop.f32.mrb[0].mxu0
    %v2034 = vadd.f32 0.0, %v2033
    %v2035 = vpop.f32.mrb[0].mxu0
    %2036 = vdwg.mxu0
    %v2038 = vsel %vm1308, %v1390, 0
    %2040 = vmatprep.subr.mxu0 0.0
    %2041 = vmatpush1.msra.mxu0 %v83
    %2042 = vmatprep.subr.mxu0 0.0
    %2043 = vmatpush1.msra.mxu0 0.0
    %2044 = vmatprep.subr.mxu0 0.0
    %2045 = vmatpush1.msra.mxu0 0.0
    %2046 = vmatprep.subr.mxu0 0.0
    %2047 = vmatpush1.msra.mxu0 0.0
    %2048 = vmatprep.subr.mxu0 0.0
    %2049 = vmatpush1.msra.mxu0 0.0
    %2050 = vmatprep.subr.mxu0 0.0
    %2051 = vmatpush1.msra.mxu0 0.0
    %2052 = vmatprep.subr.mxu0 0.0
    %2053 = vmatpush1.msra.mxu0 0.0
    %2054 = vmatprep.subr.mxu0 0.0
    %2055 = vmatpush1.msra.mxu0 0.0
    %2056 = vmatprep.subr.mxu0 0.0
    %2057 = vmatpush1.msra.mxu0 0.0
    %2058 = vmatprep.subr.mxu0 0.0
    %2059 = vmatpush1.msra.mxu0 0.0
    %2060 = vmatprep.subr.mxu0 0.0
    %2061 = vmatpush1.msra.mxu0 0.0
    %2062 = vmatprep.subr.mxu0 0.0
    %2063 = vmatpush1.msra.mxu0 0.0
    %2064 = vmatprep.subr.mxu0 0.0
    %2065 = vmatpush1.msra.mxu0 0.0
    %2066 = vmatprep.subr.mxu0 0.0
    %2067 = vmatpush1.msra.mxu0 0.0
    %2068 = vmatprep.subr.mxu0 0.0
    %2069 = vmatpush1.msra.mxu0 0.0
    %2070 = vmatprep.subr.mxu0 0.0
    %2071 = vmatpush1.msra.mxu0 0.0
    %2072 = vmatprep.subr.mxu0 0.0
    %2073 = vmatpush1.msra.mxu0 0.0
    %2074 = vmatprep.subr.mxu0 0.0
    %2075 = vmatpush1.msra.mxu0 0.0
    %2076 = vmatprep.subr.mxu0 0.0
    %2077 = vmatpush1.msra.mxu0 0.0
    %2078 = vmatprep.subr.mxu0 0.0
    %2079 = vmatpush1.msra.mxu0 0.0
    %2080 = vmatprep.subr.mxu0 0.0
    %2081 = vmatpush1.msra.mxu0 0.0
    %2082 = vmatprep.subr.mxu0 0.0
    %2083 = vmatpush1.msra.mxu0 0.0
    %2084 = vmatprep.subr.mxu0 0.0
    %2085 = vmatpush1.msra.mxu0 0.0
    %2086 = vmatprep.subr.mxu0 0.0
    %2087 = vmatpush1.msra.mxu0 0.0
    %2088 = vmatprep.subr.mxu0 0.0
    %2089 = vmatpush1.msra.mxu0 0.0
    %2090 = vmatprep.subr.mxu0 0.0
    %2091 = vmatpush1.msra.mxu0 0.0
    %2092 = vmatprep.subr.mxu0 0.0
    %2093 = vmatpush1.msra.mxu0 0.0
    %2094 = vmatprep.subr.mxu0 0.0
    %2095 = vmatpush1.msra.mxu0 0.0
    %2096 = vmatprep.subr.mxu0 0.0
    %2097 = vmatpush1.msra.mxu0 0.0
    %2098 = vmatprep.subr.mxu0 0.0
    %2099 = vmatpush1.msra.mxu0 0.0
    %2100 = vmatprep.subr.mxu0 0.0
    %2101 = vmatpush1.msra.mxu0 0.0
    %2102 = vmatprep.subr.mxu0 0.0
    %2103 = vmatpush1.msra.mxu0 0.0
    %2104 = vmatprep.mubr.f32.mxu0 0.0
    %2105 = vmatmul.mubr.f32.gmra.mrb[0].mxu0 %v2038
    %v2106 = vpop.f32.mrb[0].mxu0
    %v2107 = vadd.f32 0.0, %v2106
    %v2108 = vpop.f32.mrb[0].mxu0
    %2109 = vdwg.mxu0
    %v2111 = vsel %vm1308, %v1392, 0
    %2113 = vmatprep.subr.mxu0 0.0
    %2114 = vmatpush1.msra.mxu0 %v84
    %2115 = vmatprep.subr.mxu0 0.0
    %2116 = vmatpush1.msra.mxu0 0.0
    %2117 = vmatprep.subr.mxu0 0.0
    %2118 = vmatpush1.msra.mxu0 0.0
    %2119 = vmatprep.subr.mxu0 0.0
    %2120 = vmatpush1.msra.mxu0 0.0
    %2121 = vmatprep.subr.mxu0 0.0
    %2122 = vmatpush1.msra.mxu0 0.0
    %2123 = vmatprep.subr.mxu0 0.0
    %2124 = vmatpush1.msra.mxu0 0.0
    %2125 = vmatprep.subr.mxu0 0.0
    %2126 = vmatpush1.msra.mxu0 0.0
    %2127 = vmatprep.subr.mxu0 0.0
    %2128 = vmatpush1.msra.mxu0 0.0
    %2129 = vmatprep.subr.mxu0 0.0
    %2130 = vmatpush1.msra.mxu0 0.0
    %2131 = vmatprep.subr.mxu0 0.0
    %2132 = vmatpush1.msra.mxu0 0.0
    %2133 = vmatprep.subr.mxu0 0.0
    %2134 = vmatpush1.msra.mxu0 0.0
    %2135 = vmatprep.subr.mxu0 0.0
    %2136 = vmatpush1.msra.mxu0 0.0
    %2137 = vmatprep.subr.mxu0 0.0
    %2138 = vmatpush1.msra.mxu0 0.0
    %2139 = vmatprep.subr.mxu0 0.0
    %2140 = vmatpush1.msra.mxu0 0.0
    %2141 = vmatprep.subr.mxu0 0.0
    %2142 = vmatpush1.msra.mxu0 0.0
    %2143 = vmatprep.subr.mxu0 0.0
    %2144 = vmatpush1.msra.mxu0 0.0
    %2145 = vmatprep.subr.mxu0 0.0
    %2146 = vmatpush1.msra.mxu0 0.0
    %2147 = vmatprep.subr.mxu0 0.0
    %2148 = vmatpush1.msra.mxu0 0.0
    %2149 = vmatprep.subr.mxu0 0.0
    %2150 = vmatpush1.msra.mxu0 0.0
    %2151 = vmatprep.subr.mxu0 0.0
    %2152 = vmatpush1.msra.mxu0 0.0
    %2153 = vmatprep.subr.mxu0 0.0
    %2154 = vmatpush1.msra.mxu0 0.0
    %2155 = vmatprep.subr.mxu0 0.0
    %2156 = vmatpush1.msra.mxu0 0.0
    %2157 = vmatprep.subr.mxu0 0.0
    %2158 = vmatpush1.msra.mxu0 0.0
    %2159 = vmatprep.subr.mxu0 0.0
    %2160 = vmatpush1.msra.mxu0 0.0
    %2161 = vmatprep.subr.mxu0 0.0
    %2162 = vmatpush1.msra.mxu0 0.0
    %2163 = vmatprep.subr.mxu0 0.0
    %2164 = vmatpush1.msra.mxu0 0.0
    %2165 = vmatprep.subr.mxu0 0.0
    %2166 = vmatpush1.msra.mxu0 0.0
    %2167 = vmatprep.subr.mxu0 0.0
    %2168 = vmatpush1.msra.mxu0 0.0
    %2169 = vmatprep.subr.mxu0 0.0
    %2170 = vmatpush1.msra.mxu0 0.0
    %2171 = vmatprep.subr.mxu0 0.0
    %2172 = vmatpush1.msra.mxu0 0.0
    %2173 = vmatprep.subr.mxu0 0.0
    %2174 = vmatpush1.msra.mxu0 0.0
    %2175 = vmatprep.subr.mxu0 0.0
    %2176 = vmatpush1.msra.mxu0 0.0
    %2177 = vmatprep.mubr.f32.mxu0 0.0
    %2178 = vmatmul.mubr.f32.gmra.mrb[0].mxu0 %v2111
    %v2179 = vpop.f32.mrb[0].mxu0
    %v2180 = vadd.f32 0.0, %v2179
    %v2181 = vpop.f32.mrb[0].mxu0
    %2182 = vdwg.mxu0
    %v2184 = vsel %vm1308, %v1394, 0
    %2186 = vmatprep.subr.mxu0 0.0
    %2187 = vmatpush1.msra.mxu0 %v85
    %2188 = vmatprep.subr.mxu0 0.0
    %2189 = vmatpush1.msra.mxu0 0.0
    %2190 = vmatprep.subr.mxu0 0.0
    %2191 = vmatpush1.msra.mxu0 0.0
    %2192 = vmatprep.subr.mxu0 0.0
    %2193 = vmatpush1.msra.mxu0 0.0
    %2194 = vmatprep.subr.mxu0 0.0
    %2195 = vmatpush1.msra.mxu0 0.0
    %2196 = vmatprep.subr.mxu0 0.0
    %2197 = vmatpush1.msra.mxu0 0.0
    %2198 = vmatprep.subr.mxu0 0.0
    %2199 = vmatpush1.msra.mxu0 0.0
    %2200 = vmatprep.subr.mxu0 0.0
    %2201 = vmatpush1.msra.mxu0 0.0
    %2202 = vmatprep.subr.mxu0 0.0
    %2203 = vmatpush1.msra.mxu0 0.0
    %2204 = vmatprep.subr.mxu0 0.0
    %2205 = vmatpush1.msra.mxu0 0.0
    %2206 = vmatprep.subr.mxu0 0.0
    %2207 = vmatpush1.msra.mxu0 0.0
    %2208 = vmatprep.subr.mxu0 0.0
    %2209 = vmatpush1.msra.mxu0 0.0
    %2210 = vmatprep.subr.mxu0 0.0
    %2211 = vmatpush1.msra.mxu0 0.0
    %2212 = vmatprep.subr.mxu0 0.0
    %2213 = vmatpush1.msra.mxu0 0.0
    %2214 = vmatprep.subr.mxu0 0.0
    %2215 = vmatpush1.msra.mxu0 0.0
    %2216 = vmatprep.subr.mxu0 0.0
    %2217 = vmatpush1.msra.mxu0 0.0
    %2218 = vmatprep.subr.mxu0 0.0
    %2219 = vmatpush1.msra.mxu0 0.0
    %2220 = vmatprep.subr.mxu0 0.0
    %2221 = vmatpush1.msra.mxu0 0.0
    %2222 = vmatprep.subr.mxu0 0.0
    %2223 = vmatpush1.msra.mxu0 0.0
    %2224 = vmatprep.subr.mxu0 0.0
    %2225 = vmatpush1.msra.mxu0 0.0
    %2226 = vmatprep.subr.mxu0 0.0
    %2227 = vmatpush1.msra.mxu0 0.0
    %2228 = vmatprep.subr.mxu0 0.0
    %2229 = vmatpush1.msra.mxu0 0.0
    %2230 = vmatprep.subr.mxu0 0.0
    %2231 = vmatpush1.msra.mxu0 0.0
    %2232 = vmatprep.subr.mxu0 0.0
    %2233 = vmatpush1.msra.mxu0 0.0
    %2234 = vmatprep.subr.mxu0 0.0
    %2235 = vmatpush1.msra.mxu0 0.0
    %2236 = vmatprep.subr.mxu0 0.0
    %2237 = vmatpush1.msra.mxu0 0.0
    %2238 = vmatprep.subr.mxu0 0.0
    %2239 = vmatpush1.msra.mxu0 0.0
    %2240 = vmatprep.subr.mxu0 0.0
    %2241 = vmatpush1.msra.mxu0 0.0
    %2242 = vmatprep.subr.mxu0 0.0
    %2243 = vmatpush1.msra.mxu0 0.0
    %2244 = vmatprep.subr.mxu0 0.0
    %2245 = vmatpush1.msra.mxu0 0.0
    %2246 = vmatprep.subr.mxu0 0.0
    %2247 = vmatpush1.msra.mxu0 0.0
    %2248 = vmatprep.subr.mxu0 0.0
    %2249 = vmatpush1.msra.mxu0 0.0
    %2250 = vmatprep.mubr.f32.mxu0 0.0
    %2251 = vmatmul.mubr.f32.gmra.mrb[0].mxu0 %v2184
    %v2252 = vpop.f32.mrb[0].mxu0
    %v2253 = vadd.f32 0.0, %v2252
    %v2254 = vpop.f32.mrb[0].mxu0
    %2255 = vdwg.mxu0
    %v2257 = vsel %vm1308, %v1396, 0
    %2259 = vmatprep.subr.mxu0 0.0
    %2260 = vmatpush1.msra.mxu0 %v86
    %2261 = vmatprep.subr.mxu0 0.0
    %2262 = vmatpush1.msra.mxu0 0.0
    %2263 = vmatprep.subr.mxu0 0.0
    %2264 = vmatpush1.msra.mxu0 0.0
    %2265 = vmatprep.subr.mxu0 0.0
    %2266 = vmatpush1.msra.mxu0 0.0
    %2267 = vmatprep.subr.mxu0 0.0
    %2268 = vmatpush1.msra.mxu0 0.0
    %2269 = vmatprep.subr.mxu0 0.0
    %2270 = vmatpush1.msra.mxu0 0.0
    %2271 = vmatprep.subr.mxu0 0.0
    %2272 = vmatpush1.msra.mxu0 0.0
    %2273 = vmatprep.subr.mxu0 0.0
    %2274 = vmatpush1.msra.mxu0 0.0
    %2275 = vmatprep.subr.mxu0 0.0
    %2276 = vmatpush1.msra.mxu0 0.0
    %2277 = vmatprep.subr.mxu0 0.0
    %2278 = vmatpush1.msra.mxu0 0.0
    %2279 = vmatprep.subr.mxu0 0.0
    %2280 = vmatpush1.msra.mxu0 0.0
    %2281 = vmatprep.subr.mxu0 0.0
    %2282 = vmatpush1.msra.mxu0 0.0
    %2283 = vmatprep.subr.mxu0 0.0
    %2284 = vmatpush1.msra.mxu0 0.0
    %2285 = vmatprep.subr.mxu0 0.0
    %2286 = vmatpush1.msra.mxu0 0.0
    %2287 = vmatprep.subr.mxu0 0.0
    %2288 = vmatpush1.msra.mxu0 0.0
    %2289 = vmatprep.subr.mxu0 0.0
    %2290 = vmatpush1.msra.mxu0 0.0
    %2291 = vmatprep.subr.mxu0 0.0
    %2292 = vmatpush1.msra.mxu0 0.0
    %2293 = vmatprep.subr.mxu0 0.0
    %2294 = vmatpush1.msra.mxu0 0.0
    %2295 = vmatprep.subr.mxu0 0.0
    %2296 = vmatpush1.msra.mxu0 0.0
    %2297 = vmatprep.subr.mxu0 0.0
    %2298 = vmatpush1.msra.mxu0 0.0
    %2299 = vmatprep.subr.mxu0 0.0
    %2300 = vmatpush1.msra.mxu0 0.0
    %2301 = vmatprep.subr.mxu0 0.0
    %2302 = vmatpush1.msra.mxu0 0.0
    %2303 = vmatprep.subr.mxu0 0.0
    %2304 = vmatpush1.msra.mxu0 0.0
    %2305 = vmatprep.subr.mxu0 0.0
    %2306 = vmatpush1.msra.mxu0 0.0
    %2307 = vmatprep.subr.mxu0 0.0
    %2308 = vmatpush1.msra.mxu0 0.0
    %2309 = vmatprep.subr.mxu0 0.0
    %2310 = vmatpush1.msra.mxu0 0.0
    %2311 = vmatprep.subr.mxu0 0.0
    %2312 = vmatpush1.msra.mxu0 0.0
    %2313 = vmatprep.subr.mxu0 0.0
    %2314 = vmatpush1.msra.mxu0 0.0
    %2315 = vmatprep.subr.mxu0 0.0
    %2316 = vmatpush1.msra.mxu0 0.0
    %2317 = vmatprep.subr.mxu0 0.0
    %2318 = vmatpush1.msra.mxu0 0.0
    %2319 = vmatprep.subr.mxu0 0.0
    %2320 = vmatpush1.msra.mxu0 0.0
    %2321 = vmatprep.subr.mxu0 0.0
    %2322 = vmatpush1.msra.mxu0 0.0
    %2323 = vmatprep.mubr.f32.mxu0 0.0
    %2324 = vmatmul.mubr.f32.gmra.mrb[0].mxu0 %v2257
    %v2325 = vpop.f32.mrb[0].mxu0
    %v2326 = vadd.f32 0.0, %v2325
    %v2327 = vpop.f32.mrb[0].mxu0
    %2328 = vdwg.mxu0
    %v2330 = vsel %vm1308, %v1398, 0
    %2332 = vmatprep.subr.mxu0 0.0
    %2333 = vmatpush1.msra.mxu0 %v87
    %2334 = vmatprep.subr.mxu0 0.0
    %2335 = vmatpush1.msra.mxu0 0.0
    %2336 = vmatprep.subr.mxu0 0.0
    %2337 = vmatpush1.msra.mxu0 0.0
    %2338 = vmatprep.subr.mxu0 0.0
    %2339 = vmatpush1.msra.mxu0 0.0
    %2340 = vmatprep.subr.mxu0 0.0
    %2341 = vmatpush1.msra.mxu0 0.0
    %2342 = vmatprep.subr.mxu0 0.0
    %2343 = vmatpush1.msra.mxu0 0.0
    %2344 = vmatprep.subr.mxu0 0.0
    %2345 = vmatpush1.msra.mxu0 0.0
    %2346 = vmatprep.subr.mxu0 0.0
    %2347 = vmatpush1.msra.mxu0 0.0
    %2348 = vmatprep.subr.mxu0 0.0
    %2349 = vmatpush1.msra.mxu0 0.0
    %2350 = vmatprep.subr.mxu0 0.0
    %2351 = vmatpush1.msra.mxu0 0.0
    %2352 = vmatprep.subr.mxu0 0.0
    %2353 = vmatpush1.msra.mxu0 0.0
    %2354 = vmatprep.subr.mxu0 0.0
    %2355 = vmatpush1.msra.mxu0 0.0
    %2356 = vmatprep.subr.mxu0 0.0
    %2357 = vmatpush1.msra.mxu0 0.0
    %2358 = vmatprep.subr.mxu0 0.0
    %2359 = vmatpush1.msra.mxu0 0.0
    %2360 = vmatprep.subr.mxu0 0.0
    %2361 = vmatpush1.msra.mxu0 0.0
    %2362 = vmatprep.subr.mxu0 0.0
    %2363 = vmatpush1.msra.mxu0 0.0
    %2364 = vmatprep.subr.mxu0 0.0
    %2365 = vmatpush1.msra.mxu0 0.0
    %2366 = vmatprep.subr.mxu0 0.0
    %2367 = vmatpush1.msra.mxu0 0.0
    %2368 = vmatprep.subr.mxu0 0.0
    %2369 = vmatpush1.msra.mxu0 0.0
    %2370 = vmatprep.subr.mxu0 0.0
    %2371 = vmatpush1.msra.mxu0 0.0
    %2372 = vmatprep.subr.mxu0 0.0
    %2373 = vmatpush1.msra.mxu0 0.0
    %2374 = vmatprep.subr.mxu0 0.0
    %2375 = vmatpush1.msra.mxu0 0.0
    %2376 = vmatprep.subr.mxu0 0.0
    %2377 = vmatpush1.msra.mxu0 0.0
    %2378 = vmatprep.subr.mxu0 0.0
    %2379 = vmatpush1.msra.mxu0 0.0
    %2380 = vmatprep.subr.mxu0 0.0
    %2381 = vmatpush1.msra.mxu0 0.0
    %2382 = vmatprep.subr.mxu0 0.0
    %2383 = vmatpush1.msra.mxu0 0.0
    %2384 = vmatprep.subr.mxu0 0.0
    %2385 = vmatpush1.msra.mxu0 0.0
    %2386 = vmatprep.subr.mxu0 0.0
    %2387 = vmatpush1.msra.mxu0 0.0
    %2388 = vmatprep.subr.mxu0 0.0
    %2389 = vmatpush1.msra.mxu0 0.0
    %2390 = vmatprep.subr.mxu0 0.0
    %2391 = vmatpush1.msra.mxu0 0.0
    %2392 = vmatprep.subr.mxu0 0.0
    %2393 = vmatpush1.msra.mxu0 0.0
    %2394 = vmatprep.subr.mxu0 0.0
    %2395 = vmatpush1.msra.mxu0 0.0
    %2396 = vmatprep.mubr.f32.mxu0 0.0
    %2397 = vmatmul.mubr.f32.gmra.mrb[0].mxu0 %v2330
    %v2398 = vpop.f32.mrb[0].mxu0
    %v2399 = vadd.f32 0.0, %v2398
    %v2400 = vpop.f32.mrb[0].mxu0
    %2401 = vdwg.mxu0
    %v2403 = vsel %vm1308, %v1400, 0
    %2405 = vmatprep.subr.mxu0 0.0
    %2406 = vmatpush1.msra.mxu0 %v88
    %2407 = vmatprep.subr.mxu0 0.0
    %2408 = vmatpush1.msra.mxu0 0.0
    %2409 = vmatprep.subr.mxu0 0.0
    %2410 = vmatpush1.msra.mxu0 0.0
    %2411 = vmatprep.subr.mxu0 0.0
    %2412 = vmatpush1.msra.mxu0 0.0
    %2413 = vmatprep.subr.mxu0 0.0
    %2414 = vmatpush1.msra.mxu0 0.0
    %2415 = vmatprep.subr.mxu0 0.0
    %2416 = vmatpush1.msra.mxu0 0.0
    %2417 = vmatprep.subr.mxu0 0.0
    %2418 = vmatpush1.msra.mxu0 0.0
    %2419 = vmatprep.subr.mxu0 0.0
    %2420 = vmatpush1.msra.mxu0 0.0
    %2421 = vmatprep.subr.mxu0 0.0
    %2422 = vmatpush1.msra.mxu0 0.0
    %2423 = vmatprep.subr.mxu0 0.0
    %2424 = vmatpush1.msra.mxu0 0.0
    %2425 = vmatprep.subr.mxu0 0.0
    %2426 = vmatpush1.msra.mxu0 0.0
    %2427 = vmatprep.subr.mxu0 0.0
    %2428 = vmatpush1.msra.mxu0 0.0
    %2429 = vmatprep.subr.mxu0 0.0
    %2430 = vmatpush1.msra.mxu0 0.0
    %2431 = vmatprep.subr.mxu0 0.0
    %2432 = vmatpush1.msra.mxu0 0.0
    %2433 = vmatprep.subr.mxu0 0.0
    %2434 = vmatpush1.msra.mxu0 0.0
    %2435 = vmatprep.subr.mxu0 0.0
    %2436 = vmatpush1.msra.mxu0 0.0
    %2437 = vmatprep.subr.mxu0 0.0
    %2438 = vmatpush1.msra.mxu0 0.0
    %2439 = vmatprep.subr.mxu0 0.0
    %2440 = vmatpush1.msra.mxu0 0.0
    %2441 = vmatprep.subr.mxu0 0.0
    %2442 = vmatpush1.msra.mxu0 0.0
    %2443 = vmatprep.subr.mxu0 0.0
    %2444 = vmatpush1.msra.mxu0 0.0
    %2445 = vmatprep.subr.mxu0 0.0
    %2446 = vmatpush1.msra.mxu0 0.0
    %2447 = vmatprep.subr.mxu0 0.0
    %2448 = vmatpush1.msra.mxu0 0.0
    %2449 = vmatprep.subr.mxu0 0.0
    %2450 = vmatpush1.msra.mxu0 0.0
    %2451 = vmatprep.subr.mxu0 0.0
    %2452 = vmatpush1.msra.mxu0 0.0
    %2453 = vmatprep.subr.mxu0 0.0
    %2454 = vmatpush1.msra.mxu0 0.0
    %2455 = vmatprep.subr.mxu0 0.0
    %2456 = vmatpush1.msra.mxu0 0.0
    %2457 = vmatprep.subr.mxu0 0.0
    %2458 = vmatpush1.msra.mxu0 0.0
    %2459 = vmatprep.subr.mxu0 0.0
    %2460 = vmatpush1.msra.mxu0 0.0
    %2461 = vmatprep.subr.mxu0 0.0
    %2462 = vmatpush1.msra.mxu0 0.0
    %2463 = vmatprep.subr.mxu0 0.0
    %2464 = vmatpush1.msra.mxu0 0.0
    %2465 = vmatprep.subr.mxu0 0.0
    %2466 = vmatpush1.msra.mxu0 0.0
    %2467 = vmatprep.subr.mxu0 0.0
    %2468 = vmatpush1.msra.mxu0 0.0
    %2469 = vmatprep.mubr.f32.mxu0 0.0
    %2470 = vmatmul.mubr.f32.gmra.mrb[0].mxu0 %v2403
    %v2471 = vpop.f32.mrb[0].mxu0
    %v2472 = vadd.f32 0.0, %v2471
    %v2473 = vpop.f32.mrb[0].mxu0
    %2474 = vdwg.mxu0
    %v2476 = vsel %vm1308, %v1402, 0
    %2478 = vmatprep.subr.mxu0 0.0
    %2479 = vmatpush1.msra.mxu0 %v89
    %2480 = vmatprep.subr.mxu0 0.0
    %2481 = vmatpush1.msra.mxu0 0.0
    %2482 = vmatprep.subr.mxu0 0.0
    %2483 = vmatpush1.msra.mxu0 0.0
    %2484 = vmatprep.subr.mxu0 0.0
    %2485 = vmatpush1.msra.mxu0 0.0
    %2486 = vmatprep.subr.mxu0 0.0
    %2487 = vmatpush1.msra.mxu0 0.0
    %2488 = vmatprep.subr.mxu0 0.0
    %2489 = vmatpush1.msra.mxu0 0.0
    %2490 = vmatprep.subr.mxu0 0.0
    %2491 = vmatpush1.msra.mxu0 0.0
    %2492 = vmatprep.subr.mxu0 0.0
    %2493 = vmatpush1.msra.mxu0 0.0
    %2494 = vmatprep.subr.mxu0 0.0
    %2495 = vmatpush1.msra.mxu0 0.0
    %2496 = vmatprep.subr.mxu0 0.0
    %2497 = vmatpush1.msra.mxu0 0.0
    %2498 = vmatprep.subr.mxu0 0.0
    %2499 = vmatpush1.msra.mxu0 0.0
    %2500 = vmatprep.subr.mxu0 0.0
    %2501 = vmatpush1.msra.mxu0 0.0
    %2502 = vmatprep.subr.mxu0 0.0
    %2503 = vmatpush1.msra.mxu0 0.0
    %2504 = vmatprep.subr.mxu0 0.0
    %2505 = vmatpush1.msra.mxu0 0.0
    %2506 = vmatprep.subr.mxu0 0.0
    %2507 = vmatpush1.msra.mxu0 0.0
    %2508 = vmatprep.subr.mxu0 0.0
    %2509 = vmatpush1.msra.mxu0 0.0
    %2510 = vmatprep.subr.mxu0 0.0
    %2511 = vmatpush1.msra.mxu0 0.0
    %2512 = vmatprep.subr.mxu0 0.0
    %2513 = vmatpush1.msra.mxu0 0.0
    %2514 = vmatprep.subr.mxu0 0.0
    %2515 = vmatpush1.msra.mxu0 0.0
    %2516 = vmatprep.subr.mxu0 0.0
    %2517 = vmatpush1.msra.mxu0 0.0
    %2518 = vmatprep.subr.mxu0 0.0
    %2519 = vmatpush1.msra.mxu0 0.0
    %2520 = vmatprep.subr.mxu0 0.0
    %2521 = vmatpush1.msra.mxu0 0.0
    %2522 = vmatprep.subr.mxu0 0.0
    %2523 = vmatpush1.msra.mxu0 0.0
    %2524 = vmatprep.subr.mxu0 0.0
    %2525 = vmatpush1.msra.mxu0 0.0
    %2526 = vmatprep.subr.mxu0 0.0
    %2527 = vmatpush1.msra.mxu0 0.0
    %2528 = vmatprep.subr.mxu0 0.0
    %2529 = vmatpush1.msra.mxu0 0.0
    %2530 = vmatprep.subr.mxu0 0.0
    %2531 = vmatpush1.msra.mxu0 0.0
    %2532 = vmatprep.subr.mxu0 0.0
    %2533 = vmatpush1.msra.mxu0 0.0
    %2534 = vmatprep.subr.mxu0 0.0
    %2535 = vmatpush1.msra.mxu0 0.0
    %2536 = vmatprep.subr.mxu0 0.0
    %2537 = vmatpush1.msra.mxu0 0.0
    %2538 = vmatprep.subr.mxu0 0.0
    %2539 = vmatpush1.msra.mxu0 0.0
    %2540 = vmatprep.subr.mxu0 0.0
    %2541 = vmatpush1.msra.mxu0 0.0
    %2542 = vmatprep.mubr.f32.mxu0 0.0
    %2543 = vmatmul.mubr.f32.gmra.mrb[0].mxu0 %v2476
    %v2544 = vpop.f32.mrb[0].mxu0
    %v2545 = vadd.f32 0.0, %v2544
    %v2546 = vpop.f32.mrb[0].mxu0
    %2547 = vdwg.mxu0
    %v2549 = vsel %vm1308, %v1404, 0
    %2551 = vmatprep.subr.mxu0 0.0
    %2552 = vmatpush1.msra.mxu0 %v90
    %2553 = vmatprep.subr.mxu0 0.0
    %2554 = vmatpush1.msra.mxu0 0.0
    %2555 = vmatprep.subr.mxu0 0.0
    %2556 = vmatpush1.msra.mxu0 0.0
    %2557 = vmatprep.subr.mxu0 0.0
    %2558 = vmatpush1.msra.mxu0 0.0
    %2559 = vmatprep.subr.mxu0 0.0
    %2560 = vmatpush1.msra.mxu0 0.0
    %2561 = vmatprep.subr.mxu0 0.0
    %2562 = vmatpush1.msra.mxu0 0.0
    %2563 = vmatprep.subr.mxu0 0.0
    %2564 = vmatpush1.msra.mxu0 0.0
    %2565 = vmatprep.subr.mxu0 0.0
    %2566 = vmatpush1.msra.mxu0 0.0
    %2567 = vmatprep.subr.mxu0 0.0
    %2568 = vmatpush1.msra.mxu0 0.0
    %2569 = vmatprep.subr.mxu0 0.0
    %2570 = vmatpush1.msra.mxu0 0.0
    %2571 = vmatprep.subr.mxu0 0.0
    %2572 = vmatpush1.msra.mxu0 0.0
    %2573 = vmatprep.subr.mxu0 0.0
    %2574 = vmatpush1.msra.mxu0 0.0
    %2575 = vmatprep.subr.mxu0 0.0
    %2576 = vmatpush1.msra.mxu0 0.0
    %2577 = vmatprep.subr.mxu0 0.0
    %2578 = vmatpush1.msra.mxu0 0.0
    %2579 = vmatprep.subr.mxu0 0.0
    %2580 = vmatpush1.msra.mxu0 0.0
    %2581 = vmatprep.subr.mxu0 0.0
    %2582 = vmatpush1.msra.mxu0 0.0
    %2583 = vmatprep.subr.mxu0 0.0
    %2584 = vmatpush1.msra.mxu0 0.0
    %2585 = vmatprep.subr.mxu0 0.0
    %2586 = vmatpush1.msra.mxu0 0.0
    %2587 = vmatprep.subr.mxu0 0.0
    %2588 = vmatpush1.msra.mxu0 0.0
    %2589 = vmatprep.subr.mxu0 0.0
    %2590 = vmatpush1.msra.mxu0 0.0
    %2591 = vmatprep.subr.mxu0 0.0
    %2592 = vmatpush1.msra.mxu0 0.0
    %2593 = vmatprep.subr.mxu0 0.0
    %2594 = vmatpush1.msra.mxu0 0.0
    %2595 = vmatprep.subr.mxu0 0.0
    %2596 = vmatpush1.msra.mxu0 0.0
    %2597 = vmatprep.subr.mxu0 0.0
    %2598 = vmatpush1.msra.mxu0 0.0
    %2599 = vmatprep.subr.mxu0 0.0
    %2600 = vmatpush1.msra.mxu0 0.0
    %2601 = vmatprep.subr.mxu0 0.0
    %2602 = vmatpush1.msra.mxu0 0.0
    %2603 = vmatprep.subr.mxu0 0.0
    %2604 = vmatpush1.msra.mxu0 0.0
    %2605 = vmatprep.subr.mxu0 0.0
    %2606 = vmatpush1.msra.mxu0 0.0
    %2607 = vmatprep.subr.mxu0 0.0
    %2608 = vmatpush1.msra.mxu0 0.0
    %2609 = vmatprep.subr.mxu0 0.0
    %2610 = vmatpush1.msra.mxu0 0.0
    %2611 = vmatprep.subr.mxu0 0.0
    %2612 = vmatpush1.msra.mxu0 0.0
    %2613 = vmatprep.subr.mxu0 0.0
    %2614 = vmatpush1.msra.mxu0 0.0
    %2615 = vmatprep.mubr.f32.mxu0 0.0
    %2616 = vmatmul.mubr.f32.gmra.mrb[0].mxu0 %v2549
    %v2617 = vpop.f32.mrb[0].mxu0
    %v2618 = vadd.f32 0.0, %v2617
    %v2619 = vpop.f32.mrb[0].mxu0
    %2620 = vdwg.mxu0
    %v2621 = vrcp.pop %v1407
    %v2622 = vrcp.pop %v1410
    %v2623 = vrcp.pop %v1413
    %v2624 = vrcp.pop %v1416
    %v2625 = vrcp.pop %v1419
    %v2626 = vrcp.pop %v1422
    %v2627 = vrcp.pop %v1425
    %v2628 = vrcp.pop %v1428
    %v2629 = vrcp.pop %v1431
    %v2630 = vrcp.pop %v1434
    %v2631 = vrcp.pop %v1437
    %v2632 = vrcp.pop %v1440
    %v2633 = vrcp.pop %v1443
    %v2634 = vrcp.pop %v1446
    %v2635 = vrcp.pop %v1449
    %v2636 = vrcp.pop %v1452
    %v2637 = vmul.f32 %v1523, %v2621
    %v2638 = vmul.f32 %v1596, %v2622
    %v2639 = vmul.f32 %v1669, %v2623
    %v2640 = vmul.f32 %v1742, %v2624
    %v2641 = vmul.f32 %v1815, %v2625
    %v2642 = vmul.f32 %v1888, %v2626
    %v2643 = vmul.f32 %v1961, %v2627
    %v2644 = vmul.f32 %v2034, %v2628
    %v2645 = vmul.f32 %v2107, %v2629
    %v2646 = vmul.f32 %v2180, %v2630
    %v2647 = vmul.f32 %v2253, %v2631
    %v2648 = vmul.f32 %v2326, %v2632
    %v2649 = vmul.f32 %v2399, %v2633
    %v2650 = vmul.f32 %v2472, %v2634
    %v2651 = vmul.f32 %v2545, %v2635
    %v2652 = vmul.f32 %v2618, %v2636
    %2653 = vst.msk [vmem:[#allocation2] sm:$0xff] %vm91, %v2637
    %2654 = vst.msk [vmem:[#allocation2 + $0x8] sm:$0xff] %vm91, %v2638
    %2656 = vrot.lane.b32.xlu0 %v2639, 4
    %v2657 = vpop.permute.xlu0 %2656
    %vm2659 = vcmask 64544
    %2660 = vst.msk [vmem:[#allocation2] sm:$0xff] %vm2659, %v2657
    %2662 = vrot.lane.b32.xlu0 %v2640, 4
    %v2663 = vpop.permute.xlu0 %2662
    %2665 = vst.msk [vmem:[#allocation2 + $0x8] sm:$0xff] %vm2659, %v2663
    %2667 = vrot.lane.b32.xlu0 %v2641, 8
    %v2668 = vpop.permute.xlu0 %2667
    %vm2670 = vcmask 97344
    %2671 = vst.msk [vmem:[#allocation2] sm:$0xff] %vm2670, %v2668
    %2673 = vrot.lane.b32.xlu0 %v2642, 8
    %v2674 = vpop.permute.xlu0 %2673
    %2676 = vst.msk [vmem:[#allocation2 + $0x8] sm:$0xff] %vm2670, %v2674
    %2678 = vrot.lane.b32.xlu0 %v2643, 12
    %v2679 = vpop.permute.xlu0 %2678
    %vm2681 = vcmask 130144
    %2682 = vst.msk [vmem:[#allocation2] sm:$0xff] %vm2681, %v2679
    %2684 = vrot.lane.b32.xlu0 %v2644, 12
    %v2685 = vpop.permute.xlu0 %2684
    %2687 = vst.msk [vmem:[#allocation2 + $0x8] sm:$0xff] %vm2681, %v2685
    %2689 = vrot.lane.b32.xlu0 %v2645, 16
    %v2690 = vpop.permute.xlu0 %2689
    %vm2692 = vcmask 162944
    %2693 = vst.msk [vmem:[#allocation2] sm:$0xff] %vm2692, %v2690
    %2695 = vrot.lane.b32.xlu0 %v2646, 16
    %v2696 = vpop.permute.xlu0 %2695
    %2698 = vst.msk [vmem:[#allocation2 + $0x8] sm:$0xff] %vm2692, %v2696
    %2700 = vrot.lane.b32.xlu0 %v2647, 20
    %v2701 = vpop.permute.xlu0 %2700
    %vm2703 = vcmask 195744
    %2704 = vst.msk [vmem:[#allocation2] sm:$0xff] %vm2703, %v2701
    %2706 = vrot.lane.b32.xlu0 %v2648, 20
    %v2707 = vpop.permute.xlu0 %2706
    %2709 = vst.msk [vmem:[#allocation2 + $0x8] sm:$0xff] %vm2703, %v2707
    %2711 = vrot.lane.b32.xlu0 %v2649, 24
    %v2712 = vpop.permute.xlu0 %2711
    %vm2714 = vcmask 228544
    %2715 = vst.msk [vmem:[#allocation2] sm:$0xff] %vm2714, %v2712
    %2717 = vrot.lane.b32.xlu0 %v2650, 24
    %v2718 = vpop.permute.xlu0 %2717
    %2720 = vst.msk [vmem:[#allocation2 + $0x8] sm:$0xff] %vm2714, %v2718
    %2722 = vrot.lane.b32.xlu0 %v2651, 28
    %v2723 = vpop.permute.xlu0 %2722
    %vm2725 = vcmask 261344
    %2726 = vst.msk [vmem:[#allocation2] sm:$0xff] %vm2725, %v2723
    %2728 = vrot.lane.b32.xlu0 %v2652, 28
    %v2729 = vpop.permute.xlu0 %2728
    %2731 = vst.msk [vmem:[#allocation2 + $0x8] sm:$0xff] %vm2725, %v2729
    %v2732 = vld [vmem:[#allocation2] sm:$0xff]
    %v2733 = vld [vmem:[#allocation2 + $0x8] sm:$0xff]
    %v2734 = vld [vmem:[%s0] sm:$0xff]
    %v2735 = vld [vmem:[%s0 + $0x8] sm:$0xff]
    %v2736 = vld [vmem:[%s4] sm:$0xff]
    %v2737 = vld [vmem:[%s4 + $0x8] sm:$0xff]
    %v2738 = vld [vmem:[%s4 + $0x10] sm:$0xff]
    %v2739 = vld [vmem:[%s4 + $0x18] sm:$0xff]
    %v2740 = vld [vmem:[%s5] sm:$0xff]
    %v2741 = vld [vmem:[%s5 + $0x8] sm:$0xff]
    %v2742 = vld [vmem:[%s5 + $0x10] sm:$0xff]
    %v2743 = vld [vmem:[%s5 + $0x18] sm:$0xff]
    %vm2744 = vcmask 261120
    %v2746 = vsel %vm2744, %v2734, 0
    %v2749 = vsel %vm2744, %v2735, 0
    %2751 = vmatprep.subr.mxu0 0.0
    %2752 = vmatpush1.msra.mxu0 %v2740
    %2753 = vmatprep.subr.mxu0 0.0
    %2754 = vmatpush1.msra.mxu0 %v2741
    %2755 = vmatprep.subr.mxu0 0.0
    %2756 = vmatpush1.msra.mxu0 %v2742
    %2757 = vmatprep.subr.mxu0 0.0
    %2758 = vmatpush1.msra.mxu0 %v2743
    %2759 = vmatprep.subr.mxu0 0.0
    %2760 = vmatpush1.msra.mxu0 0.0
    %2761 = vmatprep.subr.mxu0 0.0
    %2762 = vmatpush1.msra.mxu0 0.0
    %2763 = vmatprep.subr.mxu0 0.0
    %2764 = vmatpush1.msra.mxu0 0.0
    %2765 = vmatprep.subr.mxu0 0.0
    %2766 = vmatpush1.msra.mxu0 0.0
    %2767 = vmatprep.subr.mxu0 0.0
    %2768 = vmatpush1.msra.mxu0 0.0
    %2769 = vmatprep.subr.mxu0 0.0
    %2770 = vmatpush1.msra.mxu0 0.0
    %2771 = vmatprep.subr.mxu0 0.0
    %2772 = vmatpush1.msra.mxu0 0.0
    %2773 = vmatprep.subr.mxu0 0.0
    %2774 = vmatpush1.msra.mxu0 0.0
    %2775 = vmatprep.subr.mxu0 0.0
    %2776 = vmatpush1.msra.mxu0 0.0
    %2777 = vmatprep.subr.mxu0 0.0
    %2778 = vmatpush1.msra.mxu0 0.0
    %2779 = vmatprep.subr.mxu0 0.0
    %2780 = vmatpush1.msra.mxu0 0.0
    %2781 = vmatprep.subr.mxu0 0.0
    %2782 = vmatpush1.msra.mxu0 0.0
    %2783 = vmatprep.subr.mxu0 0.0
    %2784 = vmatpush1.msra.mxu0 0.0
    %2785 = vmatprep.subr.mxu0 0.0
    %2786 = vmatpush1.msra.mxu0 0.0
    %2787 = vmatprep.subr.mxu0 0.0
    %2788 = vmatpush1.msra.mxu0 0.0
    %2789 = vmatprep.subr.mxu0 0.0
    %2790 = vmatpush1.msra.mxu0 0.0
    %2791 = vmatprep.subr.mxu0 0.0
    %2792 = vmatpush1.msra.mxu0 0.0
    %2793 = vmatprep.subr.mxu0 0.0
    %2794 = vmatpush1.msra.mxu0 0.0
    %2795 = vmatprep.subr.mxu0 0.0
    %2796 = vmatpush1.msra.mxu0 0.0
    %2797 = vmatprep.subr.mxu0 0.0
    %2798 = vmatpush1.msra.mxu0 0.0
    %2799 = vmatprep.subr.mxu0 0.0
    %2800 = vmatpush1.msra.mxu0 0.0
    %2801 = vmatprep.subr.mxu0 0.0
    %2802 = vmatpush1.msra.mxu0 0.0
    %2803 = vmatprep.subr.mxu0 0.0
    %2804 = vmatpush1.msra.mxu0 0.0
    %2805 = vmatprep.subr.mxu0 0.0
    %2806 = vmatpush1.msra.mxu0 0.0
    %2807 = vmatprep.subr.mxu0 0.0
    %2808 = vmatpush1.msra.mxu0 0.0
    %2809 = vmatprep.subr.mxu0 0.0
    %2810 = vmatpush1.msra.mxu0 0.0
    %2811 = vmatprep.subr.mxu0 0.0
    %2812 = vmatpush1.msra.mxu0 0.0
    %2813 = vmatprep.subr.mxu0 0.0
    %2814 = vmatpush1.msra.mxu0 0.0
    %2815 = vmatprep.mubr.f32.mxu0 0.0
    %2816 = vmatmul.mubr.f32.gmra.mrb[0].mxu0 %v2746
    %v2817 = vpop.f32.mrb[0].mxu0
    %v2818 = vadd.f32 0.0, %v2817
    %v2819 = vpop.f32.mrb[0].mxu0
    %2820 = vmatprep.mubr.f32.mxu0 0.0
    %2821 = vmatmul.mubr.f32.gmra.mrb[0].mxu0 %v2749
    %v2822 = vpop.f32.mrb[0].mxu0
    %v2823 = vadd.f32 0.0, %v2822
    %v2824 = vpop.f32.mrb[0].mxu0
    %2825 = vdwg.mxu0
    %v2827 = vsel %vm2744, %v2732, 0
    %v2830 = vsel %vm2744, %v2733, 0
    %2832 = vmatprep.subr.mxu0 0.0
    %2833 = vmatpush1.msra.mxu0 %v2736
    %2834 = vmatprep.subr.mxu0 0.0
    %2835 = vmatpush1.msra.mxu0 %v2737
    %2836 = vmatprep.subr.mxu0 0.0
    %2837 = vmatpush1.msra.mxu0 %v2738
    %2838 = vmatprep.subr.mxu0 0.0
    %2839 = vmatpush1.msra.mxu0 %v2739
    %2840 = vmatprep.subr.mxu0 0.0
    %2841 = vmatpush1.msra.mxu0 0.0
    %2842 = vmatprep.subr.mxu0 0.0
    %2843 = vmatpush1.msra.mxu0 0.0
    %2844 = vmatprep.subr.mxu0 0.0
    %2845 = vmatpush1.msra.mxu0 0.0
    %2846 = vmatprep.subr.mxu0 0.0
    %2847 = vmatpush1.msra.mxu0 0.0
    %2848 = vmatprep.subr.mxu0 0.0
    %2849 = vmatpush1.msra.mxu0 0.0
    %2850 = vmatprep.subr.mxu0 0.0
    %2851 = vmatpush1.msra.mxu0 0.0
    %2852 = vmatprep.subr.mxu0 0.0
    %2853 = vmatpush1.msra.mxu0 0.0
    %2854 = vmatprep.subr.mxu0 0.0
    %2855 = vmatpush1.msra.mxu0 0.0
    %2856 = vmatprep.subr.mxu0 0.0
    %2857 = vmatpush1.msra.mxu0 0.0
    %2858 = vmatprep.subr.mxu0 0.0
    %2859 = vmatpush1.msra.mxu0 0.0
    %2860 = vmatprep.subr.mxu0 0.0
    %2861 = vmatpush1.msra.mxu0 0.0
    %2862 = vmatprep.subr.mxu0 0.0
    %2863 = vmatpush1.msra.mxu0 0.0
    %2864 = vmatprep.subr.mxu0 0.0
    %2865 = vmatpush1.msra.mxu0 0.0
    %2866 = vmatprep.subr.mxu0 0.0
    %2867 = vmatpush1.msra.mxu0 0.0
    %2868 = vmatprep.subr.mxu0 0.0
    %2869 = vmatpush1.msra.mxu0 0.0
    %2870 = vmatprep.subr.mxu0 0.0
    %2871 = vmatpush1.msra.mxu0 0.0
    %2872 = vmatprep.subr.mxu0 0.0
    %2873 = vmatpush1.msra.mxu0 0.0
    %2874 = vmatprep.subr.mxu0 0.0
    %2875 = vmatpush1.msra.mxu0 0.0
    %2876 = vmatprep.subr.mxu0 0.0
    %2877 = vmatpush1.msra.mxu0 0.0
    %2878 = vmatprep.subr.mxu0 0.0
    %2879 = vmatpush1.msra.mxu0 0.0
    %2880 = vmatprep.subr.mxu0 0.0
    %2881 = vmatpush1.msra.mxu0 0.0
    %2882 = vmatprep.subr.mxu0 0.0
    %2883 = vmatpush1.msra.mxu0 0.0
    %2884 = vmatprep.subr.mxu0 0.0
    %2885 = vmatpush1.msra.mxu0 0.0
    %2886 = vmatprep.subr.mxu0 0.0
    %2887 = vmatpush1.msra.mxu0 0.0
    %2888 = vmatprep.subr.mxu0 0.0
    %2889 = vmatpush1.msra.mxu0 0.0
    %2890 = vmatprep.subr.mxu0 0.0
    %2891 = vmatpush1.msra.mxu0 0.0
    %2892 = vmatprep.subr.mxu0 0.0
    %2893 = vmatpush1.msra.mxu0 0.0
    %2894 = vmatprep.subr.mxu0 0.0
    %2895 = vmatpush1.msra.mxu0 0.0
    %2896 = vmatprep.mubr.f32.mxu0 0.0
    %2897 = vmatmul.mubr.f32.gmra.mrb[0].mxu0 %v2827
    %v2898 = vpop.f32.mrb[0].mxu0
    %v2899 = vadd.f32 %v2818, %v2898
    %v2900 = vpop.f32.mrb[0].mxu0
    %2901 = vmatprep.mubr.f32.mxu0 0.0
    %2902 = vmatmul.mubr.f32.gmra.mrb[0].mxu0 %v2830
    %v2903 = vpop.f32.mrb[0].mxu0
    %v2904 = vadd.f32 %v2823, %v2903
    %v2905 = vpop.f32.mrb[0].mxu0
    %2906 = vdwg.mxu0
    %v2907 = vld [vmem:[%s6] sm:$0x1]
    %v2909 = vlaneseq
    %v2910 = vshrl.u32 %v2909, 7
    %v2911 = vsub.s32 0, %v2910
    %v2912 = vrot.slane %v2907, %v2911
    %v2914 = vadd.f32 %v2899, %v2912
    %v2915 = vadd.f32 %v2904, %v2912
    %v2916 = vxor.u32 %v2914, 2147483648
    %v2917 = vxor.u32 %v2915, 2147483648
    %v2918 = vmul.f32 %v2916, 1.442695
    %v2919 = vpow.pop %v2918
    %v2920 = vmul.f32 %v2917, 1.442695
    %v2921 = vpow.pop %v2920
    %v2922 = vadd.f32 %v2919, 1.0
    %v2923 = vadd.f32 %v2921, 1.0
    %v2924 = vrcp.pop %v2922
    %v2925 = vmul.f32 1.0, %v2924
    %v2926 = vrcp.pop %v2923
    %v2927 = vmul.f32 1.0, %v2926
    %2930 = vrot.lane.b32.xlu0 %v2925, 96
    %v2931 = vpop.permute.xlu0 %2930
    %2932 = vrot.lane.b32.xlu0 %v2927, 96
    %v2933 = vpop.permute.xlu0 %2932
    %v2936 = vmul.f32 %v2914, %v2931
    %v2937 = vmul.f32 %v2915, %v2933
    %2938 = vst.msk [vmem:[#allocation3] sm:$0xff] %vm2744, %v2936
    %2939 = vst.msk [vmem:[#allocation3 + $0x8] sm:$0xff] %vm2744, %v2937
    // Predicated region
    $region30: #{tpu_custom_call.1} parent=1 // pred_check
      _
    $region31: #{tpu_custom_call.1} parent=1 // pred_check_branch
      %2941 = sbr.rel (0) target = $region33
    $region32: #{tpu_custom_call.1} parent=1 // pred_region
      %s2943 = ssub.s32 256, 256
      %2944 = vsyncadd [#allocation4], %s2943
      %s2945 = sshll.u32 [#allocation3], 4
      %s2946 = int_to_ptr.vmem [resolvable:$true] %s2945
      %2951 = dma.vmem_to_hbm [thread:$0]  %s2946, 256, %s7, [#allocation4], 128, 128, 8
    $region33: #{tpu_custom_call.1} parent=1 // pred_fallthru
      _
    // Predicated region
    $region34: #{tpu_custom_call.1} parent=1 // pred_check
      _
    $region35: #{tpu_custom_call.1} parent=1 // pred_check_branch
      %2953 = sbr.rel (0) target = $region37
    $region36: #{tpu_custom_call.1} parent=1 // pred_region
      %2954 = dma.done [#allocation4], 256
    $region37: #{tpu_custom_call.1} parent=1 // pred_fallthru
      _
    %2955 = vsyncpa [#allocation4], 1

</llo_original>
